<compile_context>
chip_gen: v6e
topology: v6e:2x2x1
jax: 0.10.0
libtpu: 0.0.40
codegen_flags: <defaults>
</compile_context>

<pallas_src>
import functools
import math

import jax
import jax.numpy as jnp
from jax.experimental import pallas as pl
from jax.experimental.pallas import tpu as pltpu


# ---------------------------------------------------------------------------
# Tiling / padding helpers
# ---------------------------------------------------------------------------
_TILE_BUDGET = 8 * 1024 * 1024     # VMEM byte budget for one (un-double-buffered) x block
_VMEM_LIMIT = 40 * 1024 * 1024     # explicit scoped-VMEM cap (< v7x 64 MiB physical)
_ROW_GRANULE = 16                  # bf16 sublane packing -> M tiles multiples of 16


def _round_up(x, m):
    return (x + m - 1) // m * m


def _pick_tiles(m, bytes_per_row):
    """Return (tm, m_pad).

    tm is sized from a per-step VMEM byte budget (not a fixed row cap); for
    medium/large M we force >= 2 grid steps so the "parallel" grid axis can be
    sharded across v7x's two TensorCores (harmless on 1-TC v5e/v6e).
    """
    g = _ROW_GRANULE
    m_g = _round_up(max(m, 1), g)
    cap = max(g, (_TILE_BUDGET // max(bytes_per_row, 1)) // g * g)
    if m_g <= cap:
        tm = _round_up((m_g + 1) // 2, g) if m_g >= 512 else m_g
    else:
        tm = cap
    return tm, _round_up(m_g, tm)


def _pad_to(x, axis, target):
    cur = x.shape[axis]
    if cur == target:
        return x
    widths = [(0, 0)] * x.ndim
    widths[axis] = (0, target - cur)
    return jnp.pad(x, widths)


# ---------------------------------------------------------------------------
# Pallas kernels
# ---------------------------------------------------------------------------
def _conv_pool_relu_kernel(x_ref, w_ref, b_ref, o_ref):
    """One M-tile of:  out = relu(max_{dy,dx}(patch_{dy,dx} @ w) + b).

    x_ref: (4, tm, K) bf16 pool-offset-major im2col patches
    w_ref: (K, Npad) bf16   b_ref: (1, Npad) f32   o_ref: (tm, Cout) bf16
    relu(max(.)) == max(relu(.)) (monotone), matching relu-then-maxpool.
    """
    w = w_ref[...]
    a0 = jnp.dot(x_ref[0], w, preferred_element_type=jnp.float32)
    a1 = jnp.dot(x_ref[1], w, preferred_element_type=jnp.float32)
    a2 = jnp.dot(x_ref[2], w, preferred_element_type=jnp.float32)
    a3 = jnp.dot(x_ref[3], w, preferred_element_type=jnp.float32)
    pooled = jnp.maximum(jnp.maximum(a0, a1), jnp.maximum(a2, a3))
    y = jnp.maximum(pooled + b_ref[...], 0.0)
    o_ref[...] = y[:, : o_ref.shape[1]].astype(o_ref.dtype)


def _fc_head_kernel(x_ref, w1_ref, b1_ref, w2_ref, b2_ref, o_ref, *, n_valid):
    """Fused fc1(relu) -> fc2 -> log_softmax over the real n_valid lanes."""
    h = jnp.dot(x_ref[...], w1_ref[...], preferred_element_type=jnp.float32)
    h = jnp.maximum(h + b1_ref[...], 0.0).astype(jnp.bfloat16)
    logits = jnp.dot(h, w2_ref[...], preferred_element_type=jnp.float32)
    logits = logits + b2_ref[...]
    # Padded lanes must not contribute to the softmax normalizer.
    lane = jax.lax.broadcasted_iota(jnp.int32, logits.shape, 1)
    logits = jnp.where(lane < n_valid, logits, jnp.float32(-1e30))
    m = jnp.max(logits, axis=-1, keepdims=True)
    y = logits - m
    lse = jnp.log(jnp.sum(jnp.exp(y), axis=-1, keepdims=True))
    o_ref[...] = (y - lse).astype(o_ref.dtype)


# ---------------------------------------------------------------------------
# pallas_call wrappers
# ---------------------------------------------------------------------------
def conv_pool_relu(patches, w_kn, b_1n, cout):
    """patches: [4, M, K] bf16 (pool-offset major) -> pooled relu conv [M, cout] bf16."""
    four, m, k = patches.shape
    kw_, npad = w_kn.shape
    assert four == 4 and k == kw_ and npad % 128 == 0
    # x block + 4 f32 accumulators (+ headroom) per M row.
    bytes_per_row = 4 * k * 2 + 6 * npad * 4
    tm, m_pad = _pick_tiles(m, bytes_per_row)
    if m_pad != m:
        patches = _pad_to(patches, 1, m_pad)
    grid = (m_pad // tm,)

    # Weight/bias blocks are grid-invariant; VMEM headroom is ample at these
    # tile sizes so the default double-buffering is kept (pl.Buffered(1) would
    # only save ~a few hundred KB here).
    out = pl.pallas_call(
        _conv_pool_relu_kernel,
        out_shape=jax.ShapeDtypeStruct((m_pad, cout), jnp.bfloat16),
        grid=grid,
        in_specs=[
            pl.BlockSpec((4, tm, k), lambda i: (0, i, 0)),
            pl.BlockSpec((k, npad), lambda i: (0, 0)),
            pl.BlockSpec((1, npad), lambda i: (0, 0)),
        ],
        out_specs=pl.BlockSpec((tm, cout), lambda i: (i, 0)),
        compiler_params=pltpu.CompilerParams(
            dimension_semantics=("parallel",),
            vmem_limit_bytes=_VMEM_LIMIT),
        cost_estimate=pl.CostEstimate(
            flops=2 * 4 * m_pad * k * npad,
            transcendentals=0,
            bytes_accessed=2 * (4 * m_pad * k + k * npad + m_pad * cout) + 4 * npad),
    )(patches, w_kn, b_1n)
    return out[:m] if m_pad != m else out


def fc_head(x, w1, b1, w2, b2, n_out):
    """Fused fc1+relu -> fc2 -> log_softmax.  x: [M, K] -> [M, n_out] f32."""
    m, k = x.shape
    k1, h = w1.shape
    h2, n = w2.shape
    assert k == k1 and h == h2 and n % 128 == 0
    x = x.astype(jnp.bfloat16)
    # x row + f32 h + bf16 h + f32 logits + double-buffered out per M row.
    bytes_per_row = 2 * k + 4 * h + 2 * h + 4 * n + 8 * n
    tm, m_pad = _pick_tiles(m, bytes_per_row)
    if m_pad != m:
        x = _pad_to(x, 0, m_pad)
    grid = (m_pad // tm,)

    kernel = functools.partial(_fc_head_kernel, n_valid=n_out)
    out = pl.pallas_call(
        kernel,
        out_shape=jax.ShapeDtypeStruct((m_pad, n), jnp.float32),
        grid=grid,
        in_specs=[
            pl.BlockSpec((tm, k), lambda i: (i, 0)),
            pl.BlockSpec((k, h), lambda i: (0, 0)),
            pl.BlockSpec((1, h), lambda i: (0, 0)),
            pl.BlockSpec((h, n), lambda i: (0, 0)),
            pl.BlockSpec((1, n), lambda i: (0, 0)),
        ],
        out_specs=pl.BlockSpec((tm, n), lambda i: (i, 0)),
        compiler_params=pltpu.CompilerParams(
            dimension_semantics=("parallel",),
            vmem_limit_bytes=_VMEM_LIMIT),
        cost_estimate=pl.CostEstimate(
            flops=2 * m_pad * (k * h + h * n),
            transcendentals=m_pad * n_out,
            bytes_accessed=2 * (m_pad * k + k * h + h * n) + 4 * (h + n + m_pad * n)),
    )(x, w1, b1, w2, b2)
    return out[:m, :n_out]


# ---------------------------------------------------------------------------
# JAX glue: pool-offset-major im2col (NHWC).  Layout plumbing only; all MACs
# and the pooling run inside the Pallas kernels.
# ---------------------------------------------------------------------------
def im2col_pooled_nhwc(x, kh, kw, k_pad):
    """x: [B, H, W, C] -> patches [4, B*Hp*Wp, k_pad].

    Axis 0 is the 2x2 pool offset (dy*2 + dx); within a plane rows are
    (b, hp, wp) and K is ordered (kh, kw, C) to match the pre-permuted weights.
    """
    b, hgt, wid, c = x.shape
    ho, wo = hgt - kh + 1, wid - kw + 1
    hp, wp = ho // 2, wo // 2
    planes = []
    for dy in range(2):
        for dx in range(2):
            taps = []
            for i in range(kh):
                for j in range(kw):
                    taps.append(x[:, dy + i: dy + i + 2 * hp: 2,
                                  dx + j: dx + j + 2 * wp: 2, :])     # [B, hp, wp, C]
            p = jnp.stack(taps, axis=3)                               # [B, hp, wp, kh*kw, C]
            planes.append(p.reshape(b * hp * wp, kh * kw * c))
    patches = jnp.stack(planes, axis=0)                               # [4, M_pool, kh*kw*C]
    return _pad_to(patches, 2, k_pad), (b, hp, wp)


def conv2d_pool_relu(x, w_kn, b_1n, kh, kw, cout):
    """Conv2d(stride=1, valid) + ReLU + 2x2/2 max-pool on NHWC; pool fused in-kernel."""
    # TODO(synk): forming the 25-tap patches in-VMEM from the raw activation
    # block would remove the remaining HBM patch round trip; kept as XLA glue
    # for lowering robustness (bf16 already halves the patch traffic).
    patches, (b, hp, wp) = im2col_pooled_nhwc(
        x.astype(jnp.bfloat16), kh, kw, w_kn.shape[0])
    y = conv_pool_relu(patches, w_kn, b_1n, cout)                     # [B*hp*wp, cout]
    return y.reshape(b, hp, wp, cout)                                 # NHWC (pooled)


# ---------------------------------------------------------------------------
# Parameters: init in PyTorch layout, converted ONCE to kernel layout
# (pre-transposed, K padded, N padded to 128, matmul weights in bf16).
# ---------------------------------------------------------------------------
def _uniform(key, shape, fan_in):
    bound = 1.0 / math.sqrt(fan_in)
    return jax.random.uniform(key, shape, jnp.float32, -bound, bound)


def init_params_torch(key):
    ks = jax.random.split(key, 8)
    return {
        "conv1_w": _uniform(ks[0], (20, 1, 5, 5), 1 * 5 * 5),
        "conv1_b": _uniform(ks[1], (20,), 1 * 5 * 5),
        "conv2_w": _uniform(ks[2], (50, 20, 5, 5), 20 * 5 * 5),
        "conv2_b": _uniform(ks[3], (50,), 20 * 5 * 5),
        "fc1_w": _uniform(ks[4], (500, 800), 800),          # PyTorch [out, in]
        "fc1_b": _uniform(ks[5], (500,), 800),
        "fc2_w": _uniform(ks[6], (10, 500), 500),
        "fc2_b": _uniform(ks[7], (10,), 500),
    }


def _prep_conv(w, b, k_mult):
    """[Cout, Cin, KH, KW] -> bf16 weight [K=(kh,kw,Cin) padded, Cout padded to 128]."""
    cout, cin, kh, kw = w.shape
    wk = w.transpose(2, 3, 1, 0).reshape(kh * kw * cin, cout)
    wk = _pad_to(wk, 0, _round_up(kh * kw * cin, k_mult))
    wk = _pad_to(wk, 1, _round_up(cout, 128)).astype(jnp.bfloat16)
    bk = _pad_to(b.reshape(1, cout), 1, _round_up(cout, 128))   # bias stays f32
    return wk, bk


def prepare_params(p):
    """One-time PyTorch-layout -> kernel-layout conversion (no per-call transposes)."""
    c1_w, c1_b = _prep_conv(p["conv1_w"], p["conv1_b"], 8)       # (32, 128) bf16, (1, 128) f32
    c2_w, c2_b = _prep_conv(p["conv2_w"], p["conv2_b"], 128)     # (512, 128) bf16, (1, 128) f32
    # fc1: PyTorch input index is (c, h, w) of NCHW [B, 50, 4, 4]; the kernel path
    # flattens pooled NHWC -> (h, w, c), so permute the weight rows to match.
    fc1_w = p["fc1_w"].reshape(500, 50, 4, 4).transpose(2, 3, 1, 0).reshape(800, 500)
    fc1_w = _pad_to(fc1_w, 1, 512).astype(jnp.bfloat16)          # (800, 512)
    fc1_b = _pad_to(p["fc1_b"].reshape(1, 500), 1, 512)          # (1, 512) f32
    fc2_w = _pad_to(_pad_to(p["fc2_w"].T, 0, 512), 1, 128).astype(jnp.bfloat16)  # (512, 128)
    fc2_b = _pad_to(p["fc2_b"].reshape(1, 10), 1, 128)           # (1, 128) f32
    return {
        "conv1_w": c1_w, "conv1_b": c1_b,
        "conv2_w": c2_w, "conv2_b": c2_b,
        "fc1_w": fc1_w, "fc1_b": fc1_b,
        "fc2_w": fc2_w, "fc2_b": fc2_b,
    }


# ---------------------------------------------------------------------------
# Forward pass (matches PyTorch Net.forward)
# ---------------------------------------------------------------------------
def net_forward(params, x):
    # x: [B, 1, 28, 28] NCHW (PyTorch convention) -> NHWC once.
    x = jnp.transpose(x, (0, 2, 3, 1))                                        # [B, 28, 28, 1]
    x = conv2d_pool_relu(x, params["conv1_w"], params["conv1_b"], 5, 5, 20)   # [B, 12, 12, 20] bf16
    x = conv2d_pool_relu(x, params["conv2_w"], params["conv2_b"], 5, 5, 50)   # [B, 4, 4, 50]  bf16
    x = x.reshape(x.shape[0], 4 * 4 * 50)   # [B, 800] in (h, w, c) order; fc1 weight pre-permuted
    return fc_head(x, params["fc1_w"], params["fc1_b"],
                   params["fc2_w"], params["fc2_b"], 10)                      # [B, 10] f32


# ---------------------------------------------------------------------------
# Pure-JAX f32 reference (PyTorch semantics) for correctness check
# ---------------------------------------------------------------------------
def net_forward_ref(p, x):
    hi = jax.lax.Precision.HIGHEST
    dn = ("NCHW", "OIHW", "NCHW")
    x = jax.lax.conv_general_dilated(x, p["conv1_w"], (1, 1), "VALID",
                                     dimension_numbers=dn, precision=hi)
    x = jax.nn.relu(x + p["conv1_b"].reshape(1, -1, 1, 1))
    b, c, h, w = x.shape
    x = jnp.max(x.reshape(b, c, h // 2, 2, w // 2, 2), axis=(3, 5))
    x = jax.lax.conv_general_dilated(x, p["conv2_w"], (1, 1), "VALID",
                                     dimension_numbers=dn, precision=hi)
    x = jax.nn.relu(x + p["conv2_b"].reshape(1, -1, 1, 1))
    b, c, h, w = x.shape
    x = jnp.max(x.reshape(b, c, h // 2, 2, w // 2, 2), axis=(3, 5))
    x = x.reshape(x.shape[0], -1)                                    # (c, h, w) order
    x = jax.nn.relu(jnp.dot(x, p["fc1_w"].T, precision=hi) + p["fc1_b"])
    x = jnp.dot(x, p["fc2_w"].T, precision=hi) + p["fc2_b"]
    return jax.nn.log_softmax(x, axis=1)


if __name__ == "__main__":
    key = jax.random.PRNGKey(0)
    k_params, k_x = jax.random.split(key)
    torch_params = init_params_torch(k_params)
    params = prepare_params(torch_params)          # one-time layout conversion
    x = jax.random.normal(k_x, (2, 1, 28, 28), jnp.float32)

    out = jax.jit(net_forward)(params, x)
    out = jax.block_until_ready(out)

    assert out.shape == (2, 10) and out.dtype == jnp.float32
    # log_softmax rows must exponentiate-sum to ~1 (computed in f32 in-kernel).
    assert bool(jnp.all(jnp.abs(jnp.sum(jnp.exp(out), axis=1) - 1.0) < 1e-4))
    # Match the f32 PyTorch-semantics reference (bf16 matmul operands -> looser tol).
    ref = net_forward_ref(torch_params, x)
    assert bool(jnp.allclose(out, ref, atol=3e-2, rtol=3e-2))
    print("KERNEL_OK")
</pallas_src>

<mosaic_0001>
module attributes {stable_mosaic.version = 11 : i64} {
  func.func @_conv_pool_relu_kernel(%arg0: i32, %arg1: memref<4x288x32xbf16, #tpu.memory_space<vmem>>, %arg2: memref<32x128xbf16, #tpu.memory_space<vmem>>, %arg3: memref<1x128xf32, #tpu.memory_space<vmem>>, %arg4: memref<288x20xbf16, #tpu.memory_space<vmem>>) attributes {dimension_semantics = [#tpu.dimension_semantics<parallel>], iteration_bounds = array<i64: 1>, scalar_prefetch = 0 : i64, scratch_operands = 0 : i64, tpu.core_type = #tpu.core_type<tc>, window_params = [{transform_indices = @transform_0, window_bounds = array<i64: 4, 288, 32>}, {pipeline_mode = #tpu.pipeline_mode<synchronous>, transform_indices = @transform_1, window_bounds = array<i64: 32, 128>}, {pipeline_mode = #tpu.pipeline_mode<synchronous>, transform_indices = @transform_2, window_bounds = array<i64: 1, 128>}, {transform_indices = @transform_3, window_bounds = array<i64: 288, 20>}]} {
    %c0 = arith.constant 0 : index
    %c0_0 = arith.constant 0 : index
    %0 = vector.load %arg2[%c0, %c0_0] : memref<32x128xbf16, #tpu.memory_space<vmem>>, vector<32x128xbf16>
    %c0_1 = arith.constant 0 : index
    %c0_2 = arith.constant 0 : index
    %c0_3 = arith.constant 0 : index
    %1 = vector.load %arg1[%c0_1, %c0_2, %c0_3] : memref<4x288x32xbf16, #tpu.memory_space<vmem>>, vector<1x288x32xbf16>
    %2 = vector.shape_cast %1 : vector<1x288x32xbf16> to vector<288x32xbf16>
    %cst = arith.constant dense<0.000000e+00> : vector<288x128xf32>
    %3 = tpu.matmul %2, %0, %cst {dimension_numbers = #tpu.dot_dimension_numbers<[1], [0], [0], [1], [0, 0, 1, 1], [], []>} : vector<288x32xbf16>, vector<32x128xbf16>, vector<288x128xf32> -> vector<288x128xf32>
    %c1 = arith.constant 1 : index
    %c0_4 = arith.constant 0 : index
    %c0_5 = arith.constant 0 : index
    %4 = vector.load %arg1[%c1, %c0_4, %c0_5] : memref<4x288x32xbf16, #tpu.memory_space<vmem>>, vector<1x288x32xbf16>
    %5 = vector.shape_cast %4 : vector<1x288x32xbf16> to vector<288x32xbf16>
    %cst_6 = arith.constant dense<0.000000e+00> : vector<288x128xf32>
    %6 = tpu.matmul %5, %0, %cst_6 {dimension_numbers = #tpu.dot_dimension_numbers<[1], [0], [0], [1], [0, 0, 1, 1], [], []>} : vector<288x32xbf16>, vector<32x128xbf16>, vector<288x128xf32> -> vector<288x128xf32>
    %c2 = arith.constant 2 : index
    %c0_7 = arith.constant 0 : index
    %c0_8 = arith.constant 0 : index
    %7 = vector.load %arg1[%c2, %c0_7, %c0_8] : memref<4x288x32xbf16, #tpu.memory_space<vmem>>, vector<1x288x32xbf16>
    %8 = vector.shape_cast %7 : vector<1x288x32xbf16> to vector<288x32xbf16>
    %cst_9 = arith.constant dense<0.000000e+00> : vector<288x128xf32>
    %9 = tpu.matmul %8, %0, %cst_9 {dimension_numbers = #tpu.dot_dimension_numbers<[1], [0], [0], [1], [0, 0, 1, 1], [], []>} : vector<288x32xbf16>, vector<32x128xbf16>, vector<288x128xf32> -> vector<288x128xf32>
    %c3 = arith.constant 3 : index
    %c0_10 = arith.constant 0 : index
    %c0_11 = arith.constant 0 : index
    %10 = vector.load %arg1[%c3, %c0_10, %c0_11] : memref<4x288x32xbf16, #tpu.memory_space<vmem>>, vector<1x288x32xbf16>
    %11 = vector.shape_cast %10 : vector<1x288x32xbf16> to vector<288x32xbf16>
    %cst_12 = arith.constant dense<0.000000e+00> : vector<288x128xf32>
    %12 = tpu.matmul %11, %0, %cst_12 {dimension_numbers = #tpu.dot_dimension_numbers<[1], [0], [0], [1], [0, 0, 1, 1], [], []>} : vector<288x32xbf16>, vector<32x128xbf16>, vector<288x128xf32> -> vector<288x128xf32>
    %13 = arith.maximumf %3, %6 : vector<288x128xf32>
    %14 = arith.maximumf %9, %12 : vector<288x128xf32>
    %15 = arith.maximumf %13, %14 : vector<288x128xf32>
    %c0_13 = arith.constant 0 : index
    %c0_14 = arith.constant 0 : index
    %16 = vector.load %arg3[%c0_13, %c0_14] : memref<1x128xf32, #tpu.memory_space<vmem>>, vector<1x128xf32>
    %17 = vector.broadcast %16 : vector<1x128xf32> to vector<288x128xf32>
    %18 = arith.addf %15, %17 : vector<288x128xf32>
    %cst_15 = arith.constant 0.000000e+00 : f32
    %19 = vector.broadcast %cst_15 : f32 to vector<288x128xf32>
    %20 = arith.maximumf %18, %19 : vector<288x128xf32>
    %21 = vector.extract_strided_slice %20 {offsets = [0, 0], sizes = [288, 20], strides = [1, 1]} : vector<288x128xf32> to vector<288x20xf32>
    %22 = arith.truncf %21 : vector<288x20xf32> to vector<288x20xbf16>
    %c0_16 = arith.constant 0 : index
    %c0_17 = arith.constant 0 : index
    %23 = vector.load %arg4[%c0_16, %c0_17] : memref<288x20xbf16, #tpu.memory_space<vmem>>, vector<288x20xbf16>
    tpu.vector_store %arg4[%c0_16, %c0_17], %22 {strides = array<i32>} : memref<288x20xbf16, #tpu.memory_space<vmem>>, vector<288x20xbf16>,
    return
  }
  func.func @transform_0(%arg0: i32) -> (i32, i32, i32) {
    %c0_i32 = arith.constant 0 : i32
    %c0_i32_0 = arith.constant 0 : i32
    %c0_i32_1 = arith.constant 0 : i32
    return %c0_i32, %arg0, %c0_i32_0 : i32, i32, i32
  }
  func.func @transform_1(%arg0: i32) -> (i32, i32) {
    %c0_i32 = arith.constant 0 : i32
    %c0_i32_0 = arith.constant 0 : i32
    %c0_i32_1 = arith.constant 0 : i32
    return %c0_i32, %c0_i32_0 : i32, i32
  }
  func.func @transform_2(%arg0: i32) -> (i32, i32) {
    %c0_i32 = arith.constant 0 : i32
    %c0_i32_0 = arith.constant 0 : i32
    %c0_i32_1 = arith.constant 0 : i32
    return %c0_i32, %c0_i32_0 : i32, i32
  }
  func.func @transform_3(%arg0: i32) -> (i32, i32) {
    %c0_i32 = arith.constant 0 : i32
    %c0_i32_0 = arith.constant 0 : i32
    return %arg0, %c0_i32 : i32, i32
  }
}

module attributes {stable_mosaic.version = 11 : i64} {
  func.func @_conv_pool_relu_kernel(%arg0: i32, %arg1: memref<4x32x512xbf16, #tpu.memory_space<vmem>>, %arg2: memref<512x128xbf16, #tpu.memory_space<vmem>>, %arg3: memref<1x128xf32, #tpu.memory_space<vmem>>, %arg4: memref<32x50xbf16, #tpu.memory_space<vmem>>) attributes {dimension_semantics = [#tpu.dimension_semantics<parallel>], iteration_bounds = array<i64: 1>, scalar_prefetch = 0 : i64, scratch_operands = 0 : i64, tpu.core_type = #tpu.core_type<tc>, window_params = [{transform_indices = @transform_0, window_bounds = array<i64: 4, 32, 512>}, {pipeline_mode = #tpu.pipeline_mode<synchronous>, transform_indices = @transform_1, window_bounds = array<i64: 512, 128>}, {pipeline_mode = #tpu.pipeline_mode<synchronous>, transform_indices = @transform_2, window_bounds = array<i64: 1, 128>}, {transform_indices = @transform_3, window_bounds = array<i64: 32, 50>}]} {
    %c0 = arith.constant 0 : index
    %c0_0 = arith.constant 0 : index
    %0 = vector.load %arg2[%c0, %c0_0] : memref<512x128xbf16, #tpu.memory_space<vmem>>, vector<512x128xbf16>
    %c0_1 = arith.constant 0 : index
    %c0_2 = arith.constant 0 : index
    %c0_3 = arith.constant 0 : index
    %1 = vector.load %arg1[%c0_1, %c0_2, %c0_3] : memref<4x32x512xbf16, #tpu.memory_space<vmem>>, vector<1x32x512xbf16>
    %2 = vector.shape_cast %1 : vector<1x32x512xbf16> to vector<32x512xbf16>
    %cst = arith.constant dense<0.000000e+00> : vector<32x128xf32>
    %3 = tpu.matmul %2, %0, %cst {dimension_numbers = #tpu.dot_dimension_numbers<[1], [0], [0], [1], [0, 0, 1, 1], [], []>} : vector<32x512xbf16>, vector<512x128xbf16>, vector<32x128xf32> -> vector<32x128xf32>
    %c1 = arith.constant 1 : index
    %c0_4 = arith.constant 0 : index
    %c0_5 = arith.constant 0 : index
    %4 = vector.load %arg1[%c1, %c0_4, %c0_5] : memref<4x32x512xbf16, #tpu.memory_space<vmem>>, vector<1x32x512xbf16>
    %5 = vector.shape_cast %4 : vector<1x32x512xbf16> to vector<32x512xbf16>
    %cst_6 = arith.constant dense<0.000000e+00> : vector<32x128xf32>
    %6 = tpu.matmul %5, %0, %cst_6 {dimension_numbers = #tpu.dot_dimension_numbers<[1], [0], [0], [1], [0, 0, 1, 1], [], []>} : vector<32x512xbf16>, vector<512x128xbf16>, vector<32x128xf32> -> vector<32x128xf32>
    %c2 = arith.constant 2 : index
    %c0_7 = arith.constant 0 : index
    %c0_8 = arith.constant 0 : index
    %7 = vector.load %arg1[%c2, %c0_7, %c0_8] : memref<4x32x512xbf16, #tpu.memory_space<vmem>>, vector<1x32x512xbf16>
    %8 = vector.shape_cast %7 : vector<1x32x512xbf16> to vector<32x512xbf16>
    %cst_9 = arith.constant dense<0.000000e+00> : vector<32x128xf32>
    %9 = tpu.matmul %8, %0, %cst_9 {dimension_numbers = #tpu.dot_dimension_numbers<[1], [0], [0], [1], [0, 0, 1, 1], [], []>} : vector<32x512xbf16>, vector<512x128xbf16>, vector<32x128xf32> -> vector<32x128xf32>
    %c3 = arith.constant 3 : index
    %c0_10 = arith.constant 0 : index
    %c0_11 = arith.constant 0 : index
    %10 = vector.load %arg1[%c3, %c0_10, %c0_11] : memref<4x32x512xbf16, #tpu.memory_space<vmem>>, vector<1x32x512xbf16>
    %11 = vector.shape_cast %10 : vector<1x32x512xbf16> to vector<32x512xbf16>
    %cst_12 = arith.constant dense<0.000000e+00> : vector<32x128xf32>
    %12 = tpu.matmul %11, %0, %cst_12 {dimension_numbers = #tpu.dot_dimension_numbers<[1], [0], [0], [1], [0, 0, 1, 1], [], []>} : vector<32x512xbf16>, vector<512x128xbf16>, vector<32x128xf32> -> vector<32x128xf32>
    %13 = arith.maximumf %3, %6 : vector<32x128xf32>
    %14 = arith.maximumf %9, %12 : vector<32x128xf32>
    %15 = arith.maximumf %13, %14 : vector<32x128xf32>
    %c0_13 = arith.constant 0 : index
    %c0_14 = arith.constant 0 : index
    %16 = vector.load %arg3[%c0_13, %c0_14] : memref<1x128xf32, #tpu.memory_space<vmem>>, vector<1x128xf32>
    %17 = vector.broadcast %16 : vector<1x128xf32> to vector<32x128xf32>
    %18 = arith.addf %15, %17 : vector<32x128xf32>
    %cst_15 = arith.constant 0.000000e+00 : f32
    %19 = vector.broadcast %cst_15 : f32 to vector<32x128xf32>
    %20 = arith.maximumf %18, %19 : vector<32x128xf32>
    %21 = vector.extract_strided_slice %20 {offsets = [0, 0], sizes = [32, 50], strides = [1, 1]} : vector<32x128xf32> to vector<32x50xf32>
    %22 = arith.truncf %21 : vector<32x50xf32> to vector<32x50xbf16>
    %c0_16 = arith.constant 0 : index
    %c0_17 = arith.constant 0 : index
    %23 = vector.load %arg4[%c0_16, %c0_17] : memref<32x50xbf16, #tpu.memory_space<vmem>>, vector<32x50xbf16>
    tpu.vector_store %arg4[%c0_16, %c0_17], %22 {strides = array<i32>} : memref<32x50xbf16, #tpu.memory_space<vmem>>, vector<32x50xbf16>,
    return
  }
  func.func @transform_0(%arg0: i32) -> (i32, i32, i32) {
    %c0_i32 = arith.constant 0 : i32
    %c0_i32_0 = arith.constant 0 : i32
    %c0_i32_1 = arith.constant 0 : i32
    return %c0_i32, %arg0, %c0_i32_0 : i32, i32, i32
  }
  func.func @transform_1(%arg0: i32) -> (i32, i32) {
    %c0_i32 = arith.constant 0 : i32
    %c0_i32_0 = arith.constant 0 : i32
    %c0_i32_1 = arith.constant 0 : i32
    return %c0_i32, %c0_i32_0 : i32, i32
  }
  func.func @transform_2(%arg0: i32) -> (i32, i32) {
    %c0_i32 = arith.constant 0 : i32
    %c0_i32_0 = arith.constant 0 : i32
    %c0_i32_1 = arith.constant 0 : i32
    return %c0_i32, %c0_i32_0 : i32, i32
  }
  func.func @transform_3(%arg0: i32) -> (i32, i32) {
    %c0_i32 = arith.constant 0 : i32
    %c0_i32_0 = arith.constant 0 : i32
    return %arg0, %c0_i32 : i32, i32
  }
}

module attributes {stable_mosaic.version = 11 : i64} {
  func.func @_fc_head_kernel(%arg0: i32, %arg1: memref<16x800xbf16, #tpu.memory_space<vmem>>, %arg2: memref<800x512xbf16, #tpu.memory_space<vmem>>, %arg3: memref<1x512xf32, #tpu.memory_space<vmem>>, %arg4: memref<512x128xbf16, #tpu.memory_space<vmem>>, %arg5: memref<1x128xf32, #tpu.memory_space<vmem>>, %arg6: memref<16x128xf32, #tpu.memory_space<vmem>>) attributes {dimension_semantics = [#tpu.dimension_semantics<parallel>], iteration_bounds = array<i64: 1>, scalar_prefetch = 0 : i64, scratch_operands = 0 : i64, tpu.core_type = #tpu.core_type<tc>, window_params = [{transform_indices = @transform_0, window_bounds = array<i64: 16, 800>}, {pipeline_mode = #tpu.pipeline_mode<synchronous>, transform_indices = @transform_1, window_bounds = array<i64: 800, 512>}, {pipeline_mode = #tpu.pipeline_mode<synchronous>, transform_indices = @transform_2, window_bounds = array<i64: 1, 512>}, {pipeline_mode = #tpu.pipeline_mode<synchronous>, transform_indices = @transform_3, window_bounds = array<i64: 512, 128>}, {pipeline_mode = #tpu.pipeline_mode<synchronous>, transform_indices = @transform_4, window_bounds = array<i64: 1, 128>}, {transform_indices = @transform_5, window_bounds = array<i64: 16, 128>}]} {
    %c0 = arith.constant 0 : index
    %c0_0 = arith.constant 0 : index
    %0 = vector.load %arg1[%c0, %c0_0] : memref<16x800xbf16, #tpu.memory_space<vmem>>, vector<16x800xbf16>
    %c0_1 = arith.constant 0 : index
    %c0_2 = arith.constant 0 : index
    %1 = vector.load %arg2[%c0_1, %c0_2] : memref<800x512xbf16, #tpu.memory_space<vmem>>, vector<800x512xbf16>
    %cst = arith.constant dense<0.000000e+00> : vector<16x512xf32>
    %2 = tpu.matmul %0, %1, %cst {dimension_numbers = #tpu.dot_dimension_numbers<[1], [0], [0], [1], [0, 0, 1, 1], [], []>} : vector<16x800xbf16>, vector<800x512xbf16>, vector<16x512xf32> -> vector<16x512xf32>
    %c0_3 = arith.constant 0 : index
    %c0_4 = arith.constant 0 : index
    %3 = vector.load %arg3[%c0_3, %c0_4] : memref<1x512xf32, #tpu.memory_space<vmem>>, vector<1x512xf32>
    %4 = vector.broadcast %3 : vector<1x512xf32> to vector<16x512xf32>
    %5 = arith.addf %2, %4 : vector<16x512xf32>
    %cst_5 = arith.constant 0.000000e+00 : f32
    %6 = vector.broadcast %cst_5 : f32 to vector<16x512xf32>
    %7 = arith.maximumf %5, %6 : vector<16x512xf32>
    %8 = arith.truncf %7 : vector<16x512xf32> to vector<16x512xbf16>
    %c0_6 = arith.constant 0 : index
    %c0_7 = arith.constant 0 : index
    %9 = vector.load %arg4[%c0_6, %c0_7] : memref<512x128xbf16, #tpu.memory_space<vmem>>, vector<512x128xbf16>
    %cst_8 = arith.constant dense<0.000000e+00> : vector<16x128xf32>
    %10 = tpu.matmul %8, %9, %cst_8 {dimension_numbers = #tpu.dot_dimension_numbers<[1], [0], [0], [1], [0, 0, 1, 1], [], []>} : vector<16x512xbf16>, vector<512x128xbf16>, vector<16x128xf32> -> vector<16x128xf32>
    %c0_9 = arith.constant 0 : index
    %c0_10 = arith.constant 0 : index
    %11 = vector.load %arg5[%c0_9, %c0_10] : memref<1x128xf32, #tpu.memory_space<vmem>>, vector<1x128xf32>
    %12 = vector.broadcast %11 : vector<1x128xf32> to vector<16x128xf32>
    %13 = arith.addf %10, %12 : vector<16x128xf32>
    %14 = tpu.iota {dimensions = array<i32: 1>} : vector<16x128xi32>
    %c10_i32 = arith.constant 10 : i32
    %15 = vector.broadcast %c10_i32 : i32 to vector<16x128xi32>
    %16 = arith.cmpi slt, %14, %15 : vector<16x128xi32>
    %cst_11 = arith.constant -1.000000e+30 : f32
    %17 = vector.broadcast %cst_11 : f32 to vector<16x128xf32>
    %18 = arith.select %16, %13, %17 : vector<16x128xi1>, vector<16x128xf32>
    %cst_12 = arith.constant dense<0xFF800000> : vector<16xf32>
    %19 = vector.multi_reduction <maximumf>, %18, %cst_12 [1] : vector<16x128xf32> to vector<16xf32>
    %20 = vector.shape_cast %19 : vector<16xf32> to vector<16x1xf32>
    %21 = vector.broadcast %20 : vector<16x1xf32> to vector<16x128xf32>
    %22 = arith.subf %18, %21 : vector<16x128xf32>
    %23 = math.exp %22 : vector<16x128xf32>
    %cst_13 = arith.constant dense<0.000000e+00> : vector<16xf32>
    %24 = vector.multi_reduction <add>, %23, %cst_13 [1] : vector<16x128xf32> to vector<16xf32>
    %25 = vector.shape_cast %24 : vector<16xf32> to vector<16x1xf32>
    %26 = math.log %25 : vector<16x1xf32>
    %27 = vector.broadcast %26 : vector<16x1xf32> to vector<16x128xf32>
    %28 = arith.subf %22, %27 : vector<16x128xf32>
    %c0_14 = arith.constant 0 : index
    %c0_15 = arith.constant 0 : index
    %29 = vector.load %arg6[%c0_14, %c0_15] : memref<16x128xf32, #tpu.memory_space<vmem>>, vector<16x128xf32>
    tpu.vector_store %arg6[%c0_14, %c0_15], %28 {strides = array<i32>} : memref<16x128xf32, #tpu.memory_space<vmem>>, vector<16x128xf32>,
    return
  }
  func.func @transform_0(%arg0: i32) -> (i32, i32) {
    %c0_i32 = arith.constant 0 : i32
    %c0_i32_0 = arith.constant 0 : i32
    return %arg0, %c0_i32 : i32, i32
  }
  func.func @transform_1(%arg0: i32) -> (i32, i32) {
    %c0_i32 = arith.constant 0 : i32
    %c0_i32_0 = arith.constant 0 : i32
    %c0_i32_1 = arith.constant 0 : i32
    return %c0_i32, %c0_i32_0 : i32, i32
  }
  func.func @transform_2(%arg0: i32) -> (i32, i32) {
    %c0_i32 = arith.constant 0 : i32
    %c0_i32_0 = arith.constant 0 : i32
    %c0_i32_1 = arith.constant 0 : i32
    return %c0_i32, %c0_i32_0 : i32, i32
  }
  func.func @transform_3(%arg0: i32) -> (i32, i32) {
    %c0_i32 = arith.constant 0 : i32
    %c0_i32_0 = arith.constant 0 : i32
    %c0_i32_1 = arith.constant 0 : i32
    return %c0_i32, %c0_i32_0 : i32, i32
  }
  func.func @transform_4(%arg0: i32) -> (i32, i32) {
    %c0_i32 = arith.constant 0 : i32
    %c0_i32_0 = arith.constant 0 : i32
    %c0_i32_1 = arith.constant 0 : i32
    return %c0_i32, %c0_i32_0 : i32, i32
  }
  func.func @transform_5(%arg0: i32) -> (i32, i32) {
    %c0_i32 = arith.constant 0 : i32
    %c0_i32_0 = arith.constant 0 : i32
    return %arg0, %c0_i32 : i32, i32
  }
}

</mosaic_0001>

<llo_original>
// kernel: net_forward.3
$region0: #{net_forward.3}
  #allocation0 [shape = 'u32[]', space=smem, size = 0x4, offset = 0x4, fixed_abs, tag = 'smem constant byte address 0x4 - core index']
  #allocation1 [shape = 'u32[144,128]{1,0:T(1,128)}', space=vmem, size = 0x12000, scoped, tag = 'internal scratch']
  %s0 = inlined_call_operand.vmem [shape: bf16[4,288,32], index: 0, kind: input, shape index: {}]
  %s1 = inlined_call_operand.vmem [shape: bf16[32,128], index: 1, kind: input, shape index: {}]
  %s2 = inlined_call_operand.vmem [shape: f32[1,128], index: 2, kind: input, shape index: {}]
  %s3 = inlined_call_operand.vmem [shape: bf16[288,20], index: 3, kind: output, shape index: {}]
  %s4 = sld [smem:[#allocation0]]
  $region22: #{net_forward.3} parent=0
    _
  %s6 = ssub.s32 1, %s4
  %s7 = scalar_select 0, %s6, %s4
  // Predicated region
  $region2: #{net_forward.3} parent=0 // pred_check
    _
  $region3: #{net_forward.3} parent=0 // pred_check_branch
    %9 = sbr.rel (0) target = $region5
  $region4: #{net_forward.3} parent=0 // pred_region
    _
  $region5: #{net_forward.3} parent=0 // pred_fallthru
    _
  // Predicated region
  $region6: #{net_forward.3} parent=0 // pred_check
    _
  $region7: #{net_forward.3} parent=0 // pred_check_branch
    %11 = sbr.rel (0) target = $region9
  $region8: #{net_forward.3} parent=0 // pred_region
    _
  $region9: #{net_forward.3} parent=0 // pred_fallthru
    _
  // Predicated region
  $region10: #{net_forward.3} parent=0 // pred_check
    _
  $region11: #{net_forward.3} parent=0 // pred_check_branch
    %13 = sbr.rel (0) target = $region13
  $region12: #{net_forward.3} parent=0 // pred_region
    _
  $region13: #{net_forward.3} parent=0 // pred_fallthru
    _
  %v15 = vld [vmem:[%s1] sm:$0xf]
  %v16 = vld [vmem:[%s1 + $0x4] sm:$0xf]
  %v17 = vld [vmem:[%s1 + $0x8] sm:$0xf]
  %v18 = vld [vmem:[%s1 + $0xc] sm:$0xf]
  %v19 = vld [vmem:[%s0] sm:$0xf]
  %v20 = vld [vmem:[%s0 + $0x4] sm:$0xf]
  %v21 = vld [vmem:[%s0 + $0x8] sm:$0xf]
  %v22 = vld [vmem:[%s0 + $0xc] sm:$0xf]
  %v23 = vld [vmem:[%s0 + $0x10] sm:$0xf]
  %v24 = vld [vmem:[%s0 + $0x14] sm:$0xf]
  %v25 = vld [vmem:[%s0 + $0x18] sm:$0xf]
  %v26 = vld [vmem:[%s0 + $0x1c] sm:$0xf]
  %v27 = vld [vmem:[%s0 + $0x20] sm:$0xf]
  %v28 = vld [vmem:[%s0 + $0x24] sm:$0xf]
  %v29 = vld [vmem:[%s0 + $0x28] sm:$0xf]
  %v30 = vld [vmem:[%s0 + $0x2c] sm:$0xf]
  %v31 = vld [vmem:[%s0 + $0x30] sm:$0xf]
  %v32 = vld [vmem:[%s0 + $0x34] sm:$0xf]
  %v33 = vld [vmem:[%s0 + $0x38] sm:$0xf]
  %v34 = vld [vmem:[%s0 + $0x3c] sm:$0xf]
  %v35 = vld [vmem:[%s0 + $0x40] sm:$0xf]
  %v36 = vld [vmem:[%s0 + $0x44] sm:$0xf]
  %v37 = vld [vmem:[%s0 + $0x48] sm:$0xf]
  %v38 = vld [vmem:[%s0 + $0x4c] sm:$0xf]
  %v39 = vld [vmem:[%s0 + $0x50] sm:$0xf]
  %v40 = vld [vmem:[%s0 + $0x54] sm:$0xf]
  %v41 = vld [vmem:[%s0 + $0x58] sm:$0xf]
  %v42 = vld [vmem:[%s0 + $0x5c] sm:$0xf]
  %v43 = vld [vmem:[%s0 + $0x60] sm:$0xf]
  %v44 = vld [vmem:[%s0 + $0x64] sm:$0xf]
  %v45 = vld [vmem:[%s0 + $0x68] sm:$0xf]
  %v46 = vld [vmem:[%s0 + $0x6c] sm:$0xf]
  %v47 = vld [vmem:[%s0 + $0x70] sm:$0xf]
  %v48 = vld [vmem:[%s0 + $0x74] sm:$0xf]
  %v49 = vld [vmem:[%s0 + $0x78] sm:$0xf]
  %v50 = vld [vmem:[%s0 + $0x7c] sm:$0xf]
  %v51 = vld [vmem:[%s0 + $0x80] sm:$0xf]
  %v52 = vld [vmem:[%s0 + $0x84] sm:$0xf]
  %v53 = vld [vmem:[%s0 + $0x88] sm:$0xf]
  %v54 = vld [vmem:[%s0 + $0x8c] sm:$0xf]
  %v91 = vunpack.c.l.b16 %v19
  %v92 = vunpack.c.l.b16 %v20
  %v93 = vunpack.c.l.b16 %v21
  %v94 = vunpack.c.l.b16 %v22
  %v95 = vunpack.c.l.b16 %v23
  %v96 = vunpack.c.l.b16 %v24
  %v97 = vunpack.c.l.b16 %v25
  %v98 = vunpack.c.l.b16 %v26
  %v99 = vunpack.c.l.b16 %v27
  %v100 = vunpack.c.l.b16 %v28
  %v101 = vunpack.c.l.b16 %v29
  %v102 = vunpack.c.l.b16 %v30
  %v103 = vunpack.c.l.b16 %v31
  %v104 = vunpack.c.l.b16 %v32
  %v105 = vunpack.c.l.b16 %v33
  %v106 = vunpack.c.l.b16 %v34
  %v107 = vunpack.c.l.b16 %v35
  %v108 = vunpack.c.l.b16 %v36
  %v109 = vunpack.c.l.b16 %v37
  %v110 = vunpack.c.l.b16 %v38
  %v111 = vunpack.c.l.b16 %v39
  %v112 = vunpack.c.l.b16 %v40
  %v113 = vunpack.c.l.b16 %v41
  %v114 = vunpack.c.l.b16 %v42
  %v115 = vunpack.c.l.b16 %v43
  %v116 = vunpack.c.l.b16 %v44
  %v117 = vunpack.c.l.b16 %v45
  %v118 = vunpack.c.l.b16 %v46
  %v119 = vunpack.c.l.b16 %v47
  %v120 = vunpack.c.l.b16 %v48
  %v121 = vunpack.c.l.b16 %v49
  %v122 = vunpack.c.l.b16 %v50
  %v123 = vunpack.c.l.b16 %v51
  %v124 = vunpack.c.l.b16 %v52
  %v125 = vunpack.c.l.b16 %v53
  %v126 = vunpack.c.l.b16 %v54
  %v127 = vpack.c.b16 %v92, %v91
  %v128 = vpack.c.b16 %v94, %v93
  %v129 = vpack.c.b16 %v96, %v95
  %v130 = vpack.c.b16 %v98, %v97
  %v131 = vpack.c.b16 %v100, %v99
  %v132 = vpack.c.b16 %v102, %v101
  %v133 = vpack.c.b16 %v104, %v103
  %v134 = vpack.c.b16 %v106, %v105
  %v135 = vpack.c.b16 %v108, %v107
  %v136 = vpack.c.b16 %v110, %v109
  %v137 = vpack.c.b16 %v112, %v111
  %v138 = vpack.c.b16 %v114, %v113
  %v139 = vpack.c.b16 %v116, %v115
  %v140 = vpack.c.b16 %v118, %v117
  %v141 = vpack.c.b16 %v120, %v119
  %v142 = vpack.c.b16 %v122, %v121
  %v143 = vpack.c.b16 %v124, %v123
  %v144 = vpack.c.b16 %v126, %v125
  %v149 = vunpack.c.l.b16 %v15
  %v150 = vunpack.c.l.b16 %v16
  %v151 = vunpack.c.l.b16 %v17
  %v152 = vunpack.c.l.b16 %v18
  %v153 = vpack.c.b16 %v150, %v149
  %v154 = vpack.c.b16 %v152, %v151
  %vm157 = vcmask 261120
  %v159 = vsel %vm157, %v127, 0
  %v162 = vsel %vm157, %v128, 0
  %v165 = vsel %vm157, %v129, 0
  %v168 = vsel %vm157, %v130, 0
  %v171 = vsel %vm157, %v131, 0
  %v174 = vsel %vm157, %v132, 0
  %v177 = vsel %vm157, %v133, 0
  %v180 = vsel %vm157, %v134, 0
  %v183 = vsel %vm157, %v135, 0
  %v186 = vsel %vm157, %v136, 0
  %v189 = vsel %vm157, %v137, 0
  %v192 = vsel %vm157, %v138, 0
  %v195 = vsel %vm157, %v139, 0
  %v198 = vsel %vm157, %v140, 0
  %v201 = vsel %vm157, %v141, 0
  %v204 = vsel %vm157, %v142, 0
  %v207 = vsel %vm157, %v143, 0
  %v210 = vsel %vm157, %v144, 0
  %212 = vmatprep.subr.bf16.mxu0 0
  %213 = vmatpush1.bf16.msra.mxu0 0
  %214 = vmatprep.subr.bf16.mxu0 0
  %215 = vmatpush1.bf16.msra.mxu0 0
  %216 = vmatprep.subr.bf16.mxu0 0
  %217 = vmatpush1.bf16.msra.mxu0 0
  %218 = vmatprep.subr.bf16.mxu0 0
  %219 = vmatpush1.bf16.msra.mxu0 0
  %220 = vmatprep.subr.bf16.mxu0 0
  %221 = vmatpush1.bf16.msra.mxu0 0
  %222 = vmatprep.subr.bf16.mxu0 0
  %223 = vmatpush1.bf16.msra.mxu0 0
  %224 = vmatprep.subr.bf16.mxu0 0
  %225 = vmatpush1.bf16.msra.mxu0 %v154
  %226 = vmatprep.subr.bf16.mxu0 0
  %227 = vmatpush1.bf16.msra.mxu0 %v153
  %228 = vmatprep.subr.bf16.mxu0 0
  %229 = vmatpush2.bf16.msra.mxu0 0
  %230 = vmatprep.subr.bf16.mxu0 0
  %231 = vmatpush2.bf16.msra.mxu0 0
  %232 = vmatprep.subr.bf16.mxu0 0
  %233 = vmatpush2.bf16.msra.mxu0 0
  %234 = vmatprep.subr.bf16.mxu0 0
  %235 = vmatpush2.bf16.msra.mxu0 0
  %236 = vmatprep.subr.bf16.mxu0 0
  %237 = vmatpush2.bf16.msra.mxu0 0
  %238 = vmatprep.subr.bf16.mxu0 0
  %239 = vmatpush2.bf16.msra.mxu0 0
  %240 = vmatprep.subr.bf16.mxu0 0
  %241 = vmatpush2.bf16.msra.mxu0 0
  %242 = vmatprep.subr.bf16.mxu0 0
  %243 = vmatpush2.bf16.msra.mxu0 0
  %244 = vmatprep.mubr.bf16.mxu0 0
  %245 = vmatmul.mubr.bf16.gmra.mxu0 %v159
  %v246 = vpop.f32.mrf.mxu0
  %v247 = vadd.f32 0.0, %v246
  %v248 = vpop.f32.mrf.mxu0
  %v249 = vpop.f32.mrf.mxu0
  %v250 = vadd.f32 0.0, %v249
  %v251 = vpop.f32.mrf.mxu0
  %252 = vmatprep.mubr.bf16.mxu0 0
  %253 = vmatmul.mubr.bf16.gmra.mxu0 %v162
  %v254 = vpop.f32.mrf.mxu0
  %v255 = vadd.f32 0.0, %v254
  %v256 = vpop.f32.mrf.mxu0
  %v257 = vpop.f32.mrf.mxu0
  %v258 = vadd.f32 0.0, %v257
  %v259 = vpop.f32.mrf.mxu0
  %260 = vmatprep.mubr.bf16.mxu0 0
  %261 = vmatmul.mubr.bf16.gmra.mxu0 %v165
  %v262 = vpop.f32.mrf.mxu0
  %v263 = vadd.f32 0.0, %v262
  %v264 = vpop.f32.mrf.mxu0
  %v265 = vpop.f32.mrf.mxu0
  %v266 = vadd.f32 0.0, %v265
  %v267 = vpop.f32.mrf.mxu0
  %268 = vmatprep.mubr.bf16.mxu0 0
  %269 = vmatmul.mubr.bf16.gmra.mxu0 %v168
  %v270 = vpop.f32.mrf.mxu0
  %v271 = vadd.f32 0.0, %v270
  %v272 = vpop.f32.mrf.mxu0
  %v273 = vpop.f32.mrf.mxu0
  %v274 = vadd.f32 0.0, %v273
  %v275 = vpop.f32.mrf.mxu0
  %276 = vmatprep.mubr.bf16.mxu0 0
  %277 = vmatmul.mubr.bf16.gmra.mxu0 %v171
  %v278 = vpop.f32.mrf.mxu0
  %v279 = vadd.f32 0.0, %v278
  %v280 = vpop.f32.mrf.mxu0
  %v281 = vpop.f32.mrf.mxu0
  %v282 = vadd.f32 0.0, %v281
  %v283 = vpop.f32.mrf.mxu0
  %284 = vmatprep.mubr.bf16.mxu0 0
  %285 = vmatmul.mubr.bf16.gmra.mxu0 %v174
  %v286 = vpop.f32.mrf.mxu0
  %v287 = vadd.f32 0.0, %v286
  %v288 = vpop.f32.mrf.mxu0
  %v289 = vpop.f32.mrf.mxu0
  %v290 = vadd.f32 0.0, %v289
  %v291 = vpop.f32.mrf.mxu0
  %292 = vmatprep.mubr.bf16.mxu0 0
  %293 = vmatmul.mubr.bf16.gmra.mxu0 %v177
  %v294 = vpop.f32.mrf.mxu0
  %v295 = vadd.f32 0.0, %v294
  %v296 = vpop.f32.mrf.mxu0
  %v297 = vpop.f32.mrf.mxu0
  %v298 = vadd.f32 0.0, %v297
  %v299 = vpop.f32.mrf.mxu0
  %300 = vmatprep.mubr.bf16.mxu0 0
  %301 = vmatmul.mubr.bf16.gmra.mxu0 %v180
  %v302 = vpop.f32.mrf.mxu0
  %v303 = vadd.f32 0.0, %v302
  %v304 = vpop.f32.mrf.mxu0
  %v305 = vpop.f32.mrf.mxu0
  %v306 = vadd.f32 0.0, %v305
  %v307 = vpop.f32.mrf.mxu0
  %308 = vmatprep.mubr.bf16.mxu0 0
  %309 = vmatmul.mubr.bf16.gmra.mxu0 %v183
  %v310 = vpop.f32.mrf.mxu0
  %v311 = vadd.f32 0.0, %v310
  %v312 = vpop.f32.mrf.mxu0
  %v313 = vpop.f32.mrf.mxu0
  %v314 = vadd.f32 0.0, %v313
  %v315 = vpop.f32.mrf.mxu0
  %316 = vmatprep.mubr.bf16.mxu0 0
  %317 = vmatmul.mubr.bf16.gmra.mxu0 %v186
  %v318 = vpop.f32.mrf.mxu0
  %v319 = vadd.f32 0.0, %v318
  %v320 = vpop.f32.mrf.mxu0
  %v321 = vpop.f32.mrf.mxu0
  %v322 = vadd.f32 0.0, %v321
  %v323 = vpop.f32.mrf.mxu0
  %324 = vmatprep.mubr.bf16.mxu0 0
  %325 = vmatmul.mubr.bf16.gmra.mxu0 %v189
  %v326 = vpop.f32.mrf.mxu0
  %v327 = vadd.f32 0.0, %v326
  %v328 = vpop.f32.mrf.mxu0
  %v329 = vpop.f32.mrf.mxu0
  %v330 = vadd.f32 0.0, %v329
  %v331 = vpop.f32.mrf.mxu0
  %332 = vmatprep.mubr.bf16.mxu0 0
  %333 = vmatmul.mubr.bf16.gmra.mxu0 %v192
  %v334 = vpop.f32.mrf.mxu0
  %v335 = vadd.f32 0.0, %v334
  %v336 = vpop.f32.mrf.mxu0
  %v337 = vpop.f32.mrf.mxu0
  %v338 = vadd.f32 0.0, %v337
  %v339 = vpop.f32.mrf.mxu0
  %340 = vmatprep.mubr.bf16.mxu0 0
  %341 = vmatmul.mubr.bf16.gmra.mxu0 %v195
  %v342 = vpop.f32.mrf.mxu0
  %v343 = vadd.f32 0.0, %v342
  %v344 = vpop.f32.mrf.mxu0
  %v345 = vpop.f32.mrf.mxu0
  %v346 = vadd.f32 0.0, %v345
  %v347 = vpop.f32.mrf.mxu0
  %348 = vmatprep.mubr.bf16.mxu0 0
  %349 = vmatmul.mubr.bf16.gmra.mxu0 %v198
  %v350 = vpop.f32.mrf.mxu0
  %v351 = vadd.f32 0.0, %v350
  %v352 = vpop.f32.mrf.mxu0
  %v353 = vpop.f32.mrf.mxu0
  %v354 = vadd.f32 0.0, %v353
  %v355 = vpop.f32.mrf.mxu0
  %356 = vmatprep.mubr.bf16.mxu0 0
  %357 = vmatmul.mubr.bf16.gmra.mxu0 %v201
  %v358 = vpop.f32.mrf.mxu0
  %v359 = vadd.f32 0.0, %v358
  %v360 = vpop.f32.mrf.mxu0
  %v361 = vpop.f32.mrf.mxu0
  %v362 = vadd.f32 0.0, %v361
  %v363 = vpop.f32.mrf.mxu0
  %364 = vmatprep.mubr.bf16.mxu0 0
  %365 = vmatmul.mubr.bf16.gmra.mxu0 %v204
  %v366 = vpop.f32.mrf.mxu0
  %v367 = vadd.f32 0.0, %v366
  %v368 = vpop.f32.mrf.mxu0
  %v369 = vpop.f32.mrf.mxu0
  %v370 = vadd.f32 0.0, %v369
  %v371 = vpop.f32.mrf.mxu0
  %372 = vmatprep.mubr.bf16.mxu0 0
  %373 = vmatmul.mubr.bf16.gmra.mxu0 %v207
  %v374 = vpop.f32.mrf.mxu0
  %v375 = vadd.f32 0.0, %v374
  %v376 = vpop.f32.mrf.mxu0
  %v377 = vpop.f32.mrf.mxu0
  %v378 = vadd.f32 0.0, %v377
  %v379 = vpop.f32.mrf.mxu0
  %380 = vmatprep.mubr.bf16.mxu0 0
  %381 = vmatmul.mubr.bf16.gmra.mxu0 %v210
  %v382 = vpop.f32.mrf.mxu0
  %v383 = vadd.f32 0.0, %v382
  %v384 = vpop.f32.mrf.mxu0
  %v385 = vpop.f32.mrf.mxu0
  %v386 = vadd.f32 0.0, %v385
  %v387 = vpop.f32.mrf.mxu0
  %388 = vdwg.mxu0
  %s389 = scalar_lea.vmem %s0, 144
  %v390 = vld [vmem:[%s389] sm:$0xf]
  %v391 = vld [vmem:[%s389 + $0x4] sm:$0xf]
  %v392 = vld [vmem:[%s389 + $0x8] sm:$0xf]
  %v393 = vld [vmem:[%s389 + $0xc] sm:$0xf]
  %v394 = vld [vmem:[%s389 + $0x10] sm:$0xf]
  %v395 = vld [vmem:[%s389 + $0x14] sm:$0xf]
  %v396 = vld [vmem:[%s389 + $0x18] sm:$0xf]
  %v397 = vld [vmem:[%s389 + $0x1c] sm:$0xf]
  %v398 = vld [vmem:[%s389 + $0x20] sm:$0xf]
  %v399 = vld [vmem:[%s389 + $0x24] sm:$0xf]
  %v400 = vld [vmem:[%s389 + $0x28] sm:$0xf]
  %v401 = vld [vmem:[%s389 + $0x2c] sm:$0xf]
  %v402 = vld [vmem:[%s389 + $0x30] sm:$0xf]
  %v403 = vld [vmem:[%s389 + $0x34] sm:$0xf]
  %v404 = vld [vmem:[%s389 + $0x38] sm:$0xf]
  %v405 = vld [vmem:[%s389 + $0x3c] sm:$0xf]
  %v406 = vld [vmem:[%s389 + $0x40] sm:$0xf]
  %v407 = vld [vmem:[%s389 + $0x44] sm:$0xf]
  %v408 = vld [vmem:[%s389 + $0x48] sm:$0xf]
  %v409 = vld [vmem:[%s389 + $0x4c] sm:$0xf]
  %v410 = vld [vmem:[%s389 + $0x50] sm:$0xf]
  %v411 = vld [vmem:[%s389 + $0x54] sm:$0xf]
  %v412 = vld [vmem:[%s389 + $0x58] sm:$0xf]
  %v413 = vld [vmem:[%s389 + $0x5c] sm:$0xf]
  %v414 = vld [vmem:[%s389 + $0x60] sm:$0xf]
  %v415 = vld [vmem:[%s389 + $0x64] sm:$0xf]
  %v416 = vld [vmem:[%s389 + $0x68] sm:$0xf]
  %v417 = vld [vmem:[%s389 + $0x6c] sm:$0xf]
  %v418 = vld [vmem:[%s389 + $0x70] sm:$0xf]
  %v419 = vld [vmem:[%s389 + $0x74] sm:$0xf]
  %v420 = vld [vmem:[%s389 + $0x78] sm:$0xf]
  %v421 = vld [vmem:[%s389 + $0x7c] sm:$0xf]
  %v422 = vld [vmem:[%s389 + $0x80] sm:$0xf]
  %v423 = vld [vmem:[%s389 + $0x84] sm:$0xf]
  %v424 = vld [vmem:[%s389 + $0x88] sm:$0xf]
  %v425 = vld [vmem:[%s389 + $0x8c] sm:$0xf]
  %v462 = vunpack.c.l.b16 %v390
  %v463 = vunpack.c.l.b16 %v391
  %v464 = vunpack.c.l.b16 %v392
  %v465 = vunpack.c.l.b16 %v393
  %v466 = vunpack.c.l.b16 %v394
  %v467 = vunpack.c.l.b16 %v395
  %v468 = vunpack.c.l.b16 %v396
  %v469 = vunpack.c.l.b16 %v397
  %v470 = vunpack.c.l.b16 %v398
  %v471 = vunpack.c.l.b16 %v399
  %v472 = vunpack.c.l.b16 %v400
  %v473 = vunpack.c.l.b16 %v401
  %v474 = vunpack.c.l.b16 %v402
  %v475 = vunpack.c.l.b16 %v403
  %v476 = vunpack.c.l.b16 %v404
  %v477 = vunpack.c.l.b16 %v405
  %v478 = vunpack.c.l.b16 %v406
  %v479 = vunpack.c.l.b16 %v407
  %v480 = vunpack.c.l.b16 %v408
  %v481 = vunpack.c.l.b16 %v409
  %v482 = vunpack.c.l.b16 %v410
  %v483 = vunpack.c.l.b16 %v411
  %v484 = vunpack.c.l.b16 %v412
  %v485 = vunpack.c.l.b16 %v413
  %v486 = vunpack.c.l.b16 %v414
  %v487 = vunpack.c.l.b16 %v415
  %v488 = vunpack.c.l.b16 %v416
  %v489 = vunpack.c.l.b16 %v417
  %v490 = vunpack.c.l.b16 %v418
  %v491 = vunpack.c.l.b16 %v419
  %v492 = vunpack.c.l.b16 %v420
  %v493 = vunpack.c.l.b16 %v421
  %v494 = vunpack.c.l.b16 %v422
  %v495 = vunpack.c.l.b16 %v423
  %v496 = vunpack.c.l.b16 %v424
  %v497 = vunpack.c.l.b16 %v425
  %v498 = vpack.c.b16 %v463, %v462
  %v499 = vpack.c.b16 %v465, %v464
  %v500 = vpack.c.b16 %v467, %v466
  %v501 = vpack.c.b16 %v469, %v468
  %v502 = vpack.c.b16 %v471, %v470
  %v503 = vpack.c.b16 %v473, %v472
  %v504 = vpack.c.b16 %v475, %v474
  %v505 = vpack.c.b16 %v477, %v476
  %v506 = vpack.c.b16 %v479, %v478
  %v507 = vpack.c.b16 %v481, %v480
  %v508 = vpack.c.b16 %v483, %v482
  %v509 = vpack.c.b16 %v485, %v484
  %v510 = vpack.c.b16 %v487, %v486
  %v511 = vpack.c.b16 %v489, %v488
  %v512 = vpack.c.b16 %v491, %v490
  %v513 = vpack.c.b16 %v493, %v492
  %v514 = vpack.c.b16 %v495, %v494
  %v515 = vpack.c.b16 %v497, %v496
  %v517 = vsel %vm157, %v498, 0
  %v520 = vsel %vm157, %v499, 0
  %v523 = vsel %vm157, %v500, 0
  %v526 = vsel %vm157, %v501, 0
  %v529 = vsel %vm157, %v502, 0
  %v532 = vsel %vm157, %v503, 0
  %v535 = vsel %vm157, %v504, 0
  %v538 = vsel %vm157, %v505, 0
  %v541 = vsel %vm157, %v506, 0
  %v544 = vsel %vm157, %v507, 0
  %v547 = vsel %vm157, %v508, 0
  %v550 = vsel %vm157, %v509, 0
  %v553 = vsel %vm157, %v510, 0
  %v556 = vsel %vm157, %v511, 0
  %v559 = vsel %vm157, %v512, 0
  %v562 = vsel %vm157, %v513, 0
  %v565 = vsel %vm157, %v514, 0
  %v568 = vsel %vm157, %v515, 0
  %570 = vmatprep.subr.bf16.mxu0 0
  %571 = vmatpush1.bf16.msra.mxu0 0
  %572 = vmatprep.subr.bf16.mxu0 0
  %573 = vmatpush1.bf16.msra.mxu0 0
  %574 = vmatprep.subr.bf16.mxu0 0
  %575 = vmatpush1.bf16.msra.mxu0 0
  %576 = vmatprep.subr.bf16.mxu0 0
  %577 = vmatpush1.bf16.msra.mxu0 0
  %578 = vmatprep.subr.bf16.mxu0 0
  %579 = vmatpush1.bf16.msra.mxu0 0
  %580 = vmatprep.subr.bf16.mxu0 0
  %581 = vmatpush1.bf16.msra.mxu0 0
  %582 = vmatprep.subr.bf16.mxu0 0
  %583 = vmatpush1.bf16.msra.mxu0 %v154
  %584 = vmatprep.subr.bf16.mxu0 0
  %585 = vmatpush1.bf16.msra.mxu0 %v153
  %586 = vmatprep.subr.bf16.mxu0 0
  %587 = vmatpush2.bf16.msra.mxu0 0
  %588 = vmatprep.subr.bf16.mxu0 0
  %589 = vmatpush2.bf16.msra.mxu0 0
  %590 = vmatprep.subr.bf16.mxu0 0
  %591 = vmatpush2.bf16.msra.mxu0 0
  %592 = vmatprep.subr.bf16.mxu0 0
  %593 = vmatpush2.bf16.msra.mxu0 0
  %594 = vmatprep.subr.bf16.mxu0 0
  %595 = vmatpush2.bf16.msra.mxu0 0
  %596 = vmatprep.subr.bf16.mxu0 0
  %597 = vmatpush2.bf16.msra.mxu0 0
  %598 = vmatprep.subr.bf16.mxu0 0
  %599 = vmatpush2.bf16.msra.mxu0 0
  %600 = vmatprep.subr.bf16.mxu0 0
  %601 = vmatpush2.bf16.msra.mxu0 0
  %602 = vmatprep.mubr.bf16.mxu0 0
  %603 = vmatmul.mubr.bf16.gmra.mxu0 %v517
  %v604 = vpop.f32.mrf.mxu0
  %v605 = vadd.f32 0.0, %v604
  %v606 = vpop.f32.mrf.mxu0
  %v607 = vpop.f32.mrf.mxu0
  %v608 = vadd.f32 0.0, %v607
  %v609 = vpop.f32.mrf.mxu0
  %610 = vmatprep.mubr.bf16.mxu0 0
  %611 = vmatmul.mubr.bf16.gmra.mxu0 %v520
  %v612 = vpop.f32.mrf.mxu0
  %v613 = vadd.f32 0.0, %v612
  %v614 = vpop.f32.mrf.mxu0
  %v615 = vpop.f32.mrf.mxu0
  %v616 = vadd.f32 0.0, %v615
  %v617 = vpop.f32.mrf.mxu0
  %618 = vmatprep.mubr.bf16.mxu0 0
  %619 = vmatmul.mubr.bf16.gmra.mxu0 %v523
  %v620 = vpop.f32.mrf.mxu0
  %v621 = vadd.f32 0.0, %v620
  %v622 = vpop.f32.mrf.mxu0
  %v623 = vpop.f32.mrf.mxu0
  %v624 = vadd.f32 0.0, %v623
  %v625 = vpop.f32.mrf.mxu0
  %626 = vmatprep.mubr.bf16.mxu0 0
  %627 = vmatmul.mubr.bf16.gmra.mxu0 %v526
  %v628 = vpop.f32.mrf.mxu0
  %v629 = vadd.f32 0.0, %v628
  %v630 = vpop.f32.mrf.mxu0
  %v631 = vpop.f32.mrf.mxu0
  %v632 = vadd.f32 0.0, %v631
  %v633 = vpop.f32.mrf.mxu0
  %634 = vmatprep.mubr.bf16.mxu0 0
  %635 = vmatmul.mubr.bf16.gmra.mxu0 %v529
  %v636 = vpop.f32.mrf.mxu0
  %v637 = vadd.f32 0.0, %v636
  %v638 = vpop.f32.mrf.mxu0
  %v639 = vpop.f32.mrf.mxu0
  %v640 = vadd.f32 0.0, %v639
  %v641 = vpop.f32.mrf.mxu0
  %642 = vmatprep.mubr.bf16.mxu0 0
  %643 = vmatmul.mubr.bf16.gmra.mxu0 %v532
  %v644 = vpop.f32.mrf.mxu0
  %v645 = vadd.f32 0.0, %v644
  %v646 = vpop.f32.mrf.mxu0
  %v647 = vpop.f32.mrf.mxu0
  %v648 = vadd.f32 0.0, %v647
  %v649 = vpop.f32.mrf.mxu0
  %650 = vmatprep.mubr.bf16.mxu0 0
  %651 = vmatmul.mubr.bf16.gmra.mxu0 %v535
  %v652 = vpop.f32.mrf.mxu0
  %v653 = vadd.f32 0.0, %v652
  %v654 = vpop.f32.mrf.mxu0
  %v655 = vpop.f32.mrf.mxu0
  %v656 = vadd.f32 0.0, %v655
  %v657 = vpop.f32.mrf.mxu0
  %658 = vmatprep.mubr.bf16.mxu0 0
  %659 = vmatmul.mubr.bf16.gmra.mxu0 %v538
  %v660 = vpop.f32.mrf.mxu0
  %v661 = vadd.f32 0.0, %v660
  %v662 = vpop.f32.mrf.mxu0
  %v663 = vpop.f32.mrf.mxu0
  %v664 = vadd.f32 0.0, %v663
  %v665 = vpop.f32.mrf.mxu0
  %666 = vmatprep.mubr.bf16.mxu0 0
  %667 = vmatmul.mubr.bf16.gmra.mxu0 %v541
  %v668 = vpop.f32.mrf.mxu0
  %v669 = vadd.f32 0.0, %v668
  %v670 = vpop.f32.mrf.mxu0
  %v671 = vpop.f32.mrf.mxu0
  %v672 = vadd.f32 0.0, %v671
  %v673 = vpop.f32.mrf.mxu0
  %674 = vmatprep.mubr.bf16.mxu0 0
  %675 = vmatmul.mubr.bf16.gmra.mxu0 %v544
  %v676 = vpop.f32.mrf.mxu0
  %v677 = vadd.f32 0.0, %v676
  %v678 = vpop.f32.mrf.mxu0
  %v679 = vpop.f32.mrf.mxu0
  %v680 = vadd.f32 0.0, %v679
  %v681 = vpop.f32.mrf.mxu0
  %682 = vmatprep.mubr.bf16.mxu0 0
  %683 = vmatmul.mubr.bf16.gmra.mxu0 %v547
  %v684 = vpop.f32.mrf.mxu0
  %v685 = vadd.f32 0.0, %v684
  %v686 = vpop.f32.mrf.mxu0
  %v687 = vpop.f32.mrf.mxu0
  %v688 = vadd.f32 0.0, %v687
  %v689 = vpop.f32.mrf.mxu0
  %690 = vmatprep.mubr.bf16.mxu0 0
  %691 = vmatmul.mubr.bf16.gmra.mxu0 %v550
  %v692 = vpop.f32.mrf.mxu0
  %v693 = vadd.f32 0.0, %v692
  %v694 = vpop.f32.mrf.mxu0
  %v695 = vpop.f32.mrf.mxu0
  %v696 = vadd.f32 0.0, %v695
  %v697 = vpop.f32.mrf.mxu0
  %698 = vmatprep.mubr.bf16.mxu0 0
  %699 = vmatmul.mubr.bf16.gmra.mxu0 %v553
  %v700 = vpop.f32.mrf.mxu0
  %v701 = vadd.f32 0.0, %v700
  %v702 = vpop.f32.mrf.mxu0
  %v703 = vpop.f32.mrf.mxu0
  %v704 = vadd.f32 0.0, %v703
  %v705 = vpop.f32.mrf.mxu0
  %706 = vmatprep.mubr.bf16.mxu0 0
  %707 = vmatmul.mubr.bf16.gmra.mxu0 %v556
  %v708 = vpop.f32.mrf.mxu0
  %v709 = vadd.f32 0.0, %v708
  %v710 = vpop.f32.mrf.mxu0
  %v711 = vpop.f32.mrf.mxu0
  %v712 = vadd.f32 0.0, %v711
  %v713 = vpop.f32.mrf.mxu0
  %714 = vmatprep.mubr.bf16.mxu0 0
  %715 = vmatmul.mubr.bf16.gmra.mxu0 %v559
  %v716 = vpop.f32.mrf.mxu0
  %v717 = vadd.f32 0.0, %v716
  %v718 = vpop.f32.mrf.mxu0
  %v719 = vpop.f32.mrf.mxu0
  %v720 = vadd.f32 0.0, %v719
  %v721 = vpop.f32.mrf.mxu0
  %722 = vmatprep.mubr.bf16.mxu0 0
  %723 = vmatmul.mubr.bf16.gmra.mxu0 %v562
  %v724 = vpop.f32.mrf.mxu0
  %v725 = vadd.f32 0.0, %v724
  %v726 = vpop.f32.mrf.mxu0
  %v727 = vpop.f32.mrf.mxu0
  %v728 = vadd.f32 0.0, %v727
  %v729 = vpop.f32.mrf.mxu0
  %730 = vmatprep.mubr.bf16.mxu0 0
  %731 = vmatmul.mubr.bf16.gmra.mxu0 %v565
  %v732 = vpop.f32.mrf.mxu0
  %v733 = vadd.f32 0.0, %v732
  %v734 = vpop.f32.mrf.mxu0
  %v735 = vpop.f32.mrf.mxu0
  %v736 = vadd.f32 0.0, %v735
  %v737 = vpop.f32.mrf.mxu0
  %738 = vmatprep.mubr.bf16.mxu0 0
  %739 = vmatmul.mubr.bf16.gmra.mxu0 %v568
  %v740 = vpop.f32.mrf.mxu0
  %v741 = vadd.f32 0.0, %v740
  %v742 = vpop.f32.mrf.mxu0
  %v743 = vpop.f32.mrf.mxu0
  %v744 = vadd.f32 0.0, %v743
  %v745 = vpop.f32.mrf.mxu0
  %746 = vdwg.mxu0
  %s747 = scalar_lea.vmem %s0, 288
  %v748 = vld [vmem:[%s747] sm:$0xf]
  %v749 = vld [vmem:[%s747 + $0x4] sm:$0xf]
  %v750 = vld [vmem:[%s747 + $0x8] sm:$0xf]
  %v751 = vld [vmem:[%s747 + $0xc] sm:$0xf]
  %v752 = vld [vmem:[%s747 + $0x10] sm:$0xf]
  %v753 = vld [vmem:[%s747 + $0x14] sm:$0xf]
  %v754 = vld [vmem:[%s747 + $0x18] sm:$0xf]
  %v755 = vld [vmem:[%s747 + $0x1c] sm:$0xf]
  %v756 = vld [vmem:[%s747 + $0x20] sm:$0xf]
  %v757 = vld [vmem:[%s747 + $0x24] sm:$0xf]
  %v758 = vld [vmem:[%s747 + $0x28] sm:$0xf]
  %v759 = vld [vmem:[%s747 + $0x2c] sm:$0xf]
  %v760 = vld [vmem:[%s747 + $0x30] sm:$0xf]
  %v761 = vld [vmem:[%s747 + $0x34] sm:$0xf]
  %v762 = vld [vmem:[%s747 + $0x38] sm:$0xf]
  %v763 = vld [vmem:[%s747 + $0x3c] sm:$0xf]
  %v764 = vld [vmem:[%s747 + $0x40] sm:$0xf]
  %v765 = vld [vmem:[%s747 + $0x44] sm:$0xf]
  %v766 = vld [vmem:[%s747 + $0x48] sm:$0xf]
  %v767 = vld [vmem:[%s747 + $0x4c] sm:$0xf]
  %v768 = vld [vmem:[%s747 + $0x50] sm:$0xf]
  %v769 = vld [vmem:[%s747 + $0x54] sm:$0xf]
  %v770 = vld [vmem:[%s747 + $0x58] sm:$0xf]
  %v771 = vld [vmem:[%s747 + $0x5c] sm:$0xf]
  %v772 = vld [vmem:[%s747 + $0x60] sm:$0xf]
  %v773 = vld [vmem:[%s747 + $0x64] sm:$0xf]
  %v774 = vld [vmem:[%s747 + $0x68] sm:$0xf]
  %v775 = vld [vmem:[%s747 + $0x6c] sm:$0xf]
  %v776 = vld [vmem:[%s747 + $0x70] sm:$0xf]
  %v777 = vld [vmem:[%s747 + $0x74] sm:$0xf]
  %v778 = vld [vmem:[%s747 + $0x78] sm:$0xf]
  %v779 = vld [vmem:[%s747 + $0x7c] sm:$0xf]
  %v780 = vld [vmem:[%s747 + $0x80] sm:$0xf]
  %v781 = vld [vmem:[%s747 + $0x84] sm:$0xf]
  %v782 = vld [vmem:[%s747 + $0x88] sm:$0xf]
  %v783 = vld [vmem:[%s747 + $0x8c] sm:$0xf]
  %v820 = vunpack.c.l.b16 %v748
  %v821 = vunpack.c.l.b16 %v749
  %v822 = vunpack.c.l.b16 %v750
  %v823 = vunpack.c.l.b16 %v751
  %v824 = vunpack.c.l.b16 %v752
  %v825 = vunpack.c.l.b16 %v753
  %v826 = vunpack.c.l.b16 %v754
  %v827 = vunpack.c.l.b16 %v755
  %v828 = vunpack.c.l.b16 %v756
  %v829 = vunpack.c.l.b16 %v757
  %v830 = vunpack.c.l.b16 %v758
  %v831 = vunpack.c.l.b16 %v759
  %v832 = vunpack.c.l.b16 %v760
  %v833 = vunpack.c.l.b16 %v761
  %v834 = vunpack.c.l.b16 %v762
  %v835 = vunpack.c.l.b16 %v763
  %v836 = vunpack.c.l.b16 %v764
  %v837 = vunpack.c.l.b16 %v765
  %v838 = vunpack.c.l.b16 %v766
  %v839 = vunpack.c.l.b16 %v767
  %v840 = vunpack.c.l.b16 %v768
  %v841 = vunpack.c.l.b16 %v769
  %v842 = vunpack.c.l.b16 %v770
  %v843 = vunpack.c.l.b16 %v771
  %v844 = vunpack.c.l.b16 %v772
  %v845 = vunpack.c.l.b16 %v773
  %v846 = vunpack.c.l.b16 %v774
  %v847 = vunpack.c.l.b16 %v775
  %v848 = vunpack.c.l.b16 %v776
  %v849 = vunpack.c.l.b16 %v777
  %v850 = vunpack.c.l.b16 %v778
  %v851 = vunpack.c.l.b16 %v779
  %v852 = vunpack.c.l.b16 %v780
  %v853 = vunpack.c.l.b16 %v781
  %v854 = vunpack.c.l.b16 %v782
  %v855 = vunpack.c.l.b16 %v783
  %v856 = vpack.c.b16 %v821, %v820
  %v857 = vpack.c.b16 %v823, %v822
  %v858 = vpack.c.b16 %v825, %v824
  %v859 = vpack.c.b16 %v827, %v826
  %v860 = vpack.c.b16 %v829, %v828
  %v861 = vpack.c.b16 %v831, %v830
  %v862 = vpack.c.b16 %v833, %v832
  %v863 = vpack.c.b16 %v835, %v834
  %v864 = vpack.c.b16 %v837, %v836
  %v865 = vpack.c.b16 %v839, %v838
  %v866 = vpack.c.b16 %v841, %v840
  %v867 = vpack.c.b16 %v843, %v842
  %v868 = vpack.c.b16 %v845, %v844
  %v869 = vpack.c.b16 %v847, %v846
  %v870 = vpack.c.b16 %v849, %v848
  %v871 = vpack.c.b16 %v851, %v850
  %v872 = vpack.c.b16 %v853, %v852
  %v873 = vpack.c.b16 %v855, %v854
  %v875 = vsel %vm157, %v856, 0
  %v878 = vsel %vm157, %v857, 0
  %v881 = vsel %vm157, %v858, 0
  %v884 = vsel %vm157, %v859, 0
  %v887 = vsel %vm157, %v860, 0
  %v890 = vsel %vm157, %v861, 0
  %v893 = vsel %vm157, %v862, 0
  %v896 = vsel %vm157, %v863, 0
  %v899 = vsel %vm157, %v864, 0
  %v902 = vsel %vm157, %v865, 0
  %v905 = vsel %vm157, %v866, 0
  %v908 = vsel %vm157, %v867, 0
  %v911 = vsel %vm157, %v868, 0
  %v914 = vsel %vm157, %v869, 0
  %v917 = vsel %vm157, %v870, 0
  %v920 = vsel %vm157, %v871, 0
  %v923 = vsel %vm157, %v872, 0
  %v926 = vsel %vm157, %v873, 0
  %928 = vmatprep.subr.bf16.mxu0 0
  %929 = vmatpush1.bf16.msra.mxu0 0
  %930 = vmatprep.subr.bf16.mxu0 0
  %931 = vmatpush1.bf16.msra.mxu0 0
  %932 = vmatprep.subr.bf16.mxu0 0
  %933 = vmatpush1.bf16.msra.mxu0 0
  %934 = vmatprep.subr.bf16.mxu0 0
  %935 = vmatpush1.bf16.msra.mxu0 0
  %936 = vmatprep.subr.bf16.mxu0 0
  %937 = vmatpush1.bf16.msra.mxu0 0
  %938 = vmatprep.subr.bf16.mxu0 0
  %939 = vmatpush1.bf16.msra.mxu0 0
  %940 = vmatprep.subr.bf16.mxu0 0
  %941 = vmatpush1.bf16.msra.mxu0 %v154
  %942 = vmatprep.subr.bf16.mxu0 0
  %943 = vmatpush1.bf16.msra.mxu0 %v153
  %944 = vmatprep.subr.bf16.mxu0 0
  %945 = vmatpush2.bf16.msra.mxu0 0
  %946 = vmatprep.subr.bf16.mxu0 0
  %947 = vmatpush2.bf16.msra.mxu0 0
  %948 = vmatprep.subr.bf16.mxu0 0
  %949 = vmatpush2.bf16.msra.mxu0 0
  %950 = vmatprep.subr.bf16.mxu0 0
  %951 = vmatpush2.bf16.msra.mxu0 0
  %952 = vmatprep.subr.bf16.mxu0 0
  %953 = vmatpush2.bf16.msra.mxu0 0
  %954 = vmatprep.subr.bf16.mxu0 0
  %955 = vmatpush2.bf16.msra.mxu0 0
  %956 = vmatprep.subr.bf16.mxu0 0
  %957 = vmatpush2.bf16.msra.mxu0 0
  %958 = vmatprep.subr.bf16.mxu0 0
  %959 = vmatpush2.bf16.msra.mxu0 0
  %960 = vmatprep.mubr.bf16.mxu0 0
  %961 = vmatmul.mubr.bf16.gmra.mxu0 %v875
  %v962 = vpop.f32.mrf.mxu0
  %v963 = vadd.f32 0.0, %v962
  %v964 = vpop.f32.mrf.mxu0
  %v965 = vpop.f32.mrf.mxu0
  %v966 = vadd.f32 0.0, %v965
  %v967 = vpop.f32.mrf.mxu0
  %968 = vmatprep.mubr.bf16.mxu0 0
  %969 = vmatmul.mubr.bf16.gmra.mxu0 %v878
  %v970 = vpop.f32.mrf.mxu0
  %v971 = vadd.f32 0.0, %v970
  %v972 = vpop.f32.mrf.mxu0
  %v973 = vpop.f32.mrf.mxu0
  %v974 = vadd.f32 0.0, %v973
  %v975 = vpop.f32.mrf.mxu0
  %976 = vmatprep.mubr.bf16.mxu0 0
  %977 = vmatmul.mubr.bf16.gmra.mxu0 %v881
  %v978 = vpop.f32.mrf.mxu0
  %v979 = vadd.f32 0.0, %v978
  %v980 = vpop.f32.mrf.mxu0
  %v981 = vpop.f32.mrf.mxu0
  %v982 = vadd.f32 0.0, %v981
  %v983 = vpop.f32.mrf.mxu0
  %984 = vmatprep.mubr.bf16.mxu0 0
  %985 = vmatmul.mubr.bf16.gmra.mxu0 %v884
  %v986 = vpop.f32.mrf.mxu0
  %v987 = vadd.f32 0.0, %v986
  %v988 = vpop.f32.mrf.mxu0
  %v989 = vpop.f32.mrf.mxu0
  %v990 = vadd.f32 0.0, %v989
  %v991 = vpop.f32.mrf.mxu0
  %992 = vmatprep.mubr.bf16.mxu0 0
  %993 = vmatmul.mubr.bf16.gmra.mxu0 %v887
  %v994 = vpop.f32.mrf.mxu0
  %v995 = vadd.f32 0.0, %v994
  %v996 = vpop.f32.mrf.mxu0
  %v997 = vpop.f32.mrf.mxu0
  %v998 = vadd.f32 0.0, %v997
  %v999 = vpop.f32.mrf.mxu0
  %1000 = vmatprep.mubr.bf16.mxu0 0
  %1001 = vmatmul.mubr.bf16.gmra.mxu0 %v890
  %v1002 = vpop.f32.mrf.mxu0
  %v1003 = vadd.f32 0.0, %v1002
  %v1004 = vpop.f32.mrf.mxu0
  %v1005 = vpop.f32.mrf.mxu0
  %v1006 = vadd.f32 0.0, %v1005
  %v1007 = vpop.f32.mrf.mxu0
  %1008 = vmatprep.mubr.bf16.mxu0 0
  %1009 = vmatmul.mubr.bf16.gmra.mxu0 %v893
  %v1010 = vpop.f32.mrf.mxu0
  %v1011 = vadd.f32 0.0, %v1010
  %v1012 = vpop.f32.mrf.mxu0
  %v1013 = vpop.f32.mrf.mxu0
  %v1014 = vadd.f32 0.0, %v1013
  %v1015 = vpop.f32.mrf.mxu0
  %1016 = vmatprep.mubr.bf16.mxu0 0
  %1017 = vmatmul.mubr.bf16.gmra.mxu0 %v896
  %v1018 = vpop.f32.mrf.mxu0
  %v1019 = vadd.f32 0.0, %v1018
  %v1020 = vpop.f32.mrf.mxu0
  %v1021 = vpop.f32.mrf.mxu0
  %v1022 = vadd.f32 0.0, %v1021
  %v1023 = vpop.f32.mrf.mxu0
  %1024 = vmatprep.mubr.bf16.mxu0 0
  %1025 = vmatmul.mubr.bf16.gmra.mxu0 %v899
  %v1026 = vpop.f32.mrf.mxu0
  %v1027 = vadd.f32 0.0, %v1026
  %v1028 = vpop.f32.mrf.mxu0
  %v1029 = vpop.f32.mrf.mxu0
  %v1030 = vadd.f32 0.0, %v1029
  %v1031 = vpop.f32.mrf.mxu0
  %1032 = vmatprep.mubr.bf16.mxu0 0
  %1033 = vmatmul.mubr.bf16.gmra.mxu0 %v902
  %v1034 = vpop.f32.mrf.mxu0
  %v1035 = vadd.f32 0.0, %v1034
  %v1036 = vpop.f32.mrf.mxu0
  %v1037 = vpop.f32.mrf.mxu0
  %v1038 = vadd.f32 0.0, %v1037
  %v1039 = vpop.f32.mrf.mxu0
  %1040 = vmatprep.mubr.bf16.mxu0 0
  %1041 = vmatmul.mubr.bf16.gmra.mxu0 %v905
  %v1042 = vpop.f32.mrf.mxu0
  %v1043 = vadd.f32 0.0, %v1042
  %v1044 = vpop.f32.mrf.mxu0
  %v1045 = vpop.f32.mrf.mxu0
  %v1046 = vadd.f32 0.0, %v1045
  %v1047 = vpop.f32.mrf.mxu0
  %1048 = vmatprep.mubr.bf16.mxu0 0
  %1049 = vmatmul.mubr.bf16.gmra.mxu0 %v908
  %v1050 = vpop.f32.mrf.mxu0
  %v1051 = vadd.f32 0.0, %v1050
  %v1052 = vpop.f32.mrf.mxu0
  %v1053 = vpop.f32.mrf.mxu0
  %v1054 = vadd.f32 0.0, %v1053
  %v1055 = vpop.f32.mrf.mxu0
  %1056 = vmatprep.mubr.bf16.mxu0 0
  %1057 = vmatmul.mubr.bf16.gmra.mxu0 %v911
  %v1058 = vpop.f32.mrf.mxu0
  %v1059 = vadd.f32 0.0, %v1058
  %v1060 = vpop.f32.mrf.mxu0
  %v1061 = vpop.f32.mrf.mxu0
  %v1062 = vadd.f32 0.0, %v1061
  %v1063 = vpop.f32.mrf.mxu0
  %1064 = vmatprep.mubr.bf16.mxu0 0
  %1065 = vmatmul.mubr.bf16.gmra.mxu0 %v914
  %v1066 = vpop.f32.mrf.mxu0
  %v1067 = vadd.f32 0.0, %v1066
  %v1068 = vpop.f32.mrf.mxu0
  %v1069 = vpop.f32.mrf.mxu0
  %v1070 = vadd.f32 0.0, %v1069
  %v1071 = vpop.f32.mrf.mxu0
  %1072 = vmatprep.mubr.bf16.mxu0 0
  %1073 = vmatmul.mubr.bf16.gmra.mxu0 %v917
  %v1074 = vpop.f32.mrf.mxu0
  %v1075 = vadd.f32 0.0, %v1074
  %v1076 = vpop.f32.mrf.mxu0
  %v1077 = vpop.f32.mrf.mxu0
  %v1078 = vadd.f32 0.0, %v1077
  %v1079 = vpop.f32.mrf.mxu0
  %1080 = vmatprep.mubr.bf16.mxu0 0
  %1081 = vmatmul.mubr.bf16.gmra.mxu0 %v920
  %v1082 = vpop.f32.mrf.mxu0
  %v1083 = vadd.f32 0.0, %v1082
  %v1084 = vpop.f32.mrf.mxu0
  %v1085 = vpop.f32.mrf.mxu0
  %v1086 = vadd.f32 0.0, %v1085
  %v1087 = vpop.f32.mrf.mxu0
  %1088 = vmatprep.mubr.bf16.mxu0 0
  %1089 = vmatmul.mubr.bf16.gmra.mxu0 %v923
  %v1090 = vpop.f32.mrf.mxu0
  %v1091 = vadd.f32 0.0, %v1090
  %v1092 = vpop.f32.mrf.mxu0
  %v1093 = vpop.f32.mrf.mxu0
  %v1094 = vadd.f32 0.0, %v1093
  %v1095 = vpop.f32.mrf.mxu0
  %1096 = vmatprep.mubr.bf16.mxu0 0
  %1097 = vmatmul.mubr.bf16.gmra.mxu0 %v926
  %v1098 = vpop.f32.mrf.mxu0
  %v1099 = vadd.f32 0.0, %v1098
  %v1100 = vpop.f32.mrf.mxu0
  %v1101 = vpop.f32.mrf.mxu0
  %v1102 = vadd.f32 0.0, %v1101
  %v1103 = vpop.f32.mrf.mxu0
  %1104 = vdwg.mxu0
  %s1105 = scalar_lea.vmem %s0, 432
  %v1106 = vld [vmem:[%s1105] sm:$0xf]
  %v1107 = vld [vmem:[%s1105 + $0x4] sm:$0xf]
  %v1108 = vld [vmem:[%s1105 + $0x8] sm:$0xf]
  %v1109 = vld [vmem:[%s1105 + $0xc] sm:$0xf]
  %v1110 = vld [vmem:[%s1105 + $0x10] sm:$0xf]
  %v1111 = vld [vmem:[%s1105 + $0x14] sm:$0xf]
  %v1112 = vld [vmem:[%s1105 + $0x18] sm:$0xf]
  %v1113 = vld [vmem:[%s1105 + $0x1c] sm:$0xf]
  %v1114 = vld [vmem:[%s1105 + $0x20] sm:$0xf]
  %v1115 = vld [vmem:[%s1105 + $0x24] sm:$0xf]
  %v1116 = vld [vmem:[%s1105 + $0x28] sm:$0xf]
  %v1117 = vld [vmem:[%s1105 + $0x2c] sm:$0xf]
  %v1118 = vld [vmem:[%s1105 + $0x30] sm:$0xf]
  %v1119 = vld [vmem:[%s1105 + $0x34] sm:$0xf]
  %v1120 = vld [vmem:[%s1105 + $0x38] sm:$0xf]
  %v1121 = vld [vmem:[%s1105 + $0x3c] sm:$0xf]
  %v1122 = vld [vmem:[%s1105 + $0x40] sm:$0xf]
  %v1123 = vld [vmem:[%s1105 + $0x44] sm:$0xf]
  %v1124 = vld [vmem:[%s1105 + $0x48] sm:$0xf]
  %v1125 = vld [vmem:[%s1105 + $0x4c] sm:$0xf]
  %v1126 = vld [vmem:[%s1105 + $0x50] sm:$0xf]
  %v1127 = vld [vmem:[%s1105 + $0x54] sm:$0xf]
  %v1128 = vld [vmem:[%s1105 + $0x58] sm:$0xf]
  %v1129 = vld [vmem:[%s1105 + $0x5c] sm:$0xf]
  %v1130 = vld [vmem:[%s1105 + $0x60] sm:$0xf]
  %v1131 = vld [vmem:[%s1105 + $0x64] sm:$0xf]
  %v1132 = vld [vmem:[%s1105 + $0x68] sm:$0xf]
  %v1133 = vld [vmem:[%s1105 + $0x6c] sm:$0xf]
  %v1134 = vld [vmem:[%s1105 + $0x70] sm:$0xf]
  %v1135 = vld [vmem:[%s1105 + $0x74] sm:$0xf]
  %v1136 = vld [vmem:[%s1105 + $0x78] sm:$0xf]
  %v1137 = vld [vmem:[%s1105 + $0x7c] sm:$0xf]
  %v1138 = vld [vmem:[%s1105 + $0x80] sm:$0xf]
  %v1139 = vld [vmem:[%s1105 + $0x84] sm:$0xf]
  %v1140 = vld [vmem:[%s1105 + $0x88] sm:$0xf]
  %v1141 = vld [vmem:[%s1105 + $0x8c] sm:$0xf]
  %v1178 = vunpack.c.l.b16 %v1106
  %v1179 = vunpack.c.l.b16 %v1107
  %v1180 = vunpack.c.l.b16 %v1108
  %v1181 = vunpack.c.l.b16 %v1109
  %v1182 = vunpack.c.l.b16 %v1110
  %v1183 = vunpack.c.l.b16 %v1111
  %v1184 = vunpack.c.l.b16 %v1112
  %v1185 = vunpack.c.l.b16 %v1113
  %v1186 = vunpack.c.l.b16 %v1114
  %v1187 = vunpack.c.l.b16 %v1115
  %v1188 = vunpack.c.l.b16 %v1116
  %v1189 = vunpack.c.l.b16 %v1117
  %v1190 = vunpack.c.l.b16 %v1118
  %v1191 = vunpack.c.l.b16 %v1119
  %v1192 = vunpack.c.l.b16 %v1120
  %v1193 = vunpack.c.l.b16 %v1121
  %v1194 = vunpack.c.l.b16 %v1122
  %v1195 = vunpack.c.l.b16 %v1123
  %v1196 = vunpack.c.l.b16 %v1124
  %v1197 = vunpack.c.l.b16 %v1125
  %v1198 = vunpack.c.l.b16 %v1126
  %v1199 = vunpack.c.l.b16 %v1127
  %v1200 = vunpack.c.l.b16 %v1128
  %v1201 = vunpack.c.l.b16 %v1129
  %v1202 = vunpack.c.l.b16 %v1130
  %v1203 = vunpack.c.l.b16 %v1131
  %v1204 = vunpack.c.l.b16 %v1132
  %v1205 = vunpack.c.l.b16 %v1133
  %v1206 = vunpack.c.l.b16 %v1134
  %v1207 = vunpack.c.l.b16 %v1135
  %v1208 = vunpack.c.l.b16 %v1136
  %v1209 = vunpack.c.l.b16 %v1137
  %v1210 = vunpack.c.l.b16 %v1138
  %v1211 = vunpack.c.l.b16 %v1139
  %v1212 = vunpack.c.l.b16 %v1140
  %v1213 = vunpack.c.l.b16 %v1141
  %v1214 = vpack.c.b16 %v1179, %v1178
  %v1215 = vpack.c.b16 %v1181, %v1180
  %v1216 = vpack.c.b16 %v1183, %v1182
  %v1217 = vpack.c.b16 %v1185, %v1184
  %v1218 = vpack.c.b16 %v1187, %v1186
  %v1219 = vpack.c.b16 %v1189, %v1188
  %v1220 = vpack.c.b16 %v1191, %v1190
  %v1221 = vpack.c.b16 %v1193, %v1192
  %v1222 = vpack.c.b16 %v1195, %v1194
  %v1223 = vpack.c.b16 %v1197, %v1196
  %v1224 = vpack.c.b16 %v1199, %v1198
  %v1225 = vpack.c.b16 %v1201, %v1200
  %v1226 = vpack.c.b16 %v1203, %v1202
  %v1227 = vpack.c.b16 %v1205, %v1204
  %v1228 = vpack.c.b16 %v1207, %v1206
  %v1229 = vpack.c.b16 %v1209, %v1208
  %v1230 = vpack.c.b16 %v1211, %v1210
  %v1231 = vpack.c.b16 %v1213, %v1212
  %v1233 = vsel %vm157, %v1214, 0
  %v1236 = vsel %vm157, %v1215, 0
  %v1239 = vsel %vm157, %v1216, 0
  %v1242 = vsel %vm157, %v1217, 0
  %v1245 = vsel %vm157, %v1218, 0
  %v1248 = vsel %vm157, %v1219, 0
  %v1251 = vsel %vm157, %v1220, 0
  %v1254 = vsel %vm157, %v1221, 0
  %v1257 = vsel %vm157, %v1222, 0
  %v1260 = vsel %vm157, %v1223, 0
  %v1263 = vsel %vm157, %v1224, 0
  %v1266 = vsel %vm157, %v1225, 0
  %v1269 = vsel %vm157, %v1226, 0
  %v1272 = vsel %vm157, %v1227, 0
  %v1275 = vsel %vm157, %v1228, 0
  %v1278 = vsel %vm157, %v1229, 0
  %v1281 = vsel %vm157, %v1230, 0
  %v1284 = vsel %vm157, %v1231, 0
  %1286 = vmatprep.subr.bf16.mxu0 0
  %1287 = vmatpush1.bf16.msra.mxu0 0
  %1288 = vmatprep.subr.bf16.mxu0 0
  %1289 = vmatpush1.bf16.msra.mxu0 0
  %1290 = vmatprep.subr.bf16.mxu0 0
  %1291 = vmatpush1.bf16.msra.mxu0 0
  %1292 = vmatprep.subr.bf16.mxu0 0
  %1293 = vmatpush1.bf16.msra.mxu0 0
  %1294 = vmatprep.subr.bf16.mxu0 0
  %1295 = vmatpush1.bf16.msra.mxu0 0
  %1296 = vmatprep.subr.bf16.mxu0 0
  %1297 = vmatpush1.bf16.msra.mxu0 0
  %1298 = vmatprep.subr.bf16.mxu0 0
  %1299 = vmatpush1.bf16.msra.mxu0 %v154
  %1300 = vmatprep.subr.bf16.mxu0 0
  %1301 = vmatpush1.bf16.msra.mxu0 %v153
  %1302 = vmatprep.subr.bf16.mxu0 0
  %1303 = vmatpush2.bf16.msra.mxu0 0
  %1304 = vmatprep.subr.bf16.mxu0 0
  %1305 = vmatpush2.bf16.msra.mxu0 0
  %1306 = vmatprep.subr.bf16.mxu0 0
  %1307 = vmatpush2.bf16.msra.mxu0 0
  %1308 = vmatprep.subr.bf16.mxu0 0
  %1309 = vmatpush2.bf16.msra.mxu0 0
  %1310 = vmatprep.subr.bf16.mxu0 0
  %1311 = vmatpush2.bf16.msra.mxu0 0
  %1312 = vmatprep.subr.bf16.mxu0 0
  %1313 = vmatpush2.bf16.msra.mxu0 0
  %1314 = vmatprep.subr.bf16.mxu0 0
  %1315 = vmatpush2.bf16.msra.mxu0 0
  %1316 = vmatprep.subr.bf16.mxu0 0
  %1317 = vmatpush2.bf16.msra.mxu0 0
  %1318 = vmatprep.mubr.bf16.mxu0 0
  %1319 = vmatmul.mubr.bf16.gmra.mxu0 %v1233
  %v1320 = vpop.f32.mrf.mxu0
  %v1321 = vadd.f32 0.0, %v1320
  %v1322 = vpop.f32.mrf.mxu0
  %v1323 = vpop.f32.mrf.mxu0
  %v1324 = vadd.f32 0.0, %v1323
  %v1325 = vpop.f32.mrf.mxu0
  %1326 = vmatprep.mubr.bf16.mxu0 0
  %1327 = vmatmul.mubr.bf16.gmra.mxu0 %v1236
  %v1328 = vpop.f32.mrf.mxu0
  %v1329 = vadd.f32 0.0, %v1328
  %v1330 = vpop.f32.mrf.mxu0
  %v1331 = vpop.f32.mrf.mxu0
  %v1332 = vadd.f32 0.0, %v1331
  %v1333 = vpop.f32.mrf.mxu0
  %1334 = vmatprep.mubr.bf16.mxu0 0
  %1335 = vmatmul.mubr.bf16.gmra.mxu0 %v1239
  %v1336 = vpop.f32.mrf.mxu0
  %v1337 = vadd.f32 0.0, %v1336
  %v1338 = vpop.f32.mrf.mxu0
  %v1339 = vpop.f32.mrf.mxu0
  %v1340 = vadd.f32 0.0, %v1339
  %v1341 = vpop.f32.mrf.mxu0
  %1342 = vmatprep.mubr.bf16.mxu0 0
  %1343 = vmatmul.mubr.bf16.gmra.mxu0 %v1242
  %v1344 = vpop.f32.mrf.mxu0
  %v1345 = vadd.f32 0.0, %v1344
  %v1346 = vpop.f32.mrf.mxu0
  %v1347 = vpop.f32.mrf.mxu0
  %v1348 = vadd.f32 0.0, %v1347
  %v1349 = vpop.f32.mrf.mxu0
  %1350 = vmatprep.mubr.bf16.mxu0 0
  %1351 = vmatmul.mubr.bf16.gmra.mxu0 %v1245
  %v1352 = vpop.f32.mrf.mxu0
  %v1353 = vadd.f32 0.0, %v1352
  %v1354 = vpop.f32.mrf.mxu0
  %v1355 = vpop.f32.mrf.mxu0
  %v1356 = vadd.f32 0.0, %v1355
  %v1357 = vpop.f32.mrf.mxu0
  %1358 = vmatprep.mubr.bf16.mxu0 0
  %1359 = vmatmul.mubr.bf16.gmra.mxu0 %v1248
  %v1360 = vpop.f32.mrf.mxu0
  %v1361 = vadd.f32 0.0, %v1360
  %v1362 = vpop.f32.mrf.mxu0
  %v1363 = vpop.f32.mrf.mxu0
  %v1364 = vadd.f32 0.0, %v1363
  %v1365 = vpop.f32.mrf.mxu0
  %1366 = vmatprep.mubr.bf16.mxu0 0
  %1367 = vmatmul.mubr.bf16.gmra.mxu0 %v1251
  %v1368 = vpop.f32.mrf.mxu0
  %v1369 = vadd.f32 0.0, %v1368
  %v1370 = vpop.f32.mrf.mxu0
  %v1371 = vpop.f32.mrf.mxu0
  %v1372 = vadd.f32 0.0, %v1371
  %v1373 = vpop.f32.mrf.mxu0
  %1374 = vmatprep.mubr.bf16.mxu0 0
  %1375 = vmatmul.mubr.bf16.gmra.mxu0 %v1254
  %v1376 = vpop.f32.mrf.mxu0
  %v1377 = vadd.f32 0.0, %v1376
  %v1378 = vpop.f32.mrf.mxu0
  %v1379 = vpop.f32.mrf.mxu0
  %v1380 = vadd.f32 0.0, %v1379
  %v1381 = vpop.f32.mrf.mxu0
  %1382 = vmatprep.mubr.bf16.mxu0 0
  %1383 = vmatmul.mubr.bf16.gmra.mxu0 %v1257
  %v1384 = vpop.f32.mrf.mxu0
  %v1385 = vadd.f32 0.0, %v1384
  %v1386 = vpop.f32.mrf.mxu0
  %v1387 = vpop.f32.mrf.mxu0
  %v1388 = vadd.f32 0.0, %v1387
  %v1389 = vpop.f32.mrf.mxu0
  %1390 = vmatprep.mubr.bf16.mxu0 0
  %1391 = vmatmul.mubr.bf16.gmra.mxu0 %v1260
  %v1392 = vpop.f32.mrf.mxu0
  %v1393 = vadd.f32 0.0, %v1392
  %v1394 = vpop.f32.mrf.mxu0
  %v1395 = vpop.f32.mrf.mxu0
  %v1396 = vadd.f32 0.0, %v1395
  %v1397 = vpop.f32.mrf.mxu0
  %1398 = vmatprep.mubr.bf16.mxu0 0
  %1399 = vmatmul.mubr.bf16.gmra.mxu0 %v1263
  %v1400 = vpop.f32.mrf.mxu0
  %v1401 = vadd.f32 0.0, %v1400
  %v1402 = vpop.f32.mrf.mxu0
  %v1403 = vpop.f32.mrf.mxu0
  %v1404 = vadd.f32 0.0, %v1403
  %v1405 = vpop.f32.mrf.mxu0
  %1406 = vmatprep.mubr.bf16.mxu0 0
  %1407 = vmatmul.mubr.bf16.gmra.mxu0 %v1266
  %v1408 = vpop.f32.mrf.mxu0
  %v1409 = vadd.f32 0.0, %v1408
  %v1410 = vpop.f32.mrf.mxu0
  %v1411 = vpop.f32.mrf.mxu0
  %v1412 = vadd.f32 0.0, %v1411
  %v1413 = vpop.f32.mrf.mxu0
  %1414 = vmatprep.mubr.bf16.mxu0 0
  %1415 = vmatmul.mubr.bf16.gmra.mxu0 %v1269
  %v1416 = vpop.f32.mrf.mxu0
  %v1417 = vadd.f32 0.0, %v1416
  %v1418 = vpop.f32.mrf.mxu0
  %v1419 = vpop.f32.mrf.mxu0
  %v1420 = vadd.f32 0.0, %v1419
  %v1421 = vpop.f32.mrf.mxu0
  %1422 = vmatprep.mubr.bf16.mxu0 0
  %1423 = vmatmul.mubr.bf16.gmra.mxu0 %v1272
  %v1424 = vpop.f32.mrf.mxu0
  %v1425 = vadd.f32 0.0, %v1424
  %v1426 = vpop.f32.mrf.mxu0
  %v1427 = vpop.f32.mrf.mxu0
  %v1428 = vadd.f32 0.0, %v1427
  %v1429 = vpop.f32.mrf.mxu0
  %1430 = vmatprep.mubr.bf16.mxu0 0
  %1431 = vmatmul.mubr.bf16.gmra.mxu0 %v1275
  %v1432 = vpop.f32.mrf.mxu0
  %v1433 = vadd.f32 0.0, %v1432
  %v1434 = vpop.f32.mrf.mxu0
  %v1435 = vpop.f32.mrf.mxu0
  %v1436 = vadd.f32 0.0, %v1435
  %v1437 = vpop.f32.mrf.mxu0
  %1438 = vmatprep.mubr.bf16.mxu0 0
  %1439 = vmatmul.mubr.bf16.gmra.mxu0 %v1278
  %v1440 = vpop.f32.mrf.mxu0
  %v1441 = vadd.f32 0.0, %v1440
  %v1442 = vpop.f32.mrf.mxu0
  %v1443 = vpop.f32.mrf.mxu0
  %v1444 = vadd.f32 0.0, %v1443
  %v1445 = vpop.f32.mrf.mxu0
  %1446 = vmatprep.mubr.bf16.mxu0 0
  %1447 = vmatmul.mubr.bf16.gmra.mxu0 %v1281
  %v1448 = vpop.f32.mrf.mxu0
  %v1449 = vadd.f32 0.0, %v1448
  %v1450 = vpop.f32.mrf.mxu0
  %v1451 = vpop.f32.mrf.mxu0
  %v1452 = vadd.f32 0.0, %v1451
  %v1453 = vpop.f32.mrf.mxu0
  %1454 = vmatprep.mubr.bf16.mxu0 0
  %1455 = vmatmul.mubr.bf16.gmra.mxu0 %v1284
  %v1456 = vpop.f32.mrf.mxu0
  %v1457 = vadd.f32 0.0, %v1456
  %v1458 = vpop.f32.mrf.mxu0
  %v1459 = vpop.f32.mrf.mxu0
  %v1460 = vadd.f32 0.0, %v1459
  %v1461 = vpop.f32.mrf.mxu0
  %1462 = vdwg.mxu0
  %v1463 = vmax.f32 %v247, %v605
  %v1464 = vmax.f32 %v250, %v608
  %v1465 = vmax.f32 %v255, %v613
  %v1466 = vmax.f32 %v258, %v616
  %v1467 = vmax.f32 %v263, %v621
  %v1468 = vmax.f32 %v266, %v624
  %v1469 = vmax.f32 %v271, %v629
  %v1470 = vmax.f32 %v274, %v632
  %v1471 = vmax.f32 %v279, %v637
  %v1472 = vmax.f32 %v282, %v640
  %v1473 = vmax.f32 %v287, %v645
  %v1474 = vmax.f32 %v290, %v648
  %v1475 = vmax.f32 %v295, %v653
  %v1476 = vmax.f32 %v298, %v656
  %v1477 = vmax.f32 %v303, %v661
  %v1478 = vmax.f32 %v306, %v664
  %v1479 = vmax.f32 %v311, %v669
  %v1480 = vmax.f32 %v314, %v672
  %v1481 = vmax.f32 %v319, %v677
  %v1482 = vmax.f32 %v322, %v680
  %v1483 = vmax.f32 %v327, %v685
  %v1484 = vmax.f32 %v330, %v688
  %v1485 = vmax.f32 %v335, %v693
  %v1486 = vmax.f32 %v338, %v696
  %v1487 = vmax.f32 %v343, %v701
  %v1488 = vmax.f32 %v346, %v704
  %v1489 = vmax.f32 %v351, %v709
  %v1490 = vmax.f32 %v354, %v712
  %v1491 = vmax.f32 %v359, %v717
  %v1492 = vmax.f32 %v362, %v720
  %v1493 = vmax.f32 %v367, %v725
  %v1494 = vmax.f32 %v370, %v728
  %v1495 = vmax.f32 %v375, %v733
  %v1496 = vmax.f32 %v378, %v736
  %v1497 = vmax.f32 %v383, %v741
  %v1498 = vmax.f32 %v386, %v744
  %v1499 = vmax.f32 %v963, %v1321
  %v1500 = vmax.f32 %v966, %v1324
  %v1501 = vmax.f32 %v971, %v1329
  %v1502 = vmax.f32 %v974, %v1332
  %v1503 = vmax.f32 %v979, %v1337
  %v1504 = vmax.f32 %v982, %v1340
  %v1505 = vmax.f32 %v987, %v1345
  %v1506 = vmax.f32 %v990, %v1348
  %v1507 = vmax.f32 %v995, %v1353
  %v1508 = vmax.f32 %v998, %v1356
  %v1509 = vmax.f32 %v1003, %v1361
  %v1510 = vmax.f32 %v1006, %v1364
  %v1511 = vmax.f32 %v1011, %v1369
  %v1512 = vmax.f32 %v1014, %v1372
  %v1513 = vmax.f32 %v1019, %v1377
  %v1514 = vmax.f32 %v1022, %v1380
  %v1515 = vmax.f32 %v1027, %v1385
  %v1516 = vmax.f32 %v1030, %v1388
  %v1517 = vmax.f32 %v1035, %v1393
  %v1518 = vmax.f32 %v1038, %v1396
  %v1519 = vmax.f32 %v1043, %v1401
  %v1520 = vmax.f32 %v1046, %v1404
  %v1521 = vmax.f32 %v1051, %v1409
  %v1522 = vmax.f32 %v1054, %v1412
  %v1523 = vmax.f32 %v1059, %v1417
  %v1524 = vmax.f32 %v1062, %v1420
  %v1525 = vmax.f32 %v1067, %v1425
  %v1526 = vmax.f32 %v1070, %v1428
  %v1527 = vmax.f32 %v1075, %v1433
  %v1528 = vmax.f32 %v1078, %v1436
  %v1529 = vmax.f32 %v1083, %v1441
  %v1530 = vmax.f32 %v1086, %v1444
  %v1531 = vmax.f32 %v1091, %v1449
  %v1532 = vmax.f32 %v1094, %v1452
  %v1533 = vmax.f32 %v1099, %v1457
  %v1534 = vmax.f32 %v1102, %v1460
  %v1535 = vmax.f32 %v1463, %v1499
  %v1536 = vmax.f32 %v1464, %v1500
  %v1537 = vmax.f32 %v1465, %v1501
  %v1538 = vmax.f32 %v1466, %v1502
  %v1539 = vmax.f32 %v1467, %v1503
  %v1540 = vmax.f32 %v1468, %v1504
  %v1541 = vmax.f32 %v1469, %v1505
  %v1542 = vmax.f32 %v1470, %v1506
  %v1543 = vmax.f32 %v1471, %v1507
  %v1544 = vmax.f32 %v1472, %v1508
  %v1545 = vmax.f32 %v1473, %v1509
  %v1546 = vmax.f32 %v1474, %v1510
  %v1547 = vmax.f32 %v1475, %v1511
  %v1548 = vmax.f32 %v1476, %v1512
  %v1549 = vmax.f32 %v1477, %v1513
  %v1550 = vmax.f32 %v1478, %v1514
  %v1551 = vmax.f32 %v1479, %v1515
  %v1552 = vmax.f32 %v1480, %v1516
  %v1553 = vmax.f32 %v1481, %v1517
  %v1554 = vmax.f32 %v1482, %v1518
  %v1555 = vmax.f32 %v1483, %v1519
  %v1556 = vmax.f32 %v1484, %v1520
  %v1557 = vmax.f32 %v1485, %v1521
  %v1558 = vmax.f32 %v1486, %v1522
  %v1559 = vmax.f32 %v1487, %v1523
  %v1560 = vmax.f32 %v1488, %v1524
  %v1561 = vmax.f32 %v1489, %v1525
  %v1562 = vmax.f32 %v1490, %v1526
  %v1563 = vmax.f32 %v1491, %v1527
  %v1564 = vmax.f32 %v1492, %v1528
  %v1565 = vmax.f32 %v1493, %v1529
  %v1566 = vmax.f32 %v1494, %v1530
  %v1567 = vmax.f32 %v1495, %v1531
  %v1568 = vmax.f32 %v1496, %v1532
  %v1569 = vmax.f32 %v1497, %v1533
  %v1570 = vmax.f32 %v1498, %v1534
  %v1571 = vld [vmem:[%s2] sm:$0x1]
  %v1573 = vlaneseq
  %v1574 = vshrl.u32 %v1573, 7
  %v1575 = vsub.s32 0, %v1574
  %v1576 = vrot.slane %v1571, %v1575
  %v1578 = vadd.f32 %v1535, %v1576
  %v1579 = vadd.f32 %v1536, %v1576
  %v1580 = vadd.f32 %v1537, %v1576
  %v1581 = vadd.f32 %v1538, %v1576
  %v1582 = vadd.f32 %v1539, %v1576
  %v1583 = vadd.f32 %v1540, %v1576
  %v1584 = vadd.f32 %v1541, %v1576
  %v1585 = vadd.f32 %v1542, %v1576
  %v1586 = vadd.f32 %v1543, %v1576
  %v1587 = vadd.f32 %v1544, %v1576
  %v1588 = vadd.f32 %v1545, %v1576
  %v1589 = vadd.f32 %v1546, %v1576
  %v1590 = vadd.f32 %v1547, %v1576
  %v1591 = vadd.f32 %v1548, %v1576
  %v1592 = vadd.f32 %v1549, %v1576
  %v1593 = vadd.f32 %v1550, %v1576
  %v1594 = vadd.f32 %v1551, %v1576
  %v1595 = vadd.f32 %v1552, %v1576
  %v1596 = vadd.f32 %v1553, %v1576
  %v1597 = vadd.f32 %v1554, %v1576
  %v1598 = vadd.f32 %v1555, %v1576
  %v1599 = vadd.f32 %v1556, %v1576
  %v1600 = vadd.f32 %v1557, %v1576
  %v1601 = vadd.f32 %v1558, %v1576
  %v1602 = vadd.f32 %v1559, %v1576
  %v1603 = vadd.f32 %v1560, %v1576
  %v1604 = vadd.f32 %v1561, %v1576
  %v1605 = vadd.f32 %v1562, %v1576
  %v1606 = vadd.f32 %v1563, %v1576
  %v1607 = vadd.f32 %v1564, %v1576
  %v1608 = vadd.f32 %v1565, %v1576
  %v1609 = vadd.f32 %v1566, %v1576
  %v1610 = vadd.f32 %v1567, %v1576
  %v1611 = vadd.f32 %v1568, %v1576
  %v1612 = vadd.f32 %v1569, %v1576
  %v1613 = vadd.f32 %v1570, %v1576
  %v1614 = vmax.f32 %v1578, 0.0
  %v1615 = vmax.f32 %v1579, 0.0
  %v1616 = vmax.f32 %v1580, 0.0
  %v1617 = vmax.f32 %v1581, 0.0
  %v1618 = vmax.f32 %v1582, 0.0
  %v1619 = vmax.f32 %v1583, 0.0
  %v1620 = vmax.f32 %v1584, 0.0
  %v1621 = vmax.f32 %v1585, 0.0
  %v1622 = vmax.f32 %v1586, 0.0
  %v1623 = vmax.f32 %v1587, 0.0
  %v1624 = vmax.f32 %v1588, 0.0
  %v1625 = vmax.f32 %v1589, 0.0
  %v1626 = vmax.f32 %v1590, 0.0
  %v1627 = vmax.f32 %v1591, 0.0
  %v1628 = vmax.f32 %v1592, 0.0
  %v1629 = vmax.f32 %v1593, 0.0
  %v1630 = vmax.f32 %v1594, 0.0
  %v1631 = vmax.f32 %v1595, 0.0
  %v1632 = vmax.f32 %v1596, 0.0
  %v1633 = vmax.f32 %v1597, 0.0
  %v1634 = vmax.f32 %v1598, 0.0
  %v1635 = vmax.f32 %v1599, 0.0
  %v1636 = vmax.f32 %v1600, 0.0
  %v1637 = vmax.f32 %v1601, 0.0
  %v1638 = vmax.f32 %v1602, 0.0
  %v1639 = vmax.f32 %v1603, 0.0
  %v1640 = vmax.f32 %v1604, 0.0
  %v1641 = vmax.f32 %v1605, 0.0
  %v1642 = vmax.f32 %v1606, 0.0
  %v1643 = vmax.f32 %v1607, 0.0
  %v1644 = vmax.f32 %v1608, 0.0
  %v1645 = vmax.f32 %v1609, 0.0
  %v1646 = vmax.f32 %v1610, 0.0
  %v1647 = vmax.f32 %v1611, 0.0
  %v1648 = vmax.f32 %v1612, 0.0
  %v1649 = vmax.f32 %v1613, 0.0
  %v1650 = vpack.c.bf16 %v1615, %v1614
  %v1651 = vpack.c.bf16 %v1617, %v1616
  %v1652 = vpack.c.bf16 %v1619, %v1618
  %v1653 = vpack.c.bf16 %v1621, %v1620
  %v1654 = vpack.c.bf16 %v1623, %v1622
  %v1655 = vpack.c.bf16 %v1625, %v1624
  %v1656 = vpack.c.bf16 %v1627, %v1626
  %v1657 = vpack.c.bf16 %v1629, %v1628
  %v1658 = vpack.c.bf16 %v1631, %v1630
  %v1659 = vpack.c.bf16 %v1633, %v1632
  %v1660 = vpack.c.bf16 %v1635, %v1634
  %v1661 = vpack.c.bf16 %v1637, %v1636
  %v1662 = vpack.c.bf16 %v1639, %v1638
  %v1663 = vpack.c.bf16 %v1641, %v1640
  %v1664 = vpack.c.bf16 %v1643, %v1642
  %v1665 = vpack.c.bf16 %v1645, %v1644
  %v1666 = vpack.c.bf16 %v1647, %v1646
  %v1667 = vpack.c.bf16 %v1649, %v1648
  %v1686 = vunpack.c.l.b16 %v1650
  %v1687 = vunpack.c.h.b16 %v1650
  %v1688 = vunpack.c.l.b16 %v1651
  %v1689 = vunpack.c.h.b16 %v1651
  %v1690 = vunpack.c.l.b16 %v1652
  %v1691 = vunpack.c.h.b16 %v1652
  %v1692 = vunpack.c.l.b16 %v1653
  %v1693 = vunpack.c.h.b16 %v1653
  %v1694 = vunpack.c.l.b16 %v1654
  %v1695 = vunpack.c.h.b16 %v1654
  %v1696 = vunpack.c.l.b16 %v1655
  %v1697 = vunpack.c.h.b16 %v1655
  %v1698 = vunpack.c.l.b16 %v1656
  %v1699 = vunpack.c.h.b16 %v1656
  %v1700 = vunpack.c.l.b16 %v1657
  %v1701 = vunpack.c.h.b16 %v1657
  %v1702 = vunpack.c.l.b16 %v1658
  %v1703 = vunpack.c.h.b16 %v1658
  %v1704 = vunpack.c.l.b16 %v1659
  %v1705 = vunpack.c.h.b16 %v1659
  %v1706 = vunpack.c.l.b16 %v1660
  %v1707 = vunpack.c.h.b16 %v1660
  %v1708 = vunpack.c.l.b16 %v1661
  %v1709 = vunpack.c.h.b16 %v1661
  %v1710 = vunpack.c.l.b16 %v1662
  %v1711 = vunpack.c.h.b16 %v1662
  %v1712 = vunpack.c.l.b16 %v1663
  %v1713 = vunpack.c.h.b16 %v1663
  %v1714 = vunpack.c.l.b16 %v1664
  %v1715 = vunpack.c.h.b16 %v1664
  %v1716 = vunpack.c.l.b16 %v1665
  %v1717 = vunpack.c.h.b16 %v1665
  %v1718 = vunpack.c.l.b16 %v1666
  %v1719 = vunpack.c.h.b16 %v1666
  %v1720 = vunpack.c.l.b16 %v1667
  %v1721 = vunpack.c.h.b16 %v1667
  %v1722 = vpack.c.b16 %v1686, %v1686
  %v1723 = vpack.c.b16 %v1687, %v1687
  %v1724 = vpack.c.b16 %v1688, %v1688
  %v1725 = vpack.c.b16 %v1689, %v1689
  %v1726 = vpack.c.b16 %v1690, %v1690
  %v1727 = vpack.c.b16 %v1691, %v1691
  %v1728 = vpack.c.b16 %v1692, %v1692
  %v1729 = vpack.c.b16 %v1693, %v1693
  %v1730 = vpack.c.b16 %v1694, %v1694
  %v1731 = vpack.c.b16 %v1695, %v1695
  %v1732 = vpack.c.b16 %v1696, %v1696
  %v1733 = vpack.c.b16 %v1697, %v1697
  %v1734 = vpack.c.b16 %v1698, %v1698
  %v1735 = vpack.c.b16 %v1699, %v1699
  %v1736 = vpack.c.b16 %v1700, %v1700
  %v1737 = vpack.c.b16 %v1701, %v1701
  %v1738 = vpack.c.b16 %v1702, %v1702
  %v1739 = vpack.c.b16 %v1703, %v1703
  %v1740 = vpack.c.b16 %v1704, %v1704
  %v1741 = vpack.c.b16 %v1705, %v1705
  %v1742 = vpack.c.b16 %v1706, %v1706
  %v1743 = vpack.c.b16 %v1707, %v1707
  %v1744 = vpack.c.b16 %v1708, %v1708
  %v1745 = vpack.c.b16 %v1709, %v1709
  %v1746 = vpack.c.b16 %v1710, %v1710
  %v1747 = vpack.c.b16 %v1711, %v1711
  %v1748 = vpack.c.b16 %v1712, %v1712
  %v1749 = vpack.c.b16 %v1713, %v1713
  %v1750 = vpack.c.b16 %v1714, %v1714
  %v1751 = vpack.c.b16 %v1715, %v1715
  %v1752 = vpack.c.b16 %v1716, %v1716
  %v1753 = vpack.c.b16 %v1717, %v1717
  %v1754 = vpack.c.b16 %v1718, %v1718
  %v1755 = vpack.c.b16 %v1719, %v1719
  %v1756 = vpack.c.b16 %v1720, %v1720
  %v1757 = vpack.c.b16 %v1721, %v1721
  %vm1794 = vcmask 158720
  %1795 = vst.msk [vmem:[%s3] sm:$0xf] %vm1794, %v1722
  %1796 = vst.msk [vmem:[%s3 + $0x4] sm:$0xf] %vm1794, %v1723
  %1797 = vst.msk [vmem:[%s3 + $0x8] sm:$0xf] %vm1794, %v1724
  %1798 = vst.msk [vmem:[%s3 + $0xc] sm:$0xf] %vm1794, %v1725
  %1799 = vst.msk [vmem:[%s3 + $0x10] sm:$0xf] %vm1794, %v1726
  %1800 = vst.msk [vmem:[%s3 + $0x14] sm:$0xf] %vm1794, %v1727
  %1801 = vst.msk [vmem:[%s3 + $0x18] sm:$0xf] %vm1794, %v1728
  %1802 = vst.msk [vmem:[%s3 + $0x1c] sm:$0xf] %vm1794, %v1729
  %1803 = vst.msk [vmem:[%s3 + $0x20] sm:$0xf] %vm1794, %v1730
  %1804 = vst.msk [vmem:[%s3 + $0x24] sm:$0xf] %vm1794, %v1731
  %1805 = vst.msk [vmem:[%s3 + $0x28] sm:$0xf] %vm1794, %v1732
  %1806 = vst.msk [vmem:[%s3 + $0x2c] sm:$0xf] %vm1794, %v1733
  %1807 = vst.msk [vmem:[%s3 + $0x30] sm:$0xf] %vm1794, %v1734
  %1808 = vst.msk [vmem:[%s3 + $0x34] sm:$0xf] %vm1794, %v1735
  %1809 = vst.msk [vmem:[%s3 + $0x38] sm:$0xf] %vm1794, %v1736
  %1810 = vst.msk [vmem:[%s3 + $0x3c] sm:$0xf] %vm1794, %v1737
  %1811 = vst.msk [vmem:[%s3 + $0x40] sm:$0xf] %vm1794, %v1738
  %1812 = vst.msk [vmem:[%s3 + $0x44] sm:$0xf] %vm1794, %v1739
  %1813 = vst.msk [vmem:[%s3 + $0x48] sm:$0xf] %vm1794, %v1740
  %1814 = vst.msk [vmem:[%s3 + $0x4c] sm:$0xf] %vm1794, %v1741
  %1815 = vst.msk [vmem:[%s3 + $0x50] sm:$0xf] %vm1794, %v1742
  %1816 = vst.msk [vmem:[%s3 + $0x54] sm:$0xf] %vm1794, %v1743
  %1817 = vst.msk [vmem:[%s3 + $0x58] sm:$0xf] %vm1794, %v1744
  %1818 = vst.msk [vmem:[%s3 + $0x5c] sm:$0xf] %vm1794, %v1745
  %1819 = vst.msk [vmem:[%s3 + $0x60] sm:$0xf] %vm1794, %v1746
  %1820 = vst.msk [vmem:[%s3 + $0x64] sm:$0xf] %vm1794, %v1747
  %1821 = vst.msk [vmem:[%s3 + $0x68] sm:$0xf] %vm1794, %v1748
  %1822 = vst.msk [vmem:[%s3 + $0x6c] sm:$0xf] %vm1794, %v1749
  %1823 = vst.msk [vmem:[%s3 + $0x70] sm:$0xf] %vm1794, %v1750
  %1824 = vst.msk [vmem:[%s3 + $0x74] sm:$0xf] %vm1794, %v1751
  %1825 = vst.msk [vmem:[%s3 + $0x78] sm:$0xf] %vm1794, %v1752
  %1826 = vst.msk [vmem:[%s3 + $0x7c] sm:$0xf] %vm1794, %v1753
  %1827 = vst.msk [vmem:[%s3 + $0x80] sm:$0xf] %vm1794, %v1754
  %1828 = vst.msk [vmem:[%s3 + $0x84] sm:$0xf] %vm1794, %v1755
  %1829 = vst.msk [vmem:[%s3 + $0x88] sm:$0xf] %vm1794, %v1756
  %1830 = vst.msk [vmem:[%s3 + $0x8c] sm:$0xf] %vm1794, %v1757
  // Predicated region
  $region14: #{net_forward.3} parent=0 // pred_check
    _
  $region15: #{net_forward.3} parent=0 // pred_check_branch
    %1832 = sbr.rel (0) target = $region17
  $region16: #{net_forward.3} parent=0 // pred_region
    _
  $region17: #{net_forward.3} parent=0 // pred_fallthru
    _
  // Predicated region
  $region18: #{net_forward.3} parent=0 // pred_check
    _
  $region19: #{net_forward.3} parent=0 // pred_check_branch
    %1834 = sbr.rel (0) target = $region21
  $region20: #{net_forward.3} parent=0 // pred_region
    _
  $region21: #{net_forward.3} parent=0 // pred_fallthru
    _

// kernel: net_forward.4
$region0: #{net_forward.4}
  #allocation0 [shape = 'u32[]', space=smem, size = 0x4, offset = 0x4, fixed_abs, tag = 'smem constant byte address 0x4 - core index']
  #allocation1 [shape = 'u32[144,128]{1,0:T(1,128)}', space=vmem, size = 0x12000, scoped, tag = 'internal scratch']
  %s0 = inlined_call_operand.vmem [shape: bf16[4,32,512], index: 0, kind: input, shape index: {}]
  %s1 = inlined_call_operand.vmem [shape: bf16[512,128], index: 1, kind: input, shape index: {}]
  %s2 = inlined_call_operand.vmem [shape: f32[1,128], index: 2, kind: input, shape index: {}]
  %s3 = inlined_call_operand.vmem [shape: bf16[32,50], index: 3, kind: output, shape index: {}]
  %s4 = sld [smem:[#allocation0]]
  $region22: #{net_forward.4} parent=0
    _
  %s6 = ssub.s32 1, %s4
  %s7 = scalar_select 0, %s6, %s4
  // Predicated region
  $region2: #{net_forward.4} parent=0 // pred_check
    _
  $region3: #{net_forward.4} parent=0 // pred_check_branch
    %9 = sbr.rel (0) target = $region5
  $region4: #{net_forward.4} parent=0 // pred_region
    _
  $region5: #{net_forward.4} parent=0 // pred_fallthru
    _
  // Predicated region
  $region6: #{net_forward.4} parent=0 // pred_check
    _
  $region7: #{net_forward.4} parent=0 // pred_check_branch
    %11 = sbr.rel (0) target = $region9
  $region8: #{net_forward.4} parent=0 // pred_region
    _
  $region9: #{net_forward.4} parent=0 // pred_fallthru
    _
  // Predicated region
  $region10: #{net_forward.4} parent=0 // pred_check
    _
  $region11: #{net_forward.4} parent=0 // pred_check_branch
    %13 = sbr.rel (0) target = $region13
  $region12: #{net_forward.4} parent=0 // pred_region
    _
  $region13: #{net_forward.4} parent=0 // pred_fallthru
    _
  %v15 = vld [vmem:[%s1] sm:$0xf]
  %v16 = vld [vmem:[%s1 + $0x4] sm:$0xf]
  %v17 = vld [vmem:[%s1 + $0x8] sm:$0xf]
  %v18 = vld [vmem:[%s1 + $0xc] sm:$0xf]
  %v19 = vld [vmem:[%s1 + $0x10] sm:$0xf]
  %v20 = vld [vmem:[%s1 + $0x14] sm:$0xf]
  %v21 = vld [vmem:[%s1 + $0x18] sm:$0xf]
  %v22 = vld [vmem:[%s1 + $0x1c] sm:$0xf]
  %v23 = vld [vmem:[%s1 + $0x20] sm:$0xf]
  %v24 = vld [vmem:[%s1 + $0x24] sm:$0xf]
  %v25 = vld [vmem:[%s1 + $0x28] sm:$0xf]
  %v26 = vld [vmem:[%s1 + $0x2c] sm:$0xf]
  %v27 = vld [vmem:[%s1 + $0x30] sm:$0xf]
  %v28 = vld [vmem:[%s1 + $0x34] sm:$0xf]
  %v29 = vld [vmem:[%s1 + $0x38] sm:$0xf]
  %v30 = vld [vmem:[%s1 + $0x3c] sm:$0xf]
  %v31 = vld [vmem:[%s1 + $0x40] sm:$0xf]
  %v32 = vld [vmem:[%s1 + $0x44] sm:$0xf]
  %v33 = vld [vmem:[%s1 + $0x48] sm:$0xf]
  %v34 = vld [vmem:[%s1 + $0x4c] sm:$0xf]
  %v35 = vld [vmem:[%s1 + $0x50] sm:$0xf]
  %v36 = vld [vmem:[%s1 + $0x54] sm:$0xf]
  %v37 = vld [vmem:[%s1 + $0x58] sm:$0xf]
  %v38 = vld [vmem:[%s1 + $0x5c] sm:$0xf]
  %v39 = vld [vmem:[%s1 + $0x60] sm:$0xf]
  %v40 = vld [vmem:[%s1 + $0x64] sm:$0xf]
  %v41 = vld [vmem:[%s1 + $0x68] sm:$0xf]
  %v42 = vld [vmem:[%s1 + $0x6c] sm:$0xf]
  %v43 = vld [vmem:[%s1 + $0x70] sm:$0xf]
  %v44 = vld [vmem:[%s1 + $0x74] sm:$0xf]
  %v45 = vld [vmem:[%s1 + $0x78] sm:$0xf]
  %v46 = vld [vmem:[%s1 + $0x7c] sm:$0xf]
  %v47 = vld [vmem:[%s1 + $0x80] sm:$0xf]
  %v48 = vld [vmem:[%s1 + $0x84] sm:$0xf]
  %v49 = vld [vmem:[%s1 + $0x88] sm:$0xf]
  %v50 = vld [vmem:[%s1 + $0x8c] sm:$0xf]
  %v51 = vld [vmem:[%s1 + $0x90] sm:$0xf]
  %v52 = vld [vmem:[%s1 + $0x94] sm:$0xf]
  %v53 = vld [vmem:[%s1 + $0x98] sm:$0xf]
  %v54 = vld [vmem:[%s1 + $0x9c] sm:$0xf]
  %v55 = vld [vmem:[%s1 + $0xa0] sm:$0xf]
  %v56 = vld [vmem:[%s1 + $0xa4] sm:$0xf]
  %v57 = vld [vmem:[%s1 + $0xa8] sm:$0xf]
  %v58 = vld [vmem:[%s1 + $0xac] sm:$0xf]
  %v59 = vld [vmem:[%s1 + $0xb0] sm:$0xf]
  %v60 = vld [vmem:[%s1 + $0xb4] sm:$0xf]
  %v61 = vld [vmem:[%s1 + $0xb8] sm:$0xf]
  %v62 = vld [vmem:[%s1 + $0xbc] sm:$0xf]
  %v63 = vld [vmem:[%s1 + $0xc0] sm:$0xf]
  %v64 = vld [vmem:[%s1 + $0xc4] sm:$0xf]
  %v65 = vld [vmem:[%s1 + $0xc8] sm:$0xf]
  %v66 = vld [vmem:[%s1 + $0xcc] sm:$0xf]
  %v67 = vld [vmem:[%s1 + $0xd0] sm:$0xf]
  %v68 = vld [vmem:[%s1 + $0xd4] sm:$0xf]
  %v69 = vld [vmem:[%s1 + $0xd8] sm:$0xf]
  %v70 = vld [vmem:[%s1 + $0xdc] sm:$0xf]
  %v71 = vld [vmem:[%s1 + $0xe0] sm:$0xf]
  %v72 = vld [vmem:[%s1 + $0xe4] sm:$0xf]
  %v73 = vld [vmem:[%s1 + $0xe8] sm:$0xf]
  %v74 = vld [vmem:[%s1 + $0xec] sm:$0xf]
  %v75 = vld [vmem:[%s1 + $0xf0] sm:$0xf]
  %v76 = vld [vmem:[%s1 + $0xf4] sm:$0xf]
  %v77 = vld [vmem:[%s1 + $0xf8] sm:$0xf]
  %v78 = vld [vmem:[%s1 + $0xfc] sm:$0xf]
  %v79 = vld [vmem:[%s0] sm:$0xff]
  %v80 = vld [vmem:[%s0 + $0x8] sm:$0xff]
  %v81 = vld [vmem:[%s0 + $0x10] sm:$0xff]
  %v82 = vld [vmem:[%s0 + $0x18] sm:$0xff]
  %v83 = vld [vmem:[%s0 + $0x20] sm:$0xff]
  %v84 = vld [vmem:[%s0 + $0x28] sm:$0xff]
  %v85 = vld [vmem:[%s0 + $0x30] sm:$0xff]
  %v86 = vld [vmem:[%s0 + $0x38] sm:$0xff]
  %v95 = vunpack.c.l.b16 %v79
  %v96 = vunpack.c.h.b16 %v79
  %v97 = vunpack.c.l.b16 %v80
  %v98 = vunpack.c.h.b16 %v80
  %v99 = vunpack.c.l.b16 %v81
  %v100 = vunpack.c.h.b16 %v81
  %v101 = vunpack.c.l.b16 %v82
  %v102 = vunpack.c.h.b16 %v82
  %v103 = vunpack.c.l.b16 %v83
  %v104 = vunpack.c.h.b16 %v83
  %v105 = vunpack.c.l.b16 %v84
  %v106 = vunpack.c.h.b16 %v84
  %v107 = vunpack.c.l.b16 %v85
  %v108 = vunpack.c.h.b16 %v85
  %v109 = vunpack.c.l.b16 %v86
  %v110 = vunpack.c.h.b16 %v86
  %v111 = vpack.c.b16 %v99, %v95
  %v112 = vpack.c.b16 %v100, %v96
  %v113 = vpack.c.b16 %v101, %v97
  %v114 = vpack.c.b16 %v102, %v98
  %v115 = vpack.c.b16 %v107, %v103
  %v116 = vpack.c.b16 %v108, %v104
  %v117 = vpack.c.b16 %v109, %v105
  %v118 = vpack.c.b16 %v110, %v106
  %v191 = vunpack.c.l.b16 %v15
  %v192 = vunpack.c.l.b16 %v16
  %v193 = vunpack.c.l.b16 %v17
  %v194 = vunpack.c.l.b16 %v18
  %v195 = vunpack.c.l.b16 %v19
  %v196 = vunpack.c.l.b16 %v20
  %v197 = vunpack.c.l.b16 %v21
  %v198 = vunpack.c.l.b16 %v22
  %v199 = vunpack.c.l.b16 %v23
  %v200 = vunpack.c.l.b16 %v24
  %v201 = vunpack.c.l.b16 %v25
  %v202 = vunpack.c.l.b16 %v26
  %v203 = vunpack.c.l.b16 %v27
  %v204 = vunpack.c.l.b16 %v28
  %v205 = vunpack.c.l.b16 %v29
  %v206 = vunpack.c.l.b16 %v30
  %v207 = vunpack.c.l.b16 %v31
  %v208 = vunpack.c.l.b16 %v32
  %v209 = vunpack.c.l.b16 %v33
  %v210 = vunpack.c.l.b16 %v34
  %v211 = vunpack.c.l.b16 %v35
  %v212 = vunpack.c.l.b16 %v36
  %v213 = vunpack.c.l.b16 %v37
  %v214 = vunpack.c.l.b16 %v38
  %v215 = vunpack.c.l.b16 %v39
  %v216 = vunpack.c.l.b16 %v40
  %v217 = vunpack.c.l.b16 %v41
  %v218 = vunpack.c.l.b16 %v42
  %v219 = vunpack.c.l.b16 %v43
  %v220 = vunpack.c.l.b16 %v44
  %v221 = vunpack.c.l.b16 %v45
  %v222 = vunpack.c.l.b16 %v46
  %v223 = vunpack.c.l.b16 %v47
  %v224 = vunpack.c.l.b16 %v48
  %v225 = vunpack.c.l.b16 %v49
  %v226 = vunpack.c.l.b16 %v50
  %v227 = vunpack.c.l.b16 %v51
  %v228 = vunpack.c.l.b16 %v52
  %v229 = vunpack.c.l.b16 %v53
  %v230 = vunpack.c.l.b16 %v54
  %v231 = vunpack.c.l.b16 %v55
  %v232 = vunpack.c.l.b16 %v56
  %v233 = vunpack.c.l.b16 %v57
  %v234 = vunpack.c.l.b16 %v58
  %v235 = vunpack.c.l.b16 %v59
  %v236 = vunpack.c.l.b16 %v60
  %v237 = vunpack.c.l.b16 %v61
  %v238 = vunpack.c.l.b16 %v62
  %v239 = vunpack.c.l.b16 %v63
  %v240 = vunpack.c.l.b16 %v64
  %v241 = vunpack.c.l.b16 %v65
  %v242 = vunpack.c.l.b16 %v66
  %v243 = vunpack.c.l.b16 %v67
  %v244 = vunpack.c.l.b16 %v68
  %v245 = vunpack.c.l.b16 %v69
  %v246 = vunpack.c.l.b16 %v70
  %v247 = vunpack.c.l.b16 %v71
  %v248 = vunpack.c.l.b16 %v72
  %v249 = vunpack.c.l.b16 %v73
  %v250 = vunpack.c.l.b16 %v74
  %v251 = vunpack.c.l.b16 %v75
  %v252 = vunpack.c.l.b16 %v76
  %v253 = vunpack.c.l.b16 %v77
  %v254 = vunpack.c.l.b16 %v78
  %v255 = vpack.c.b16 %v192, %v191
  %v256 = vpack.c.b16 %v194, %v193
  %v257 = vpack.c.b16 %v196, %v195
  %v258 = vpack.c.b16 %v198, %v197
  %v259 = vpack.c.b16 %v200, %v199
  %v260 = vpack.c.b16 %v202, %v201
  %v261 = vpack.c.b16 %v204, %v203
  %v262 = vpack.c.b16 %v206, %v205
  %v263 = vpack.c.b16 %v208, %v207
  %v264 = vpack.c.b16 %v210, %v209
  %v265 = vpack.c.b16 %v212, %v211
  %v266 = vpack.c.b16 %v214, %v213
  %v267 = vpack.c.b16 %v216, %v215
  %v268 = vpack.c.b16 %v218, %v217
  %v269 = vpack.c.b16 %v220, %v219
  %v270 = vpack.c.b16 %v222, %v221
  %v271 = vpack.c.b16 %v224, %v223
  %v272 = vpack.c.b16 %v226, %v225
  %v273 = vpack.c.b16 %v228, %v227
  %v274 = vpack.c.b16 %v230, %v229
  %v275 = vpack.c.b16 %v232, %v231
  %v276 = vpack.c.b16 %v234, %v233
  %v277 = vpack.c.b16 %v236, %v235
  %v278 = vpack.c.b16 %v238, %v237
  %v279 = vpack.c.b16 %v240, %v239
  %v280 = vpack.c.b16 %v242, %v241
  %v281 = vpack.c.b16 %v244, %v243
  %v282 = vpack.c.b16 %v246, %v245
  %v283 = vpack.c.b16 %v248, %v247
  %v284 = vpack.c.b16 %v250, %v249
  %v285 = vpack.c.b16 %v252, %v251
  %v286 = vpack.c.b16 %v254, %v253
  %319 = vmatprep.subr.bf16.mxu0 0
  %320 = vmatpush1.bf16.msra.mxu0 %v262
  %321 = vmatprep.subr.bf16.mxu0 0
  %322 = vmatpush1.bf16.msra.mxu0 %v261
  %323 = vmatprep.subr.bf16.mxu0 0
  %324 = vmatpush1.bf16.msra.mxu0 %v260
  %325 = vmatprep.subr.bf16.mxu0 0
  %326 = vmatpush1.bf16.msra.mxu0 %v259
  %327 = vmatprep.subr.bf16.mxu0 0
  %328 = vmatpush1.bf16.msra.mxu0 %v258
  %329 = vmatprep.subr.bf16.mxu0 0
  %330 = vmatpush1.bf16.msra.mxu0 %v257
  %331 = vmatprep.subr.bf16.mxu0 0
  %332 = vmatpush1.bf16.msra.mxu0 %v256
  %333 = vmatprep.subr.bf16.mxu0 0
  %334 = vmatpush1.bf16.msra.mxu0 %v255
  %335 = vmatprep.subr.bf16.mxu0 0
  %336 = vmatpush2.bf16.msra.mxu0 %v270
  %337 = vmatprep.subr.bf16.mxu0 0
  %338 = vmatpush2.bf16.msra.mxu0 %v269
  %339 = vmatprep.subr.bf16.mxu0 0
  %340 = vmatpush2.bf16.msra.mxu0 %v268
  %341 = vmatprep.subr.bf16.mxu0 0
  %342 = vmatpush2.bf16.msra.mxu0 %v267
  %343 = vmatprep.subr.bf16.mxu0 0
  %344 = vmatpush2.bf16.msra.mxu0 %v266
  %345 = vmatprep.subr.bf16.mxu0 0
  %346 = vmatpush2.bf16.msra.mxu0 %v265
  %347 = vmatprep.subr.bf16.mxu0 0
  %348 = vmatpush2.bf16.msra.mxu0 %v264
  %349 = vmatprep.subr.bf16.mxu0 0
  %350 = vmatpush2.bf16.msra.mxu0 %v263
  %351 = vmatprep.mubr.bf16.mxu0 %v112
  %352 = vmatmul.mubr.bf16.gmra.mxu0 %v111
  %v353 = vpop.f32.mrf.mxu0
  %v354 = vadd.f32 0.0, %v353
  %v355 = vpop.f32.mrf.mxu0
  %v356 = vpop.f32.mrf.mxu0
  %v357 = vadd.f32 0.0, %v356
  %v358 = vpop.f32.mrf.mxu0
  %359 = vmatprep.mubr.bf16.mxu0 %v116
  %360 = vmatmul.mubr.bf16.gmra.mxu0 %v115
  %v361 = vpop.f32.mrf.mxu0
  %v362 = vadd.f32 0.0, %v361
  %v363 = vpop.f32.mrf.mxu0
  %v364 = vpop.f32.mrf.mxu0
  %v365 = vadd.f32 0.0, %v364
  %v366 = vpop.f32.mrf.mxu0
  %367 = vdwg.mxu0
  %368 = vmatprep.subr.bf16.mxu0 0
  %369 = vmatpush1.bf16.msra.mxu0 %v278
  %370 = vmatprep.subr.bf16.mxu0 0
  %371 = vmatpush1.bf16.msra.mxu0 %v277
  %372 = vmatprep.subr.bf16.mxu0 0
  %373 = vmatpush1.bf16.msra.mxu0 %v276
  %374 = vmatprep.subr.bf16.mxu0 0
  %375 = vmatpush1.bf16.msra.mxu0 %v275
  %376 = vmatprep.subr.bf16.mxu0 0
  %377 = vmatpush1.bf16.msra.mxu0 %v274
  %378 = vmatprep.subr.bf16.mxu0 0
  %379 = vmatpush1.bf16.msra.mxu0 %v273
  %380 = vmatprep.subr.bf16.mxu0 0
  %381 = vmatpush1.bf16.msra.mxu0 %v272
  %382 = vmatprep.subr.bf16.mxu0 0
  %383 = vmatpush1.bf16.msra.mxu0 %v271
  %384 = vmatprep.subr.bf16.mxu0 0
  %385 = vmatpush2.bf16.msra.mxu0 %v286
  %386 = vmatprep.subr.bf16.mxu0 0
  %387 = vmatpush2.bf16.msra.mxu0 %v285
  %388 = vmatprep.subr.bf16.mxu0 0
  %389 = vmatpush2.bf16.msra.mxu0 %v284
  %390 = vmatprep.subr.bf16.mxu0 0
  %391 = vmatpush2.bf16.msra.mxu0 %v283
  %392 = vmatprep.subr.bf16.mxu0 0
  %393 = vmatpush2.bf16.msra.mxu0 %v282
  %394 = vmatprep.subr.bf16.mxu0 0
  %395 = vmatpush2.bf16.msra.mxu0 %v281
  %396 = vmatprep.subr.bf16.mxu0 0
  %397 = vmatpush2.bf16.msra.mxu0 %v280
  %398 = vmatprep.subr.bf16.mxu0 0
  %399 = vmatpush2.bf16.msra.mxu0 %v279
  %400 = vmatprep.mubr.bf16.mxu0 %v114
  %401 = vmatmul.mubr.bf16.gmra.mxu0 %v113
  %v402 = vpop.f32.mrf.mxu0
  %v403 = vadd.f32 %v354, %v402
  %v404 = vpop.f32.mrf.mxu0
  %v405 = vpop.f32.mrf.mxu0
  %v406 = vadd.f32 %v357, %v405
  %v407 = vpop.f32.mrf.mxu0
  %408 = vmatprep.mubr.bf16.mxu0 %v118
  %409 = vmatmul.mubr.bf16.gmra.mxu0 %v117
  %v410 = vpop.f32.mrf.mxu0
  %v411 = vadd.f32 %v362, %v410
  %v412 = vpop.f32.mrf.mxu0
  %v413 = vpop.f32.mrf.mxu0
  %v414 = vadd.f32 %v365, %v413
  %v415 = vpop.f32.mrf.mxu0
  %416 = vdwg.mxu0
  %s417 = scalar_lea.vmem %s0, 64
  %v418 = vld [vmem:[%s417] sm:$0xff]
  %v419 = vld [vmem:[%s417 + $0x8] sm:$0xff]
  %v420 = vld [vmem:[%s417 + $0x10] sm:$0xff]
  %v421 = vld [vmem:[%s417 + $0x18] sm:$0xff]
  %v422 = vld [vmem:[%s417 + $0x20] sm:$0xff]
  %v423 = vld [vmem:[%s417 + $0x28] sm:$0xff]
  %v424 = vld [vmem:[%s417 + $0x30] sm:$0xff]
  %v425 = vld [vmem:[%s417 + $0x38] sm:$0xff]
  %v434 = vunpack.c.l.b16 %v418
  %v435 = vunpack.c.h.b16 %v418
  %v436 = vunpack.c.l.b16 %v419
  %v437 = vunpack.c.h.b16 %v419
  %v438 = vunpack.c.l.b16 %v420
  %v439 = vunpack.c.h.b16 %v420
  %v440 = vunpack.c.l.b16 %v421
  %v441 = vunpack.c.h.b16 %v421
  %v442 = vunpack.c.l.b16 %v422
  %v443 = vunpack.c.h.b16 %v422
  %v444 = vunpack.c.l.b16 %v423
  %v445 = vunpack.c.h.b16 %v423
  %v446 = vunpack.c.l.b16 %v424
  %v447 = vunpack.c.h.b16 %v424
  %v448 = vunpack.c.l.b16 %v425
  %v449 = vunpack.c.h.b16 %v425
  %v450 = vpack.c.b16 %v438, %v434
  %v451 = vpack.c.b16 %v439, %v435
  %v452 = vpack.c.b16 %v440, %v436
  %v453 = vpack.c.b16 %v441, %v437
  %v454 = vpack.c.b16 %v446, %v442
  %v455 = vpack.c.b16 %v447, %v443
  %v456 = vpack.c.b16 %v448, %v444
  %v457 = vpack.c.b16 %v449, %v445
  %466 = vmatprep.subr.bf16.mxu0 0
  %467 = vmatpush1.bf16.msra.mxu0 %v262
  %468 = vmatprep.subr.bf16.mxu0 0
  %469 = vmatpush1.bf16.msra.mxu0 %v261
  %470 = vmatprep.subr.bf16.mxu0 0
  %471 = vmatpush1.bf16.msra.mxu0 %v260
  %472 = vmatprep.subr.bf16.mxu0 0
  %473 = vmatpush1.bf16.msra.mxu0 %v259
  %474 = vmatprep.subr.bf16.mxu0 0
  %475 = vmatpush1.bf16.msra.mxu0 %v258
  %476 = vmatprep.subr.bf16.mxu0 0
  %477 = vmatpush1.bf16.msra.mxu0 %v257
  %478 = vmatprep.subr.bf16.mxu0 0
  %479 = vmatpush1.bf16.msra.mxu0 %v256
  %480 = vmatprep.subr.bf16.mxu0 0
  %481 = vmatpush1.bf16.msra.mxu0 %v255
  %482 = vmatprep.subr.bf16.mxu0 0
  %483 = vmatpush2.bf16.msra.mxu0 %v270
  %484 = vmatprep.subr.bf16.mxu0 0
  %485 = vmatpush2.bf16.msra.mxu0 %v269
  %486 = vmatprep.subr.bf16.mxu0 0
  %487 = vmatpush2.bf16.msra.mxu0 %v268
  %488 = vmatprep.subr.bf16.mxu0 0
  %489 = vmatpush2.bf16.msra.mxu0 %v267
  %490 = vmatprep.subr.bf16.mxu0 0
  %491 = vmatpush2.bf16.msra.mxu0 %v266
  %492 = vmatprep.subr.bf16.mxu0 0
  %493 = vmatpush2.bf16.msra.mxu0 %v265
  %494 = vmatprep.subr.bf16.mxu0 0
  %495 = vmatpush2.bf16.msra.mxu0 %v264
  %496 = vmatprep.subr.bf16.mxu0 0
  %497 = vmatpush2.bf16.msra.mxu0 %v263
  %498 = vmatprep.mubr.bf16.mxu0 %v451
  %499 = vmatmul.mubr.bf16.gmra.mxu0 %v450
  %v500 = vpop.f32.mrf.mxu0
  %v501 = vadd.f32 0.0, %v500
  %v502 = vpop.f32.mrf.mxu0
  %v503 = vpop.f32.mrf.mxu0
  %v504 = vadd.f32 0.0, %v503
  %v505 = vpop.f32.mrf.mxu0
  %506 = vmatprep.mubr.bf16.mxu0 %v455
  %507 = vmatmul.mubr.bf16.gmra.mxu0 %v454
  %v508 = vpop.f32.mrf.mxu0
  %v509 = vadd.f32 0.0, %v508
  %v510 = vpop.f32.mrf.mxu0
  %v511 = vpop.f32.mrf.mxu0
  %v512 = vadd.f32 0.0, %v511
  %v513 = vpop.f32.mrf.mxu0
  %514 = vdwg.mxu0
  %515 = vmatprep.subr.bf16.mxu0 0
  %516 = vmatpush1.bf16.msra.mxu0 %v278
  %517 = vmatprep.subr.bf16.mxu0 0
  %518 = vmatpush1.bf16.msra.mxu0 %v277
  %519 = vmatprep.subr.bf16.mxu0 0
  %520 = vmatpush1.bf16.msra.mxu0 %v276
  %521 = vmatprep.subr.bf16.mxu0 0
  %522 = vmatpush1.bf16.msra.mxu0 %v275
  %523 = vmatprep.subr.bf16.mxu0 0
  %524 = vmatpush1.bf16.msra.mxu0 %v274
  %525 = vmatprep.subr.bf16.mxu0 0
  %526 = vmatpush1.bf16.msra.mxu0 %v273
  %527 = vmatprep.subr.bf16.mxu0 0
  %528 = vmatpush1.bf16.msra.mxu0 %v272
  %529 = vmatprep.subr.bf16.mxu0 0
  %530 = vmatpush1.bf16.msra.mxu0 %v271
  %531 = vmatprep.subr.bf16.mxu0 0
  %532 = vmatpush2.bf16.msra.mxu0 %v286
  %533 = vmatprep.subr.bf16.mxu0 0
  %534 = vmatpush2.bf16.msra.mxu0 %v285
  %535 = vmatprep.subr.bf16.mxu0 0
  %536 = vmatpush2.bf16.msra.mxu0 %v284
  %537 = vmatprep.subr.bf16.mxu0 0
  %538 = vmatpush2.bf16.msra.mxu0 %v283
  %539 = vmatprep.subr.bf16.mxu0 0
  %540 = vmatpush2.bf16.msra.mxu0 %v282
  %541 = vmatprep.subr.bf16.mxu0 0
  %542 = vmatpush2.bf16.msra.mxu0 %v281
  %543 = vmatprep.subr.bf16.mxu0 0
  %544 = vmatpush2.bf16.msra.mxu0 %v280
  %545 = vmatprep.subr.bf16.mxu0 0
  %546 = vmatpush2.bf16.msra.mxu0 %v279
  %547 = vmatprep.mubr.bf16.mxu0 %v453
  %548 = vmatmul.mubr.bf16.gmra.mxu0 %v452
  %v549 = vpop.f32.mrf.mxu0
  %v550 = vadd.f32 %v501, %v549
  %v551 = vpop.f32.mrf.mxu0
  %v552 = vpop.f32.mrf.mxu0
  %v553 = vadd.f32 %v504, %v552
  %v554 = vpop.f32.mrf.mxu0
  %555 = vmatprep.mubr.bf16.mxu0 %v457
  %556 = vmatmul.mubr.bf16.gmra.mxu0 %v456
  %v557 = vpop.f32.mrf.mxu0
  %v558 = vadd.f32 %v509, %v557
  %v559 = vpop.f32.mrf.mxu0
  %v560 = vpop.f32.mrf.mxu0
  %v561 = vadd.f32 %v512, %v560
  %v562 = vpop.f32.mrf.mxu0
  %563 = vdwg.mxu0
  %s564 = scalar_lea.vmem %s0, 128
  %v565 = vld [vmem:[%s564] sm:$0xff]
  %v566 = vld [vmem:[%s564 + $0x8] sm:$0xff]
  %v567 = vld [vmem:[%s564 + $0x10] sm:$0xff]
  %v568 = vld [vmem:[%s564 + $0x18] sm:$0xff]
  %v569 = vld [vmem:[%s564 + $0x20] sm:$0xff]
  %v570 = vld [vmem:[%s564 + $0x28] sm:$0xff]
  %v571 = vld [vmem:[%s564 + $0x30] sm:$0xff]
  %v572 = vld [vmem:[%s564 + $0x38] sm:$0xff]
  %v581 = vunpack.c.l.b16 %v565
  %v582 = vunpack.c.h.b16 %v565
  %v583 = vunpack.c.l.b16 %v566
  %v584 = vunpack.c.h.b16 %v566
  %v585 = vunpack.c.l.b16 %v567
  %v586 = vunpack.c.h.b16 %v567
  %v587 = vunpack.c.l.b16 %v568
  %v588 = vunpack.c.h.b16 %v568
  %v589 = vunpack.c.l.b16 %v569
  %v590 = vunpack.c.h.b16 %v569
  %v591 = vunpack.c.l.b16 %v570
  %v592 = vunpack.c.h.b16 %v570
  %v593 = vunpack.c.l.b16 %v571
  %v594 = vunpack.c.h.b16 %v571
  %v595 = vunpack.c.l.b16 %v572
  %v596 = vunpack.c.h.b16 %v572
  %v597 = vpack.c.b16 %v585, %v581
  %v598 = vpack.c.b16 %v586, %v582
  %v599 = vpack.c.b16 %v587, %v583
  %v600 = vpack.c.b16 %v588, %v584
  %v601 = vpack.c.b16 %v593, %v589
  %v602 = vpack.c.b16 %v594, %v590
  %v603 = vpack.c.b16 %v595, %v591
  %v604 = vpack.c.b16 %v596, %v592
  %613 = vmatprep.subr.bf16.mxu0 0
  %614 = vmatpush1.bf16.msra.mxu0 %v262
  %615 = vmatprep.subr.bf16.mxu0 0
  %616 = vmatpush1.bf16.msra.mxu0 %v261
  %617 = vmatprep.subr.bf16.mxu0 0
  %618 = vmatpush1.bf16.msra.mxu0 %v260
  %619 = vmatprep.subr.bf16.mxu0 0
  %620 = vmatpush1.bf16.msra.mxu0 %v259
  %621 = vmatprep.subr.bf16.mxu0 0
  %622 = vmatpush1.bf16.msra.mxu0 %v258
  %623 = vmatprep.subr.bf16.mxu0 0
  %624 = vmatpush1.bf16.msra.mxu0 %v257
  %625 = vmatprep.subr.bf16.mxu0 0
  %626 = vmatpush1.bf16.msra.mxu0 %v256
  %627 = vmatprep.subr.bf16.mxu0 0
  %628 = vmatpush1.bf16.msra.mxu0 %v255
  %629 = vmatprep.subr.bf16.mxu0 0
  %630 = vmatpush2.bf16.msra.mxu0 %v270
  %631 = vmatprep.subr.bf16.mxu0 0
  %632 = vmatpush2.bf16.msra.mxu0 %v269
  %633 = vmatprep.subr.bf16.mxu0 0
  %634 = vmatpush2.bf16.msra.mxu0 %v268
  %635 = vmatprep.subr.bf16.mxu0 0
  %636 = vmatpush2.bf16.msra.mxu0 %v267
  %637 = vmatprep.subr.bf16.mxu0 0
  %638 = vmatpush2.bf16.msra.mxu0 %v266
  %639 = vmatprep.subr.bf16.mxu0 0
  %640 = vmatpush2.bf16.msra.mxu0 %v265
  %641 = vmatprep.subr.bf16.mxu0 0
  %642 = vmatpush2.bf16.msra.mxu0 %v264
  %643 = vmatprep.subr.bf16.mxu0 0
  %644 = vmatpush2.bf16.msra.mxu0 %v263
  %645 = vmatprep.mubr.bf16.mxu0 %v598
  %646 = vmatmul.mubr.bf16.gmra.mxu0 %v597
  %v647 = vpop.f32.mrf.mxu0
  %v648 = vadd.f32 0.0, %v647
  %v649 = vpop.f32.mrf.mxu0
  %v650 = vpop.f32.mrf.mxu0
  %v651 = vadd.f32 0.0, %v650
  %v652 = vpop.f32.mrf.mxu0
  %653 = vmatprep.mubr.bf16.mxu0 %v602
  %654 = vmatmul.mubr.bf16.gmra.mxu0 %v601
  %v655 = vpop.f32.mrf.mxu0
  %v656 = vadd.f32 0.0, %v655
  %v657 = vpop.f32.mrf.mxu0
  %v658 = vpop.f32.mrf.mxu0
  %v659 = vadd.f32 0.0, %v658
  %v660 = vpop.f32.mrf.mxu0
  %661 = vdwg.mxu0
  %662 = vmatprep.subr.bf16.mxu0 0
  %663 = vmatpush1.bf16.msra.mxu0 %v278
  %664 = vmatprep.subr.bf16.mxu0 0
  %665 = vmatpush1.bf16.msra.mxu0 %v277
  %666 = vmatprep.subr.bf16.mxu0 0
  %667 = vmatpush1.bf16.msra.mxu0 %v276
  %668 = vmatprep.subr.bf16.mxu0 0
  %669 = vmatpush1.bf16.msra.mxu0 %v275
  %670 = vmatprep.subr.bf16.mxu0 0
  %671 = vmatpush1.bf16.msra.mxu0 %v274
  %672 = vmatprep.subr.bf16.mxu0 0
  %673 = vmatpush1.bf16.msra.mxu0 %v273
  %674 = vmatprep.subr.bf16.mxu0 0
  %675 = vmatpush1.bf16.msra.mxu0 %v272
  %676 = vmatprep.subr.bf16.mxu0 0
  %677 = vmatpush1.bf16.msra.mxu0 %v271
  %678 = vmatprep.subr.bf16.mxu0 0
  %679 = vmatpush2.bf16.msra.mxu0 %v286
  %680 = vmatprep.subr.bf16.mxu0 0
  %681 = vmatpush2.bf16.msra.mxu0 %v285
  %682 = vmatprep.subr.bf16.mxu0 0
  %683 = vmatpush2.bf16.msra.mxu0 %v284
  %684 = vmatprep.subr.bf16.mxu0 0
  %685 = vmatpush2.bf16.msra.mxu0 %v283
  %686 = vmatprep.subr.bf16.mxu0 0
  %687 = vmatpush2.bf16.msra.mxu0 %v282
  %688 = vmatprep.subr.bf16.mxu0 0
  %689 = vmatpush2.bf16.msra.mxu0 %v281
  %690 = vmatprep.subr.bf16.mxu0 0
  %691 = vmatpush2.bf16.msra.mxu0 %v280
  %692 = vmatprep.subr.bf16.mxu0 0
  %693 = vmatpush2.bf16.msra.mxu0 %v279
  %694 = vmatprep.mubr.bf16.mxu0 %v600
  %695 = vmatmul.mubr.bf16.gmra.mxu0 %v599
  %v696 = vpop.f32.mrf.mxu0
  %v697 = vadd.f32 %v648, %v696
  %v698 = vpop.f32.mrf.mxu0
  %v699 = vpop.f32.mrf.mxu0
  %v700 = vadd.f32 %v651, %v699
  %v701 = vpop.f32.mrf.mxu0
  %702 = vmatprep.mubr.bf16.mxu0 %v604
  %703 = vmatmul.mubr.bf16.gmra.mxu0 %v603
  %v704 = vpop.f32.mrf.mxu0
  %v705 = vadd.f32 %v656, %v704
  %v706 = vpop.f32.mrf.mxu0
  %v707 = vpop.f32.mrf.mxu0
  %v708 = vadd.f32 %v659, %v707
  %v709 = vpop.f32.mrf.mxu0
  %710 = vdwg.mxu0
  %s711 = scalar_lea.vmem %s0, 192
  %v712 = vld [vmem:[%s711] sm:$0xff]
  %v713 = vld [vmem:[%s711 + $0x8] sm:$0xff]
  %v714 = vld [vmem:[%s711 + $0x10] sm:$0xff]
  %v715 = vld [vmem:[%s711 + $0x18] sm:$0xff]
  %v716 = vld [vmem:[%s711 + $0x20] sm:$0xff]
  %v717 = vld [vmem:[%s711 + $0x28] sm:$0xff]
  %v718 = vld [vmem:[%s711 + $0x30] sm:$0xff]
  %v719 = vld [vmem:[%s711 + $0x38] sm:$0xff]
  %v728 = vunpack.c.l.b16 %v712
  %v729 = vunpack.c.h.b16 %v712
  %v730 = vunpack.c.l.b16 %v713
  %v731 = vunpack.c.h.b16 %v713
  %v732 = vunpack.c.l.b16 %v714
  %v733 = vunpack.c.h.b16 %v714
  %v734 = vunpack.c.l.b16 %v715
  %v735 = vunpack.c.h.b16 %v715
  %v736 = vunpack.c.l.b16 %v716
  %v737 = vunpack.c.h.b16 %v716
  %v738 = vunpack.c.l.b16 %v717
  %v739 = vunpack.c.h.b16 %v717
  %v740 = vunpack.c.l.b16 %v718
  %v741 = vunpack.c.h.b16 %v718
  %v742 = vunpack.c.l.b16 %v719
  %v743 = vunpack.c.h.b16 %v719
  %v744 = vpack.c.b16 %v732, %v728
  %v745 = vpack.c.b16 %v733, %v729
  %v746 = vpack.c.b16 %v734, %v730
  %v747 = vpack.c.b16 %v735, %v731
  %v748 = vpack.c.b16 %v740, %v736
  %v749 = vpack.c.b16 %v741, %v737
  %v750 = vpack.c.b16 %v742, %v738
  %v751 = vpack.c.b16 %v743, %v739
  %760 = vmatprep.subr.bf16.mxu0 0
  %761 = vmatpush1.bf16.msra.mxu0 %v262
  %762 = vmatprep.subr.bf16.mxu0 0
  %763 = vmatpush1.bf16.msra.mxu0 %v261
  %764 = vmatprep.subr.bf16.mxu0 0
  %765 = vmatpush1.bf16.msra.mxu0 %v260
  %766 = vmatprep.subr.bf16.mxu0 0
  %767 = vmatpush1.bf16.msra.mxu0 %v259
  %768 = vmatprep.subr.bf16.mxu0 0
  %769 = vmatpush1.bf16.msra.mxu0 %v258
  %770 = vmatprep.subr.bf16.mxu0 0
  %771 = vmatpush1.bf16.msra.mxu0 %v257
  %772 = vmatprep.subr.bf16.mxu0 0
  %773 = vmatpush1.bf16.msra.mxu0 %v256
  %774 = vmatprep.subr.bf16.mxu0 0
  %775 = vmatpush1.bf16.msra.mxu0 %v255
  %776 = vmatprep.subr.bf16.mxu0 0
  %777 = vmatpush2.bf16.msra.mxu0 %v270
  %778 = vmatprep.subr.bf16.mxu0 0
  %779 = vmatpush2.bf16.msra.mxu0 %v269
  %780 = vmatprep.subr.bf16.mxu0 0
  %781 = vmatpush2.bf16.msra.mxu0 %v268
  %782 = vmatprep.subr.bf16.mxu0 0
  %783 = vmatpush2.bf16.msra.mxu0 %v267
  %784 = vmatprep.subr.bf16.mxu0 0
  %785 = vmatpush2.bf16.msra.mxu0 %v266
  %786 = vmatprep.subr.bf16.mxu0 0
  %787 = vmatpush2.bf16.msra.mxu0 %v265
  %788 = vmatprep.subr.bf16.mxu0 0
  %789 = vmatpush2.bf16.msra.mxu0 %v264
  %790 = vmatprep.subr.bf16.mxu0 0
  %791 = vmatpush2.bf16.msra.mxu0 %v263
  %792 = vmatprep.mubr.bf16.mxu0 %v745
  %793 = vmatmul.mubr.bf16.gmra.mxu0 %v744
  %v794 = vpop.f32.mrf.mxu0
  %v795 = vadd.f32 0.0, %v794
  %v796 = vpop.f32.mrf.mxu0
  %v797 = vpop.f32.mrf.mxu0
  %v798 = vadd.f32 0.0, %v797
  %v799 = vpop.f32.mrf.mxu0
  %800 = vmatprep.mubr.bf16.mxu0 %v749
  %801 = vmatmul.mubr.bf16.gmra.mxu0 %v748
  %v802 = vpop.f32.mrf.mxu0
  %v803 = vadd.f32 0.0, %v802
  %v804 = vpop.f32.mrf.mxu0
  %v805 = vpop.f32.mrf.mxu0
  %v806 = vadd.f32 0.0, %v805
  %v807 = vpop.f32.mrf.mxu0
  %808 = vdwg.mxu0
  %809 = vmatprep.subr.bf16.mxu0 0
  %810 = vmatpush1.bf16.msra.mxu0 %v278
  %811 = vmatprep.subr.bf16.mxu0 0
  %812 = vmatpush1.bf16.msra.mxu0 %v277
  %813 = vmatprep.subr.bf16.mxu0 0
  %814 = vmatpush1.bf16.msra.mxu0 %v276
  %815 = vmatprep.subr.bf16.mxu0 0
  %816 = vmatpush1.bf16.msra.mxu0 %v275
  %817 = vmatprep.subr.bf16.mxu0 0
  %818 = vmatpush1.bf16.msra.mxu0 %v274
  %819 = vmatprep.subr.bf16.mxu0 0
  %820 = vmatpush1.bf16.msra.mxu0 %v273
  %821 = vmatprep.subr.bf16.mxu0 0
  %822 = vmatpush1.bf16.msra.mxu0 %v272
  %823 = vmatprep.subr.bf16.mxu0 0
  %824 = vmatpush1.bf16.msra.mxu0 %v271
  %825 = vmatprep.subr.bf16.mxu0 0
  %826 = vmatpush2.bf16.msra.mxu0 %v286
  %827 = vmatprep.subr.bf16.mxu0 0
  %828 = vmatpush2.bf16.msra.mxu0 %v285
  %829 = vmatprep.subr.bf16.mxu0 0
  %830 = vmatpush2.bf16.msra.mxu0 %v284
  %831 = vmatprep.subr.bf16.mxu0 0
  %832 = vmatpush2.bf16.msra.mxu0 %v283
  %833 = vmatprep.subr.bf16.mxu0 0
  %834 = vmatpush2.bf16.msra.mxu0 %v282
  %835 = vmatprep.subr.bf16.mxu0 0
  %836 = vmatpush2.bf16.msra.mxu0 %v281
  %837 = vmatprep.subr.bf16.mxu0 0
  %838 = vmatpush2.bf16.msra.mxu0 %v280
  %839 = vmatprep.subr.bf16.mxu0 0
  %840 = vmatpush2.bf16.msra.mxu0 %v279
  %841 = vmatprep.mubr.bf16.mxu0 %v747
  %842 = vmatmul.mubr.bf16.gmra.mxu0 %v746
  %v843 = vpop.f32.mrf.mxu0
  %v844 = vadd.f32 %v795, %v843
  %v845 = vpop.f32.mrf.mxu0
  %v846 = vpop.f32.mrf.mxu0
  %v847 = vadd.f32 %v798, %v846
  %v848 = vpop.f32.mrf.mxu0
  %849 = vmatprep.mubr.bf16.mxu0 %v751
  %850 = vmatmul.mubr.bf16.gmra.mxu0 %v750
  %v851 = vpop.f32.mrf.mxu0
  %v852 = vadd.f32 %v803, %v851
  %v853 = vpop.f32.mrf.mxu0
  %v854 = vpop.f32.mrf.mxu0
  %v855 = vadd.f32 %v806, %v854
  %v856 = vpop.f32.mrf.mxu0
  %857 = vdwg.mxu0
  %v858 = vmax.f32 %v403, %v550
  %v859 = vmax.f32 %v406, %v553
  %v860 = vmax.f32 %v411, %v558
  %v861 = vmax.f32 %v414, %v561
  %v862 = vmax.f32 %v697, %v844
  %v863 = vmax.f32 %v700, %v847
  %v864 = vmax.f32 %v705, %v852
  %v865 = vmax.f32 %v708, %v855
  %v866 = vmax.f32 %v858, %v862
  %v867 = vmax.f32 %v859, %v863
  %v868 = vmax.f32 %v860, %v864
  %v869 = vmax.f32 %v861, %v865
  %v870 = vld [vmem:[%s2] sm:$0x1]
  %v872 = vlaneseq
  %v873 = vshrl.u32 %v872, 7
  %v874 = vsub.s32 0, %v873
  %v875 = vrot.slane %v870, %v874
  %v877 = vadd.f32 %v866, %v875
  %v878 = vadd.f32 %v867, %v875
  %v879 = vadd.f32 %v868, %v875
  %v880 = vadd.f32 %v869, %v875
  %v881 = vmax.f32 %v877, 0.0
  %v882 = vmax.f32 %v878, 0.0
  %v883 = vmax.f32 %v879, 0.0
  %v884 = vmax.f32 %v880, 0.0
  %v885 = vpack.c.bf16 %v882, %v881
  %v886 = vpack.c.bf16 %v884, %v883
  %v889 = vunpack.c.l.b16 %v885
  %v890 = vunpack.c.h.b16 %v885
  %v891 = vunpack.c.l.b16 %v886
  %v892 = vunpack.c.h.b16 %v886
  %v893 = vpack.c.b16 %v889, %v889
  %v894 = vpack.c.b16 %v890, %v890
  %v895 = vpack.c.b16 %v891, %v891
  %v896 = vpack.c.b16 %v892, %v892
  %vm901 = vcmask 404480
  %902 = vst.msk [vmem:[%s3] sm:$0xf] %vm901, %v893
  %903 = vst.msk [vmem:[%s3 + $0x4] sm:$0xf] %vm901, %v894
  %904 = vst.msk [vmem:[%s3 + $0x8] sm:$0xf] %vm901, %v895
  %905 = vst.msk [vmem:[%s3 + $0xc] sm:$0xf] %vm901, %v896
  // Predicated region
  $region14: #{net_forward.4} parent=0 // pred_check
    _
  $region15: #{net_forward.4} parent=0 // pred_check_branch
    %907 = sbr.rel (0) target = $region17
  $region16: #{net_forward.4} parent=0 // pred_region
    _
  $region17: #{net_forward.4} parent=0 // pred_fallthru
    _
  // Predicated region
  $region18: #{net_forward.4} parent=0 // pred_check
    _
  $region19: #{net_forward.4} parent=0 // pred_check_branch
    %909 = sbr.rel (0) target = $region21
  $region20: #{net_forward.4} parent=0 // pred_region
    _
  $region21: #{net_forward.4} parent=0 // pred_fallthru
    _

// kernel: net_forward.5
$region0: #{net_forward.5}
  #allocation0 [shape = 'u32[]', space=smem, size = 0x4, offset = 0x4, fixed_abs, tag = 'smem constant byte address 0x4 - core index']
  #allocation1 [shape = 'u32[144,128]{1,0:T(1,128)}', space=vmem, size = 0x12000, scoped, tag = 'internal scratch']
  %s0 = inlined_call_operand.vmem [shape: bf16[16,800], index: 0, kind: input, shape index: {}]
  %s1 = inlined_call_operand.vmem [shape: bf16[800,512], index: 1, kind: input, shape index: {}]
  %s2 = inlined_call_operand.vmem [shape: f32[1,512], index: 2, kind: input, shape index: {}]
  %s3 = inlined_call_operand.vmem [shape: bf16[512,128], index: 3, kind: input, shape index: {}]
  %s4 = inlined_call_operand.vmem [shape: f32[1,128], index: 4, kind: input, shape index: {}]
  %s5 = inlined_call_operand.vmem [shape: f32[16,128], index: 5, kind: output, shape index: {}]
  %s6 = sld [smem:[#allocation0]]
  $region30: #{net_forward.5} parent=0
    _
  %s8 = ssub.s32 1, %s6
  %s9 = scalar_select 0, %s8, %s6
  // Predicated region
  $region2: #{net_forward.5} parent=0 // pred_check
    _
  $region3: #{net_forward.5} parent=0 // pred_check_branch
    %11 = sbr.rel (0) target = $region5
  $region4: #{net_forward.5} parent=0 // pred_region
    _
  $region5: #{net_forward.5} parent=0 // pred_fallthru
    _
  // Predicated region
  $region6: #{net_forward.5} parent=0 // pred_check
    _
  $region7: #{net_forward.5} parent=0 // pred_check_branch
    %13 = sbr.rel (0) target = $region9
  $region8: #{net_forward.5} parent=0 // pred_region
    _
  $region9: #{net_forward.5} parent=0 // pred_fallthru
    _
  // Predicated region
  $region10: #{net_forward.5} parent=0 // pred_check
    _
  $region11: #{net_forward.5} parent=0 // pred_check_branch
    %15 = sbr.rel (0) target = $region13
  $region12: #{net_forward.5} parent=0 // pred_region
    _
  $region13: #{net_forward.5} parent=0 // pred_fallthru
    _
  // Predicated region
  $region14: #{net_forward.5} parent=0 // pred_check
    _
  $region15: #{net_forward.5} parent=0 // pred_check_branch
    %17 = sbr.rel (0) target = $region17
  $region16: #{net_forward.5} parent=0 // pred_region
    _
  $region17: #{net_forward.5} parent=0 // pred_fallthru
    _
  // Predicated region
  $region18: #{net_forward.5} parent=0 // pred_check
    _
  $region19: #{net_forward.5} parent=0 // pred_check_branch
    %19 = sbr.rel (0) target = $region21
  $region20: #{net_forward.5} parent=0 // pred_region
    _
  $region21: #{net_forward.5} parent=0 // pred_fallthru
    _
  %v21 = vld [vmem:[%s0] sm:$0xff]
  %v22 = vld [vmem:[%s0 + $0x8] sm:$0xff]
  %v23 = vld [vmem:[%s0 + $0x10] sm:$0xff]
  %v24 = vld [vmem:[%s0 + $0x18] sm:$0xf]
  %v25 = vld [vmem:[%s0 + $0x1c] sm:$0xff]
  %v26 = vld [vmem:[%s0 + $0x24] sm:$0xff]
  %v27 = vld [vmem:[%s0 + $0x2c] sm:$0xff]
  %v28 = vld [vmem:[%s0 + $0x34] sm:$0xf]
  %v29 = vld [vmem:[%s1] sm:$0xff]
  %v30 = vld [vmem:[%s1 + $0x8] sm:$0xff]
  %v31 = vld [vmem:[%s1 + $0x10] sm:$0xff]
  %v32 = vld [vmem:[%s1 + $0x18] sm:$0xff]
  %v33 = vld [vmem:[%s1 + $0x20] sm:$0xff]
  %v34 = vld [vmem:[%s1 + $0x28] sm:$0xff]
  %v35 = vld [vmem:[%s1 + $0x30] sm:$0xff]
  %v36 = vld [vmem:[%s1 + $0x38] sm:$0xff]
  %v37 = vld [vmem:[%s1 + $0x40] sm:$0xff]
  %v38 = vld [vmem:[%s1 + $0x48] sm:$0xff]
  %v39 = vld [vmem:[%s1 + $0x50] sm:$0xff]
  %v40 = vld [vmem:[%s1 + $0x58] sm:$0xff]
  %v41 = vld [vmem:[%s1 + $0x60] sm:$0xff]
  %v42 = vld [vmem:[%s1 + $0x68] sm:$0xff]
  %v43 = vld [vmem:[%s1 + $0x70] sm:$0xff]
  %v44 = vld [vmem:[%s1 + $0x78] sm:$0xff]
  %v45 = vld [vmem:[%s1 + $0x80] sm:$0xff]
  %v46 = vld [vmem:[%s1 + $0x88] sm:$0xff]
  %v47 = vld [vmem:[%s1 + $0x90] sm:$0xff]
  %v48 = vld [vmem:[%s1 + $0x98] sm:$0xff]
  %v49 = vld [vmem:[%s1 + $0xa0] sm:$0xff]
  %v50 = vld [vmem:[%s1 + $0xa8] sm:$0xff]
  %v51 = vld [vmem:[%s1 + $0xb0] sm:$0xff]
  %v52 = vld [vmem:[%s1 + $0xb8] sm:$0xff]
  %v53 = vld [vmem:[%s1 + $0xc0] sm:$0xff]
  %v54 = vld [vmem:[%s1 + $0xc8] sm:$0xff]
  %v55 = vld [vmem:[%s1 + $0xd0] sm:$0xff]
  %v56 = vld [vmem:[%s1 + $0xd8] sm:$0xff]
  %v57 = vld [vmem:[%s1 + $0xe0] sm:$0xff]
  %v58 = vld [vmem:[%s1 + $0xe8] sm:$0xff]
  %v59 = vld [vmem:[%s1 + $0xf0] sm:$0xff]
  %v60 = vld [vmem:[%s1 + $0xf8] sm:$0xff]
  %v61 = vld [vmem:[%s1 + $0x100] sm:$0xff]
  %v62 = vld [vmem:[%s1 + $0x108] sm:$0xff]
  %v63 = vld [vmem:[%s1 + $0x110] sm:$0xff]
  %v64 = vld [vmem:[%s1 + $0x118] sm:$0xff]
  %v65 = vld [vmem:[%s1 + $0x120] sm:$0xff]
  %v66 = vld [vmem:[%s1 + $0x128] sm:$0xff]
  %v67 = vld [vmem:[%s1 + $0x130] sm:$0xff]
  %v68 = vld [vmem:[%s1 + $0x138] sm:$0xff]
  %v69 = vld [vmem:[%s1 + $0x140] sm:$0xff]
  %v70 = vld [vmem:[%s1 + $0x148] sm:$0xff]
  %v71 = vld [vmem:[%s1 + $0x150] sm:$0xff]
  %v72 = vld [vmem:[%s1 + $0x158] sm:$0xff]
  %v73 = vld [vmem:[%s1 + $0x160] sm:$0xff]
  %v74 = vld [vmem:[%s1 + $0x168] sm:$0xff]
  %v75 = vld [vmem:[%s1 + $0x170] sm:$0xff]
  %v76 = vld [vmem:[%s1 + $0x178] sm:$0xff]
  %v77 = vld [vmem:[%s1 + $0x180] sm:$0xff]
  %v78 = vld [vmem:[%s1 + $0x188] sm:$0xff]
  %v79 = vld [vmem:[%s1 + $0x190] sm:$0xff]
  %v80 = vld [vmem:[%s1 + $0x198] sm:$0xff]
  %v81 = vld [vmem:[%s1 + $0x1a0] sm:$0xff]
  %v82 = vld [vmem:[%s1 + $0x1a8] sm:$0xff]
  %v83 = vld [vmem:[%s1 + $0x1b0] sm:$0xff]
  %v84 = vld [vmem:[%s1 + $0x1b8] sm:$0xff]
  %v85 = vld [vmem:[%s1 + $0x1c0] sm:$0xff]
  %v86 = vld [vmem:[%s1 + $0x1c8] sm:$0xff]
  %v87 = vld [vmem:[%s1 + $0x1d0] sm:$0xff]
  %v88 = vld [vmem:[%s1 + $0x1d8] sm:$0xff]
  %v89 = vld [vmem:[%s1 + $0x1e0] sm:$0xff]
  %v90 = vld [vmem:[%s1 + $0x1e8] sm:$0xff]
  %v91 = vld [vmem:[%s1 + $0x1f0] sm:$0xff]
  %v92 = vld [vmem:[%s1 + $0x1f8] sm:$0xff]
  %v93 = vld [vmem:[%s1 + $0x200] sm:$0xff]
  %v94 = vld [vmem:[%s1 + $0x208] sm:$0xff]
  %v95 = vld [vmem:[%s1 + $0x210] sm:$0xff]
  %v96 = vld [vmem:[%s1 + $0x218] sm:$0xff]
  %v97 = vld [vmem:[%s1 + $0x220] sm:$0xff]
  %v98 = vld [vmem:[%s1 + $0x228] sm:$0xff]
  %v99 = vld [vmem:[%s1 + $0x230] sm:$0xff]
  %v100 = vld [vmem:[%s1 + $0x238] sm:$0xff]
  %v101 = vld [vmem:[%s1 + $0x240] sm:$0xff]
  %v102 = vld [vmem:[%s1 + $0x248] sm:$0xff]
  %v103 = vld [vmem:[%s1 + $0x250] sm:$0xff]
  %v104 = vld [vmem:[%s1 + $0x258] sm:$0xff]
  %v105 = vld [vmem:[%s1 + $0x260] sm:$0xff]
  %v106 = vld [vmem:[%s1 + $0x268] sm:$0xff]
  %v107 = vld [vmem:[%s1 + $0x270] sm:$0xff]
  %v108 = vld [vmem:[%s1 + $0x278] sm:$0xff]
  %v109 = vld [vmem:[%s1 + $0x280] sm:$0xff]
  %v110 = vld [vmem:[%s1 + $0x288] sm:$0xff]
  %v111 = vld [vmem:[%s1 + $0x290] sm:$0xff]
  %v112 = vld [vmem:[%s1 + $0x298] sm:$0xff]
  %v113 = vld [vmem:[%s1 + $0x2a0] sm:$0xff]
  %v114 = vld [vmem:[%s1 + $0x2a8] sm:$0xff]
  %v115 = vld [vmem:[%s1 + $0x2b0] sm:$0xff]
  %v116 = vld [vmem:[%s1 + $0x2b8] sm:$0xff]
  %v117 = vld [vmem:[%s1 + $0x2c0] sm:$0xff]
  %v118 = vld [vmem:[%s1 + $0x2c8] sm:$0xff]
  %v119 = vld [vmem:[%s1 + $0x2d0] sm:$0xff]
  %v120 = vld [vmem:[%s1 + $0x2d8] sm:$0xff]
  %v121 = vld [vmem:[%s1 + $0x2e0] sm:$0xff]
  %v122 = vld [vmem:[%s1 + $0x2e8] sm:$0xff]
  %v123 = vld [vmem:[%s1 + $0x2f0] sm:$0xff]
  %v124 = vld [vmem:[%s1 + $0x2f8] sm:$0xff]
  %v125 = vld [vmem:[%s1 + $0x300] sm:$0xff]
  %v126 = vld [vmem:[%s1 + $0x308] sm:$0xff]
  %v127 = vld [vmem:[%s1 + $0x310] sm:$0xff]
  %v128 = vld [vmem:[%s1 + $0x318] sm:$0xff]
  %v129 = vld [vmem:[%s1 + $0x320] sm:$0xff]
  %v130 = vld [vmem:[%s1 + $0x328] sm:$0xff]
  %v131 = vld [vmem:[%s1 + $0x330] sm:$0xff]
  %v132 = vld [vmem:[%s1 + $0x338] sm:$0xff]
  %v133 = vld [vmem:[%s1 + $0x340] sm:$0xff]
  %v134 = vld [vmem:[%s1 + $0x348] sm:$0xff]
  %v135 = vld [vmem:[%s1 + $0x350] sm:$0xff]
  %v136 = vld [vmem:[%s1 + $0x358] sm:$0xff]
  %v137 = vld [vmem:[%s1 + $0x360] sm:$0xff]
  %v138 = vld [vmem:[%s1 + $0x368] sm:$0xff]
  %v139 = vld [vmem:[%s1 + $0x370] sm:$0xff]
  %v140 = vld [vmem:[%s1 + $0x378] sm:$0xff]
  %v141 = vld [vmem:[%s1 + $0x380] sm:$0xff]
  %v142 = vld [vmem:[%s1 + $0x388] sm:$0xff]
  %v143 = vld [vmem:[%s1 + $0x390] sm:$0xff]
  %v144 = vld [vmem:[%s1 + $0x398] sm:$0xff]
  %v145 = vld [vmem:[%s1 + $0x3a0] sm:$0xff]
  %v146 = vld [vmem:[%s1 + $0x3a8] sm:$0xff]
  %v147 = vld [vmem:[%s1 + $0x3b0] sm:$0xff]
  %v148 = vld [vmem:[%s1 + $0x3b8] sm:$0xff]
  %v149 = vld [vmem:[%s1 + $0x3c0] sm:$0xff]
  %v150 = vld [vmem:[%s1 + $0x3c8] sm:$0xff]
  %v151 = vld [vmem:[%s1 + $0x3d0] sm:$0xff]
  %v152 = vld [vmem:[%s1 + $0x3d8] sm:$0xff]
  %v153 = vld [vmem:[%s1 + $0x3e0] sm:$0xff]
  %v154 = vld [vmem:[%s1 + $0x3e8] sm:$0xff]
  %v155 = vld [vmem:[%s1 + $0x3f0] sm:$0xff]
  %v156 = vld [vmem:[%s1 + $0x3f8] sm:$0xff]
  %v157 = vld [vmem:[%s1 + $0x400] sm:$0xff]
  %v158 = vld [vmem:[%s1 + $0x408] sm:$0xff]
  %v159 = vld [vmem:[%s1 + $0x410] sm:$0xff]
  %v160 = vld [vmem:[%s1 + $0x418] sm:$0xff]
  %v161 = vld [vmem:[%s1 + $0x420] sm:$0xff]
  %v162 = vld [vmem:[%s1 + $0x428] sm:$0xff]
  %v163 = vld [vmem:[%s1 + $0x430] sm:$0xff]
  %v164 = vld [vmem:[%s1 + $0x438] sm:$0xff]
  %v165 = vld [vmem:[%s1 + $0x440] sm:$0xff]
  %v166 = vld [vmem:[%s1 + $0x448] sm:$0xff]
  %v167 = vld [vmem:[%s1 + $0x450] sm:$0xff]
  %v168 = vld [vmem:[%s1 + $0x458] sm:$0xff]
  %v169 = vld [vmem:[%s1 + $0x460] sm:$0xff]
  %v170 = vld [vmem:[%s1 + $0x468] sm:$0xff]
  %v171 = vld [vmem:[%s1 + $0x470] sm:$0xff]
  %v172 = vld [vmem:[%s1 + $0x478] sm:$0xff]
  %v173 = vld [vmem:[%s1 + $0x480] sm:$0xff]
  %v174 = vld [vmem:[%s1 + $0x488] sm:$0xff]
  %v175 = vld [vmem:[%s1 + $0x490] sm:$0xff]
  %v176 = vld [vmem:[%s1 + $0x498] sm:$0xff]
  %v177 = vld [vmem:[%s1 + $0x4a0] sm:$0xff]
  %v178 = vld [vmem:[%s1 + $0x4a8] sm:$0xff]
  %v179 = vld [vmem:[%s1 + $0x4b0] sm:$0xff]
  %v180 = vld [vmem:[%s1 + $0x4b8] sm:$0xff]
  %v181 = vld [vmem:[%s1 + $0x4c0] sm:$0xff]
  %v182 = vld [vmem:[%s1 + $0x4c8] sm:$0xff]
  %v183 = vld [vmem:[%s1 + $0x4d0] sm:$0xff]
  %v184 = vld [vmem:[%s1 + $0x4d8] sm:$0xff]
  %v185 = vld [vmem:[%s1 + $0x4e0] sm:$0xff]
  %v186 = vld [vmem:[%s1 + $0x4e8] sm:$0xff]
  %v187 = vld [vmem:[%s1 + $0x4f0] sm:$0xff]
  %v188 = vld [vmem:[%s1 + $0x4f8] sm:$0xff]
  %v189 = vld [vmem:[%s1 + $0x500] sm:$0xff]
  %v190 = vld [vmem:[%s1 + $0x508] sm:$0xff]
  %v191 = vld [vmem:[%s1 + $0x510] sm:$0xff]
  %v192 = vld [vmem:[%s1 + $0x518] sm:$0xff]
  %v193 = vld [vmem:[%s1 + $0x520] sm:$0xff]
  %v194 = vld [vmem:[%s1 + $0x528] sm:$0xff]
  %v195 = vld [vmem:[%s1 + $0x530] sm:$0xff]
  %v196 = vld [vmem:[%s1 + $0x538] sm:$0xff]
  %v197 = vld [vmem:[%s1 + $0x540] sm:$0xff]
  %v198 = vld [vmem:[%s1 + $0x548] sm:$0xff]
  %v199 = vld [vmem:[%s1 + $0x550] sm:$0xff]
  %v200 = vld [vmem:[%s1 + $0x558] sm:$0xff]
  %v201 = vld [vmem:[%s1 + $0x560] sm:$0xff]
  %v202 = vld [vmem:[%s1 + $0x568] sm:$0xff]
  %v203 = vld [vmem:[%s1 + $0x570] sm:$0xff]
  %v204 = vld [vmem:[%s1 + $0x578] sm:$0xff]
  %v205 = vld [vmem:[%s1 + $0x580] sm:$0xff]
  %v206 = vld [vmem:[%s1 + $0x588] sm:$0xff]
  %v207 = vld [vmem:[%s1 + $0x590] sm:$0xff]
  %v208 = vld [vmem:[%s1 + $0x598] sm:$0xff]
  %v209 = vld [vmem:[%s1 + $0x5a0] sm:$0xff]
  %v210 = vld [vmem:[%s1 + $0x5a8] sm:$0xff]
  %v211 = vld [vmem:[%s1 + $0x5b0] sm:$0xff]
  %v212 = vld [vmem:[%s1 + $0x5b8] sm:$0xff]
  %v213 = vld [vmem:[%s1 + $0x5c0] sm:$0xff]
  %v214 = vld [vmem:[%s1 + $0x5c8] sm:$0xff]
  %v215 = vld [vmem:[%s1 + $0x5d0] sm:$0xff]
  %v216 = vld [vmem:[%s1 + $0x5d8] sm:$0xff]
  %v217 = vld [vmem:[%s1 + $0x5e0] sm:$0xff]
  %v218 = vld [vmem:[%s1 + $0x5e8] sm:$0xff]
  %v219 = vld [vmem:[%s1 + $0x5f0] sm:$0xff]
  %v220 = vld [vmem:[%s1 + $0x5f8] sm:$0xff]
  %v221 = vld [vmem:[%s1 + $0x600] sm:$0xff]
  %v222 = vld [vmem:[%s1 + $0x608] sm:$0xff]
  %v223 = vld [vmem:[%s1 + $0x610] sm:$0xff]
  %v224 = vld [vmem:[%s1 + $0x618] sm:$0xff]
  %v225 = vld [vmem:[%s1 + $0x620] sm:$0xff]
  %v226 = vld [vmem:[%s1 + $0x628] sm:$0xff]
  %v227 = vld [vmem:[%s1 + $0x630] sm:$0xff]
  %v228 = vld [vmem:[%s1 + $0x638] sm:$0xff]
  %v229 = vld [vmem:[%s2] sm:$0xf]
  %v231 = vlaneseq
  %v232 = vshrl.u32 %v231, 7
  %v233 = vsub.s32 0, %v232
  %v234 = vrot.slane %v229, %v233
  %v235 = vlaneseq
  %v236 = vshrl.u32 %v235, 7
  %v237 = vsub.s32 1, %v236
  %v238 = vrot.slane %v229, %v237
  %v239 = vlaneseq
  %v240 = vshrl.u32 %v239, 7
  %v241 = vsub.s32 2, %v240
  %v242 = vrot.slane %v229, %v241
  %v243 = vlaneseq
  %v244 = vshrl.u32 %v243, 7
  %v245 = vsub.s32 3, %v244
  %v246 = vrot.slane %v229, %v245
  %v259 = vunpack.c.l.b16 %v21
  %v260 = vunpack.c.h.b16 %v21
  %v261 = vunpack.c.l.b16 %v22
  %v262 = vunpack.c.h.b16 %v22
  %v263 = vunpack.c.l.b16 %v23
  %v264 = vunpack.c.h.b16 %v23
  %v265 = vunpack.c.l.b16 %v24
  %v266 = vunpack.c.l.b16 %v25
  %v267 = vunpack.c.h.b16 %v25
  %v268 = vunpack.c.l.b16 %v26
  %v269 = vunpack.c.h.b16 %v26
  %v270 = vunpack.c.l.b16 %v27
  %v271 = vunpack.c.h.b16 %v27
  %v272 = vunpack.c.l.b16 %v28
  %v273 = vpack.c.b16 %v266, %v259
  %v274 = vpack.c.b16 %v267, %v260
  %v275 = vpack.c.b16 %v268, %v261
  %v276 = vpack.c.b16 %v269, %v262
  %v277 = vpack.c.b16 %v270, %v263
  %v278 = vpack.c.b16 %v271, %v264
  %v279 = vpack.c.b16 %v272, %v265
  %v486 = vunpack.c.l.b16 %v29
  %v487 = vunpack.c.h.b16 %v29
  %v488 = vunpack.c.l.b16 %v30
  %v489 = vunpack.c.h.b16 %v30
  %v490 = vunpack.c.l.b16 %v31
  %v491 = vunpack.c.h.b16 %v31
  %v492 = vunpack.c.l.b16 %v32
  %v493 = vunpack.c.h.b16 %v32
  %v494 = vunpack.c.l.b16 %v33
  %v495 = vunpack.c.h.b16 %v33
  %v496 = vunpack.c.l.b16 %v34
  %v497 = vunpack.c.h.b16 %v34
  %v498 = vunpack.c.l.b16 %v35
  %v499 = vunpack.c.h.b16 %v35
  %v500 = vunpack.c.l.b16 %v36
  %v501 = vunpack.c.h.b16 %v36
  %v502 = vunpack.c.l.b16 %v37
  %v503 = vunpack.c.h.b16 %v37
  %v504 = vunpack.c.l.b16 %v38
  %v505 = vunpack.c.h.b16 %v38
  %v506 = vunpack.c.l.b16 %v39
  %v507 = vunpack.c.h.b16 %v39
  %v508 = vunpack.c.l.b16 %v40
  %v509 = vunpack.c.h.b16 %v40
  %v510 = vunpack.c.l.b16 %v41
  %v511 = vunpack.c.h.b16 %v41
  %v512 = vunpack.c.l.b16 %v42
  %v513 = vunpack.c.h.b16 %v42
  %v514 = vunpack.c.l.b16 %v43
  %v515 = vunpack.c.h.b16 %v43
  %v516 = vunpack.c.l.b16 %v44
  %v517 = vunpack.c.h.b16 %v44
  %v518 = vunpack.c.l.b16 %v45
  %v519 = vunpack.c.h.b16 %v45
  %v520 = vunpack.c.l.b16 %v46
  %v521 = vunpack.c.h.b16 %v46
  %v522 = vunpack.c.l.b16 %v47
  %v523 = vunpack.c.h.b16 %v47
  %v524 = vunpack.c.l.b16 %v48
  %v525 = vunpack.c.h.b16 %v48
  %v526 = vunpack.c.l.b16 %v49
  %v527 = vunpack.c.h.b16 %v49
  %v528 = vunpack.c.l.b16 %v50
  %v529 = vunpack.c.h.b16 %v50
  %v530 = vunpack.c.l.b16 %v51
  %v531 = vunpack.c.h.b16 %v51
  %v532 = vunpack.c.l.b16 %v52
  %v533 = vunpack.c.h.b16 %v52
  %v534 = vunpack.c.l.b16 %v53
  %v535 = vunpack.c.h.b16 %v53
  %v536 = vunpack.c.l.b16 %v54
  %v537 = vunpack.c.h.b16 %v54
  %v538 = vunpack.c.l.b16 %v55
  %v539 = vunpack.c.h.b16 %v55
  %v540 = vunpack.c.l.b16 %v56
  %v541 = vunpack.c.h.b16 %v56
  %v542 = vunpack.c.l.b16 %v57
  %v543 = vunpack.c.h.b16 %v57
  %v544 = vunpack.c.l.b16 %v58
  %v545 = vunpack.c.h.b16 %v58
  %v546 = vunpack.c.l.b16 %v59
  %v547 = vunpack.c.h.b16 %v59
  %v548 = vunpack.c.l.b16 %v60
  %v549 = vunpack.c.h.b16 %v60
  %v550 = vunpack.c.l.b16 %v61
  %v551 = vunpack.c.h.b16 %v61
  %v552 = vunpack.c.l.b16 %v62
  %v553 = vunpack.c.h.b16 %v62
  %v554 = vunpack.c.l.b16 %v63
  %v555 = vunpack.c.h.b16 %v63
  %v556 = vunpack.c.l.b16 %v64
  %v557 = vunpack.c.h.b16 %v64
  %v558 = vunpack.c.l.b16 %v65
  %v559 = vunpack.c.h.b16 %v65
  %v560 = vunpack.c.l.b16 %v66
  %v561 = vunpack.c.h.b16 %v66
  %v562 = vunpack.c.l.b16 %v67
  %v563 = vunpack.c.h.b16 %v67
  %v564 = vunpack.c.l.b16 %v68
  %v565 = vunpack.c.h.b16 %v68
  %v566 = vunpack.c.l.b16 %v69
  %v567 = vunpack.c.h.b16 %v69
  %v568 = vunpack.c.l.b16 %v70
  %v569 = vunpack.c.h.b16 %v70
  %v570 = vunpack.c.l.b16 %v71
  %v571 = vunpack.c.h.b16 %v71
  %v572 = vunpack.c.l.b16 %v72
  %v573 = vunpack.c.h.b16 %v72
  %v574 = vunpack.c.l.b16 %v73
  %v575 = vunpack.c.h.b16 %v73
  %v576 = vunpack.c.l.b16 %v74
  %v577 = vunpack.c.h.b16 %v74
  %v578 = vunpack.c.l.b16 %v75
  %v579 = vunpack.c.h.b16 %v75
  %v580 = vunpack.c.l.b16 %v76
  %v581 = vunpack.c.h.b16 %v76
  %v582 = vunpack.c.l.b16 %v77
  %v583 = vunpack.c.h.b16 %v77
  %v584 = vunpack.c.l.b16 %v78
  %v585 = vunpack.c.h.b16 %v78
  %v586 = vunpack.c.l.b16 %v79
  %v587 = vunpack.c.h.b16 %v79
  %v588 = vunpack.c.l.b16 %v80
  %v589 = vunpack.c.h.b16 %v80
  %v590 = vunpack.c.l.b16 %v81
  %v591 = vunpack.c.h.b16 %v81
  %v592 = vunpack.c.l.b16 %v82
  %v593 = vunpack.c.h.b16 %v82
  %v594 = vunpack.c.l.b16 %v83
  %v595 = vunpack.c.h.b16 %v83
  %v596 = vunpack.c.l.b16 %v84
  %v597 = vunpack.c.h.b16 %v84
  %v598 = vunpack.c.l.b16 %v85
  %v599 = vunpack.c.h.b16 %v85
  %v600 = vunpack.c.l.b16 %v86
  %v601 = vunpack.c.h.b16 %v86
  %v602 = vunpack.c.l.b16 %v87
  %v603 = vunpack.c.h.b16 %v87
  %v604 = vunpack.c.l.b16 %v88
  %v605 = vunpack.c.h.b16 %v88
  %v606 = vunpack.c.l.b16 %v89
  %v607 = vunpack.c.h.b16 %v89
  %v608 = vunpack.c.l.b16 %v90
  %v609 = vunpack.c.h.b16 %v90
  %v610 = vunpack.c.l.b16 %v91
  %v611 = vunpack.c.h.b16 %v91
  %v612 = vunpack.c.l.b16 %v92
  %v613 = vunpack.c.h.b16 %v92
  %v614 = vunpack.c.l.b16 %v93
  %v615 = vunpack.c.h.b16 %v93
  %v616 = vunpack.c.l.b16 %v94
  %v617 = vunpack.c.h.b16 %v94
  %v618 = vunpack.c.l.b16 %v95
  %v619 = vunpack.c.h.b16 %v95
  %v620 = vunpack.c.l.b16 %v96
  %v621 = vunpack.c.h.b16 %v96
  %v622 = vunpack.c.l.b16 %v97
  %v623 = vunpack.c.h.b16 %v97
  %v624 = vunpack.c.l.b16 %v98
  %v625 = vunpack.c.h.b16 %v98
  %v626 = vunpack.c.l.b16 %v99
  %v627 = vunpack.c.h.b16 %v99
  %v628 = vunpack.c.l.b16 %v100
  %v629 = vunpack.c.h.b16 %v100
  %v630 = vunpack.c.l.b16 %v101
  %v631 = vunpack.c.h.b16 %v101
  %v632 = vunpack.c.l.b16 %v102
  %v633 = vunpack.c.h.b16 %v102
  %v634 = vunpack.c.l.b16 %v103
  %v635 = vunpack.c.h.b16 %v103
  %v636 = vunpack.c.l.b16 %v104
  %v637 = vunpack.c.h.b16 %v104
  %v638 = vunpack.c.l.b16 %v105
  %v639 = vunpack.c.h.b16 %v105
  %v640 = vunpack.c.l.b16 %v106
  %v641 = vunpack.c.h.b16 %v106
  %v642 = vunpack.c.l.b16 %v107
  %v643 = vunpack.c.h.b16 %v107
  %v644 = vunpack.c.l.b16 %v108
  %v645 = vunpack.c.h.b16 %v108
  %v646 = vunpack.c.l.b16 %v109
  %v647 = vunpack.c.h.b16 %v109
  %v648 = vunpack.c.l.b16 %v110
  %v649 = vunpack.c.h.b16 %v110
  %v650 = vunpack.c.l.b16 %v111
  %v651 = vunpack.c.h.b16 %v111
  %v652 = vunpack.c.l.b16 %v112
  %v653 = vunpack.c.h.b16 %v112
  %v654 = vunpack.c.l.b16 %v113
  %v655 = vunpack.c.h.b16 %v113
  %v656 = vunpack.c.l.b16 %v114
  %v657 = vunpack.c.h.b16 %v114
  %v658 = vunpack.c.l.b16 %v115
  %v659 = vunpack.c.h.b16 %v115
  %v660 = vunpack.c.l.b16 %v116
  %v661 = vunpack.c.h.b16 %v116
  %v662 = vunpack.c.l.b16 %v117
  %v663 = vunpack.c.h.b16 %v117
  %v664 = vunpack.c.l.b16 %v118
  %v665 = vunpack.c.h.b16 %v118
  %v666 = vunpack.c.l.b16 %v119
  %v667 = vunpack.c.h.b16 %v119
  %v668 = vunpack.c.l.b16 %v120
  %v669 = vunpack.c.h.b16 %v120
  %v670 = vunpack.c.l.b16 %v121
  %v671 = vunpack.c.h.b16 %v121
  %v672 = vunpack.c.l.b16 %v122
  %v673 = vunpack.c.h.b16 %v122
  %v674 = vunpack.c.l.b16 %v123
  %v675 = vunpack.c.h.b16 %v123
  %v676 = vunpack.c.l.b16 %v124
  %v677 = vunpack.c.h.b16 %v124
  %v678 = vunpack.c.l.b16 %v125
  %v679 = vunpack.c.h.b16 %v125
  %v680 = vunpack.c.l.b16 %v126
  %v681 = vunpack.c.h.b16 %v126
  %v682 = vunpack.c.l.b16 %v127
  %v683 = vunpack.c.h.b16 %v127
  %v684 = vunpack.c.l.b16 %v128
  %v685 = vunpack.c.h.b16 %v128
  %v686 = vunpack.c.l.b16 %v129
  %v687 = vunpack.c.h.b16 %v129
  %v688 = vunpack.c.l.b16 %v130
  %v689 = vunpack.c.h.b16 %v130
  %v690 = vunpack.c.l.b16 %v131
  %v691 = vunpack.c.h.b16 %v131
  %v692 = vunpack.c.l.b16 %v132
  %v693 = vunpack.c.h.b16 %v132
  %v694 = vunpack.c.l.b16 %v133
  %v695 = vunpack.c.h.b16 %v133
  %v696 = vunpack.c.l.b16 %v134
  %v697 = vunpack.c.h.b16 %v134
  %v698 = vunpack.c.l.b16 %v135
  %v699 = vunpack.c.h.b16 %v135
  %v700 = vunpack.c.l.b16 %v136
  %v701 = vunpack.c.h.b16 %v136
  %v702 = vunpack.c.l.b16 %v137
  %v703 = vunpack.c.h.b16 %v137
  %v704 = vunpack.c.l.b16 %v138
  %v705 = vunpack.c.h.b16 %v138
  %v706 = vunpack.c.l.b16 %v139
  %v707 = vunpack.c.h.b16 %v139
  %v708 = vunpack.c.l.b16 %v140
  %v709 = vunpack.c.h.b16 %v140
  %v710 = vunpack.c.l.b16 %v141
  %v711 = vunpack.c.h.b16 %v141
  %v712 = vunpack.c.l.b16 %v142
  %v713 = vunpack.c.h.b16 %v142
  %v714 = vunpack.c.l.b16 %v143
  %v715 = vunpack.c.h.b16 %v143
  %v716 = vunpack.c.l.b16 %v144
  %v717 = vunpack.c.h.b16 %v144
  %v718 = vunpack.c.l.b16 %v145
  %v719 = vunpack.c.h.b16 %v145
  %v720 = vunpack.c.l.b16 %v146
  %v721 = vunpack.c.h.b16 %v146
  %v722 = vunpack.c.l.b16 %v147
  %v723 = vunpack.c.h.b16 %v147
  %v724 = vunpack.c.l.b16 %v148
  %v725 = vunpack.c.h.b16 %v148
  %v726 = vunpack.c.l.b16 %v149
  %v727 = vunpack.c.h.b16 %v149
  %v728 = vunpack.c.l.b16 %v150
  %v729 = vunpack.c.h.b16 %v150
  %v730 = vunpack.c.l.b16 %v151
  %v731 = vunpack.c.h.b16 %v151
  %v732 = vunpack.c.l.b16 %v152
  %v733 = vunpack.c.h.b16 %v152
  %v734 = vunpack.c.l.b16 %v153
  %v735 = vunpack.c.h.b16 %v153
  %v736 = vunpack.c.l.b16 %v154
  %v737 = vunpack.c.h.b16 %v154
  %v738 = vunpack.c.l.b16 %v155
  %v739 = vunpack.c.h.b16 %v155
  %v740 = vunpack.c.l.b16 %v156
  %v741 = vunpack.c.h.b16 %v156
  %v742 = vunpack.c.l.b16 %v157
  %v743 = vunpack.c.h.b16 %v157
  %v744 = vunpack.c.l.b16 %v158
  %v745 = vunpack.c.h.b16 %v158
  %v746 = vunpack.c.l.b16 %v159
  %v747 = vunpack.c.h.b16 %v159
  %v748 = vunpack.c.l.b16 %v160
  %v749 = vunpack.c.h.b16 %v160
  %v750 = vunpack.c.l.b16 %v161
  %v751 = vunpack.c.h.b16 %v161
  %v752 = vunpack.c.l.b16 %v162
  %v753 = vunpack.c.h.b16 %v162
  %v754 = vunpack.c.l.b16 %v163
  %v755 = vunpack.c.h.b16 %v163
  %v756 = vunpack.c.l.b16 %v164
  %v757 = vunpack.c.h.b16 %v164
  %v758 = vunpack.c.l.b16 %v165
  %v759 = vunpack.c.h.b16 %v165
  %v760 = vunpack.c.l.b16 %v166
  %v761 = vunpack.c.h.b16 %v166
  %v762 = vunpack.c.l.b16 %v167
  %v763 = vunpack.c.h.b16 %v167
  %v764 = vunpack.c.l.b16 %v168
  %v765 = vunpack.c.h.b16 %v168
  %v766 = vunpack.c.l.b16 %v169
  %v767 = vunpack.c.h.b16 %v169
  %v768 = vunpack.c.l.b16 %v170
  %v769 = vunpack.c.h.b16 %v170
  %v770 = vunpack.c.l.b16 %v171
  %v771 = vunpack.c.h.b16 %v171
  %v772 = vunpack.c.l.b16 %v172
  %v773 = vunpack.c.h.b16 %v172
  %v774 = vunpack.c.l.b16 %v173
  %v775 = vunpack.c.h.b16 %v173
  %v776 = vunpack.c.l.b16 %v174
  %v777 = vunpack.c.h.b16 %v174
  %v778 = vunpack.c.l.b16 %v175
  %v779 = vunpack.c.h.b16 %v175
  %v780 = vunpack.c.l.b16 %v176
  %v781 = vunpack.c.h.b16 %v176
  %v782 = vunpack.c.l.b16 %v177
  %v783 = vunpack.c.h.b16 %v177
  %v784 = vunpack.c.l.b16 %v178
  %v785 = vunpack.c.h.b16 %v178
  %v786 = vunpack.c.l.b16 %v179
  %v787 = vunpack.c.h.b16 %v179
  %v788 = vunpack.c.l.b16 %v180
  %v789 = vunpack.c.h.b16 %v180
  %v790 = vunpack.c.l.b16 %v181
  %v791 = vunpack.c.h.b16 %v181
  %v792 = vunpack.c.l.b16 %v182
  %v793 = vunpack.c.h.b16 %v182
  %v794 = vunpack.c.l.b16 %v183
  %v795 = vunpack.c.h.b16 %v183
  %v796 = vunpack.c.l.b16 %v184
  %v797 = vunpack.c.h.b16 %v184
  %v798 = vunpack.c.l.b16 %v185
  %v799 = vunpack.c.h.b16 %v185
  %v800 = vunpack.c.l.b16 %v186
  %v801 = vunpack.c.h.b16 %v186
  %v802 = vunpack.c.l.b16 %v187
  %v803 = vunpack.c.h.b16 %v187
  %v804 = vunpack.c.l.b16 %v188
  %v805 = vunpack.c.h.b16 %v188
  %v806 = vunpack.c.l.b16 %v189
  %v807 = vunpack.c.h.b16 %v189
  %v808 = vunpack.c.l.b16 %v190
  %v809 = vunpack.c.h.b16 %v190
  %v810 = vunpack.c.l.b16 %v191
  %v811 = vunpack.c.h.b16 %v191
  %v812 = vunpack.c.l.b16 %v192
  %v813 = vunpack.c.h.b16 %v192
  %v814 = vunpack.c.l.b16 %v193
  %v815 = vunpack.c.h.b16 %v193
  %v816 = vunpack.c.l.b16 %v194
  %v817 = vunpack.c.h.b16 %v194
  %v818 = vunpack.c.l.b16 %v195
  %v819 = vunpack.c.h.b16 %v195
  %v820 = vunpack.c.l.b16 %v196
  %v821 = vunpack.c.h.b16 %v196
  %v822 = vunpack.c.l.b16 %v197
  %v823 = vunpack.c.h.b16 %v197
  %v824 = vunpack.c.l.b16 %v198
  %v825 = vunpack.c.h.b16 %v198
  %v826 = vunpack.c.l.b16 %v199
  %v827 = vunpack.c.h.b16 %v199
  %v828 = vunpack.c.l.b16 %v200
  %v829 = vunpack.c.h.b16 %v200
  %v830 = vunpack.c.l.b16 %v201
  %v831 = vunpack.c.h.b16 %v201
  %v832 = vunpack.c.l.b16 %v202
  %v833 = vunpack.c.h.b16 %v202
  %v834 = vunpack.c.l.b16 %v203
  %v835 = vunpack.c.h.b16 %v203
  %v836 = vunpack.c.l.b16 %v204
  %v837 = vunpack.c.h.b16 %v204
  %v838 = vunpack.c.l.b16 %v205
  %v839 = vunpack.c.h.b16 %v205
  %v840 = vunpack.c.l.b16 %v206
  %v841 = vunpack.c.h.b16 %v206
  %v842 = vunpack.c.l.b16 %v207
  %v843 = vunpack.c.h.b16 %v207
  %v844 = vunpack.c.l.b16 %v208
  %v845 = vunpack.c.h.b16 %v208
  %v846 = vunpack.c.l.b16 %v209
  %v847 = vunpack.c.h.b16 %v209
  %v848 = vunpack.c.l.b16 %v210
  %v849 = vunpack.c.h.b16 %v210
  %v850 = vunpack.c.l.b16 %v211
  %v851 = vunpack.c.h.b16 %v211
  %v852 = vunpack.c.l.b16 %v212
  %v853 = vunpack.c.h.b16 %v212
  %v854 = vunpack.c.l.b16 %v213
  %v855 = vunpack.c.h.b16 %v213
  %v856 = vunpack.c.l.b16 %v214
  %v857 = vunpack.c.h.b16 %v214
  %v858 = vunpack.c.l.b16 %v215
  %v859 = vunpack.c.h.b16 %v215
  %v860 = vunpack.c.l.b16 %v216
  %v861 = vunpack.c.h.b16 %v216
  %v862 = vunpack.c.l.b16 %v217
  %v863 = vunpack.c.h.b16 %v217
  %v864 = vunpack.c.l.b16 %v218
  %v865 = vunpack.c.h.b16 %v218
  %v866 = vunpack.c.l.b16 %v219
  %v867 = vunpack.c.h.b16 %v219
  %v868 = vunpack.c.l.b16 %v220
  %v869 = vunpack.c.h.b16 %v220
  %v870 = vunpack.c.l.b16 %v221
  %v871 = vunpack.c.h.b16 %v221
  %v872 = vunpack.c.l.b16 %v222
  %v873 = vunpack.c.h.b16 %v222
  %v874 = vunpack.c.l.b16 %v223
  %v875 = vunpack.c.h.b16 %v223
  %v876 = vunpack.c.l.b16 %v224
  %v877 = vunpack.c.h.b16 %v224
  %v878 = vunpack.c.l.b16 %v225
  %v879 = vunpack.c.h.b16 %v225
  %v880 = vunpack.c.l.b16 %v226
  %v881 = vunpack.c.h.b16 %v226
  %v882 = vunpack.c.l.b16 %v227
  %v883 = vunpack.c.h.b16 %v227
  %v884 = vunpack.c.l.b16 %v228
  %v885 = vunpack.c.h.b16 %v228
  %v886 = vpack.c.b16 %v490, %v486
  %v887 = vpack.c.b16 %v491, %v487
  %v888 = vpack.c.b16 %v492, %v488
  %v889 = vpack.c.b16 %v493, %v489
  %v890 = vpack.c.b16 %v498, %v494
  %v891 = vpack.c.b16 %v499, %v495
  %v892 = vpack.c.b16 %v500, %v496
  %v893 = vpack.c.b16 %v501, %v497
  %v894 = vpack.c.b16 %v506, %v502
  %v895 = vpack.c.b16 %v507, %v503
  %v896 = vpack.c.b16 %v508, %v504
  %v897 = vpack.c.b16 %v509, %v505
  %v898 = vpack.c.b16 %v514, %v510
  %v899 = vpack.c.b16 %v515, %v511
  %v900 = vpack.c.b16 %v516, %v512
  %v901 = vpack.c.b16 %v517, %v513
  %v902 = vpack.c.b16 %v522, %v518
  %v903 = vpack.c.b16 %v523, %v519
  %v904 = vpack.c.b16 %v524, %v520
  %v905 = vpack.c.b16 %v525, %v521
  %v906 = vpack.c.b16 %v530, %v526
  %v907 = vpack.c.b16 %v531, %v527
  %v908 = vpack.c.b16 %v532, %v528
  %v909 = vpack.c.b16 %v533, %v529
  %v910 = vpack.c.b16 %v538, %v534
  %v911 = vpack.c.b16 %v539, %v535
  %v912 = vpack.c.b16 %v540, %v536
  %v913 = vpack.c.b16 %v541, %v537
  %v914 = vpack.c.b16 %v546, %v542
  %v915 = vpack.c.b16 %v547, %v543
  %v916 = vpack.c.b16 %v548, %v544
  %v917 = vpack.c.b16 %v549, %v545
  %v918 = vpack.c.b16 %v554, %v550
  %v919 = vpack.c.b16 %v555, %v551
  %v920 = vpack.c.b16 %v556, %v552
  %v921 = vpack.c.b16 %v557, %v553
  %v922 = vpack.c.b16 %v562, %v558
  %v923 = vpack.c.b16 %v563, %v559
  %v924 = vpack.c.b16 %v564, %v560
  %v925 = vpack.c.b16 %v565, %v561
  %v926 = vpack.c.b16 %v570, %v566
  %v927 = vpack.c.b16 %v571, %v567
  %v928 = vpack.c.b16 %v572, %v568
  %v929 = vpack.c.b16 %v573, %v569
  %v930 = vpack.c.b16 %v578, %v574
  %v931 = vpack.c.b16 %v579, %v575
  %v932 = vpack.c.b16 %v580, %v576
  %v933 = vpack.c.b16 %v581, %v577
  %v934 = vpack.c.b16 %v586, %v582
  %v935 = vpack.c.b16 %v587, %v583
  %v936 = vpack.c.b16 %v588, %v584
  %v937 = vpack.c.b16 %v589, %v585
  %v938 = vpack.c.b16 %v594, %v590
  %v939 = vpack.c.b16 %v595, %v591
  %v940 = vpack.c.b16 %v596, %v592
  %v941 = vpack.c.b16 %v597, %v593
  %v942 = vpack.c.b16 %v602, %v598
  %v943 = vpack.c.b16 %v603, %v599
  %v944 = vpack.c.b16 %v604, %v600
  %v945 = vpack.c.b16 %v605, %v601
  %v946 = vpack.c.b16 %v610, %v606
  %v947 = vpack.c.b16 %v611, %v607
  %v948 = vpack.c.b16 %v612, %v608
  %v949 = vpack.c.b16 %v613, %v609
  %v950 = vpack.c.b16 %v618, %v614
  %v951 = vpack.c.b16 %v619, %v615
  %v952 = vpack.c.b16 %v620, %v616
  %v953 = vpack.c.b16 %v621, %v617
  %v954 = vpack.c.b16 %v626, %v622
  %v955 = vpack.c.b16 %v627, %v623
  %v956 = vpack.c.b16 %v628, %v624
  %v957 = vpack.c.b16 %v629, %v625
  %v958 = vpack.c.b16 %v634, %v630
  %v959 = vpack.c.b16 %v635, %v631
  %v960 = vpack.c.b16 %v636, %v632
  %v961 = vpack.c.b16 %v637, %v633
  %v962 = vpack.c.b16 %v642, %v638
  %v963 = vpack.c.b16 %v643, %v639
  %v964 = vpack.c.b16 %v644, %v640
  %v965 = vpack.c.b16 %v645, %v641
  %v966 = vpack.c.b16 %v650, %v646
  %v967 = vpack.c.b16 %v651, %v647
  %v968 = vpack.c.b16 %v652, %v648
  %v969 = vpack.c.b16 %v653, %v649
  %v970 = vpack.c.b16 %v658, %v654
  %v971 = vpack.c.b16 %v659, %v655
  %v972 = vpack.c.b16 %v660, %v656
  %v973 = vpack.c.b16 %v661, %v657
  %v974 = vpack.c.b16 %v666, %v662
  %v975 = vpack.c.b16 %v667, %v663
  %v976 = vpack.c.b16 %v668, %v664
  %v977 = vpack.c.b16 %v669, %v665
  %v978 = vpack.c.b16 %v674, %v670
  %v979 = vpack.c.b16 %v675, %v671
  %v980 = vpack.c.b16 %v676, %v672
  %v981 = vpack.c.b16 %v677, %v673
  %v982 = vpack.c.b16 %v682, %v678
  %v983 = vpack.c.b16 %v683, %v679
  %v984 = vpack.c.b16 %v684, %v680
  %v985 = vpack.c.b16 %v685, %v681
  %v986 = vpack.c.b16 %v690, %v686
  %v987 = vpack.c.b16 %v691, %v687
  %v988 = vpack.c.b16 %v692, %v688
  %v989 = vpack.c.b16 %v693, %v689
  %v990 = vpack.c.b16 %v698, %v694
  %v991 = vpack.c.b16 %v699, %v695
  %v992 = vpack.c.b16 %v700, %v696
  %v993 = vpack.c.b16 %v701, %v697
  %v994 = vpack.c.b16 %v706, %v702
  %v995 = vpack.c.b16 %v707, %v703
  %v996 = vpack.c.b16 %v708, %v704
  %v997 = vpack.c.b16 %v709, %v705
  %v998 = vpack.c.b16 %v714, %v710
  %v999 = vpack.c.b16 %v715, %v711
  %v1000 = vpack.c.b16 %v716, %v712
  %v1001 = vpack.c.b16 %v717, %v713
  %v1002 = vpack.c.b16 %v722, %v718
  %v1003 = vpack.c.b16 %v723, %v719
  %v1004 = vpack.c.b16 %v724, %v720
  %v1005 = vpack.c.b16 %v725, %v721
  %v1006 = vpack.c.b16 %v730, %v726
  %v1007 = vpack.c.b16 %v731, %v727
  %v1008 = vpack.c.b16 %v732, %v728
  %v1009 = vpack.c.b16 %v733, %v729
  %v1010 = vpack.c.b16 %v738, %v734
  %v1011 = vpack.c.b16 %v739, %v735
  %v1012 = vpack.c.b16 %v740, %v736
  %v1013 = vpack.c.b16 %v741, %v737
  %v1014 = vpack.c.b16 %v746, %v742
  %v1015 = vpack.c.b16 %v747, %v743
  %v1016 = vpack.c.b16 %v748, %v744
  %v1017 = vpack.c.b16 %v749, %v745
  %v1018 = vpack.c.b16 %v754, %v750
  %v1019 = vpack.c.b16 %v755, %v751
  %v1020 = vpack.c.b16 %v756, %v752
  %v1021 = vpack.c.b16 %v757, %v753
  %v1022 = vpack.c.b16 %v762, %v758
  %v1023 = vpack.c.b16 %v763, %v759
  %v1024 = vpack.c.b16 %v764, %v760
  %v1025 = vpack.c.b16 %v765, %v761
  %v1026 = vpack.c.b16 %v770, %v766
  %v1027 = vpack.c.b16 %v771, %v767
  %v1028 = vpack.c.b16 %v772, %v768
  %v1029 = vpack.c.b16 %v773, %v769
  %v1030 = vpack.c.b16 %v778, %v774
  %v1031 = vpack.c.b16 %v779, %v775
  %v1032 = vpack.c.b16 %v780, %v776
  %v1033 = vpack.c.b16 %v781, %v777
  %v1034 = vpack.c.b16 %v786, %v782
  %v1035 = vpack.c.b16 %v787, %v783
  %v1036 = vpack.c.b16 %v788, %v784
  %v1037 = vpack.c.b16 %v789, %v785
  %v1038 = vpack.c.b16 %v794, %v790
  %v1039 = vpack.c.b16 %v795, %v791
  %v1040 = vpack.c.b16 %v796, %v792
  %v1041 = vpack.c.b16 %v797, %v793
  %v1042 = vpack.c.b16 %v802, %v798
  %v1043 = vpack.c.b16 %v803, %v799
  %v1044 = vpack.c.b16 %v804, %v800
  %v1045 = vpack.c.b16 %v805, %v801
  %v1046 = vpack.c.b16 %v810, %v806
  %v1047 = vpack.c.b16 %v811, %v807
  %v1048 = vpack.c.b16 %v812, %v808
  %v1049 = vpack.c.b16 %v813, %v809
  %v1050 = vpack.c.b16 %v818, %v814
  %v1051 = vpack.c.b16 %v819, %v815
  %v1052 = vpack.c.b16 %v820, %v816
  %v1053 = vpack.c.b16 %v821, %v817
  %v1054 = vpack.c.b16 %v826, %v822
  %v1055 = vpack.c.b16 %v827, %v823
  %v1056 = vpack.c.b16 %v828, %v824
  %v1057 = vpack.c.b16 %v829, %v825
  %v1058 = vpack.c.b16 %v834, %v830
  %v1059 = vpack.c.b16 %v835, %v831
  %v1060 = vpack.c.b16 %v836, %v832
  %v1061 = vpack.c.b16 %v837, %v833
  %v1062 = vpack.c.b16 %v842, %v838
  %v1063 = vpack.c.b16 %v843, %v839
  %v1064 = vpack.c.b16 %v844, %v840
  %v1065 = vpack.c.b16 %v845, %v841
  %v1066 = vpack.c.b16 %v850, %v846
  %v1067 = vpack.c.b16 %v851, %v847
  %v1068 = vpack.c.b16 %v852, %v848
  %v1069 = vpack.c.b16 %v853, %v849
  %v1070 = vpack.c.b16 %v858, %v854
  %v1071 = vpack.c.b16 %v859, %v855
  %v1072 = vpack.c.b16 %v860, %v856
  %v1073 = vpack.c.b16 %v861, %v857
  %v1074 = vpack.c.b16 %v866, %v862
  %v1075 = vpack.c.b16 %v867, %v863
  %v1076 = vpack.c.b16 %v868, %v864
  %v1077 = vpack.c.b16 %v869, %v865
  %v1078 = vpack.c.b16 %v874, %v870
  %v1079 = vpack.c.b16 %v875, %v871
  %v1080 = vpack.c.b16 %v876, %v872
  %v1081 = vpack.c.b16 %v877, %v873
  %v1082 = vpack.c.b16 %v882, %v878
  %v1083 = vpack.c.b16 %v883, %v879
  %v1084 = vpack.c.b16 %v884, %v880
  %v1085 = vpack.c.b16 %v885, %v881
  %vm1286 = vcmask 261120
  %v1288 = vsel %vm1286, %v279, 0
  %1290 = vmatprep.subr.bf16.mxu0 %v915
  %1291 = vmatpush1.bf16.msra.mxu0 %v914
  %1292 = vmatprep.subr.bf16.mxu0 %v911
  %1293 = vmatpush1.bf16.msra.mxu0 %v910
  %1294 = vmatprep.subr.bf16.mxu0 %v907
  %1295 = vmatpush1.bf16.msra.mxu0 %v906
  %1296 = vmatprep.subr.bf16.mxu0 %v903
  %1297 = vmatpush1.bf16.msra.mxu0 %v902
  %1298 = vmatprep.subr.bf16.mxu0 %v899
  %1299 = vmatpush1.bf16.msra.mxu0 %v898
  %1300 = vmatprep.subr.bf16.mxu0 %v895
  %1301 = vmatpush1.bf16.msra.mxu0 %v894
  %1302 = vmatprep.subr.bf16.mxu0 %v891
  %1303 = vmatpush1.bf16.msra.mxu0 %v890
  %1304 = vmatprep.subr.bf16.mxu0 %v887
  %1305 = vmatpush1.bf16.msra.mxu0 %v886
  %1306 = vmatprep.subr.bf16.mxu0 %v947
  %1307 = vmatpush2.bf16.msra.mxu0 %v946
  %1308 = vmatprep.subr.bf16.mxu0 %v943
  %1309 = vmatpush2.bf16.msra.mxu0 %v942
  %1310 = vmatprep.subr.bf16.mxu0 %v939
  %1311 = vmatpush2.bf16.msra.mxu0 %v938
  %1312 = vmatprep.subr.bf16.mxu0 %v935
  %1313 = vmatpush2.bf16.msra.mxu0 %v934
  %1314 = vmatprep.subr.bf16.mxu0 %v931
  %1315 = vmatpush2.bf16.msra.mxu0 %v930
  %1316 = vmatprep.subr.bf16.mxu0 %v927
  %1317 = vmatpush2.bf16.msra.mxu0 %v926
  %1318 = vmatprep.subr.bf16.mxu0 %v923
  %1319 = vmatpush2.bf16.msra.mxu0 %v922
  %1320 = vmatprep.subr.bf16.mxu0 %v919
  %1321 = vmatpush2.bf16.msra.mxu0 %v918
  %1322 = vmatprep.mubr.bf16.mxu0 %v274
  %1323 = vmatmul.mubr.bf16.gmra.mxu0 %v273
  %v1324 = vpop.f32.mrf.mxu0
  %v1325 = vadd.f32 %v234, %v1324
  %v1326 = vpop.f32.mrf.mxu0
  %v1327 = vadd.f32 %v238, %v1326
  %v1328 = vpop.f32.mrf.mxu0
  %v1329 = vadd.f32 %v234, %v1328
  %v1330 = vpop.f32.mrf.mxu0
  %v1331 = vadd.f32 %v238, %v1330
  %1332 = vdwg.mxu0
  %1333 = vmatprep.subr.bf16.mxu0 %v979
  %1334 = vmatpush1.bf16.msra.mxu0 %v978
  %1335 = vmatprep.subr.bf16.mxu0 %v975
  %1336 = vmatpush1.bf16.msra.mxu0 %v974
  %1337 = vmatprep.subr.bf16.mxu0 %v971
  %1338 = vmatpush1.bf16.msra.mxu0 %v970
  %1339 = vmatprep.subr.bf16.mxu0 %v967
  %1340 = vmatpush1.bf16.msra.mxu0 %v966
  %1341 = vmatprep.subr.bf16.mxu0 %v963
  %1342 = vmatpush1.bf16.msra.mxu0 %v962
  %1343 = vmatprep.subr.bf16.mxu0 %v959
  %1344 = vmatpush1.bf16.msra.mxu0 %v958
  %1345 = vmatprep.subr.bf16.mxu0 %v955
  %1346 = vmatpush1.bf16.msra.mxu0 %v954
  %1347 = vmatprep.subr.bf16.mxu0 %v951
  %1348 = vmatpush1.bf16.msra.mxu0 %v950
  %1349 = vmatprep.subr.bf16.mxu0 %v1011
  %1350 = vmatpush2.bf16.msra.mxu0 %v1010
  %1351 = vmatprep.subr.bf16.mxu0 %v1007
  %1352 = vmatpush2.bf16.msra.mxu0 %v1006
  %1353 = vmatprep.subr.bf16.mxu0 %v1003
  %1354 = vmatpush2.bf16.msra.mxu0 %v1002
  %1355 = vmatprep.subr.bf16.mxu0 %v999
  %1356 = vmatpush2.bf16.msra.mxu0 %v998
  %1357 = vmatprep.subr.bf16.mxu0 %v995
  %1358 = vmatpush2.bf16.msra.mxu0 %v994
  %1359 = vmatprep.subr.bf16.mxu0 %v991
  %1360 = vmatpush2.bf16.msra.mxu0 %v990
  %1361 = vmatprep.subr.bf16.mxu0 %v987
  %1362 = vmatpush2.bf16.msra.mxu0 %v986
  %1363 = vmatprep.subr.bf16.mxu0 %v983
  %1364 = vmatpush2.bf16.msra.mxu0 %v982
  %1365 = vmatprep.mubr.bf16.mxu0 %v276
  %1366 = vmatmul.mubr.bf16.gmra.mxu0 %v275
  %v1367 = vpop.f32.mrf.mxu0
  %v1368 = vadd.f32 %v1325, %v1367
  %v1369 = vpop.f32.mrf.mxu0
  %v1370 = vadd.f32 %v1327, %v1369
  %v1371 = vpop.f32.mrf.mxu0
  %v1372 = vadd.f32 %v1329, %v1371
  %v1373 = vpop.f32.mrf.mxu0
  %v1374 = vadd.f32 %v1331, %v1373
  %1375 = vdwg.mxu0
  %1376 = vmatprep.subr.bf16.mxu0 %v1043
  %1377 = vmatpush1.bf16.msra.mxu0 %v1042
  %1378 = vmatprep.subr.bf16.mxu0 %v1039
  %1379 = vmatpush1.bf16.msra.mxu0 %v1038
  %1380 = vmatprep.subr.bf16.mxu0 %v1035
  %1381 = vmatpush1.bf16.msra.mxu0 %v1034
  %1382 = vmatprep.subr.bf16.mxu0 %v1031
  %1383 = vmatpush1.bf16.msra.mxu0 %v1030
  %1384 = vmatprep.subr.bf16.mxu0 %v1027
  %1385 = vmatpush1.bf16.msra.mxu0 %v1026
  %1386 = vmatprep.subr.bf16.mxu0 %v1023
  %1387 = vmatpush1.bf16.msra.mxu0 %v1022
  %1388 = vmatprep.subr.bf16.mxu0 %v1019
  %1389 = vmatpush1.bf16.msra.mxu0 %v1018
  %1390 = vmatprep.subr.bf16.mxu0 %v1015
  %1391 = vmatpush1.bf16.msra.mxu0 %v1014
  %1392 = vmatprep.subr.bf16.mxu0 %v1075
  %1393 = vmatpush2.bf16.msra.mxu0 %v1074
  %1394 = vmatprep.subr.bf16.mxu0 %v1071
  %1395 = vmatpush2.bf16.msra.mxu0 %v1070
  %1396 = vmatprep.subr.bf16.mxu0 %v1067
  %1397 = vmatpush2.bf16.msra.mxu0 %v1066
  %1398 = vmatprep.subr.bf16.mxu0 %v1063
  %1399 = vmatpush2.bf16.msra.mxu0 %v1062
  %1400 = vmatprep.subr.bf16.mxu0 %v1059
  %1401 = vmatpush2.bf16.msra.mxu0 %v1058
  %1402 = vmatprep.subr.bf16.mxu0 %v1055
  %1403 = vmatpush2.bf16.msra.mxu0 %v1054
  %1404 = vmatprep.subr.bf16.mxu0 %v1051
  %1405 = vmatpush2.bf16.msra.mxu0 %v1050
  %1406 = vmatprep.subr.bf16.mxu0 %v1047
  %1407 = vmatpush2.bf16.msra.mxu0 %v1046
  %1408 = vmatprep.mubr.bf16.mxu0 %v278
  %1409 = vmatmul.mubr.bf16.gmra.mxu0 %v277
  %v1410 = vpop.f32.mrf.mxu0
  %v1411 = vadd.f32 %v1368, %v1410
  %v1412 = vpop.f32.mrf.mxu0
  %v1413 = vadd.f32 %v1370, %v1412
  %v1414 = vpop.f32.mrf.mxu0
  %v1415 = vadd.f32 %v1372, %v1414
  %v1416 = vpop.f32.mrf.mxu0
  %v1417 = vadd.f32 %v1374, %v1416
  %1418 = vdwg.mxu0
  %1419 = vmatprep.subr.bf16.mxu0 0
  %1420 = vmatpush1.bf16.msra.mxu0 0
  %1421 = vmatprep.subr.bf16.mxu0 0
  %1422 = vmatpush1.bf16.msra.mxu0 0
  %1423 = vmatprep.subr.bf16.mxu0 0
  %1424 = vmatpush1.bf16.msra.mxu0 0
  %1425 = vmatprep.subr.bf16.mxu0 0
  %1426 = vmatpush1.bf16.msra.mxu0 0
  %1427 = vmatprep.subr.bf16.mxu0 0
  %1428 = vmatpush1.bf16.msra.mxu0 0
  %1429 = vmatprep.subr.bf16.mxu0 0
  %1430 = vmatpush1.bf16.msra.mxu0 0
  %1431 = vmatprep.subr.bf16.mxu0 %v1083
  %1432 = vmatpush1.bf16.msra.mxu0 %v1082
  %1433 = vmatprep.subr.bf16.mxu0 %v1079
  %1434 = vmatpush1.bf16.msra.mxu0 %v1078
  %1435 = vmatprep.subr.bf16.mxu0 0
  %1436 = vmatpush2.bf16.msra.mxu0 0
  %1437 = vmatprep.subr.bf16.mxu0 0
  %1438 = vmatpush2.bf16.msra.mxu0 0
  %1439 = vmatprep.subr.bf16.mxu0 0
  %1440 = vmatpush2.bf16.msra.mxu0 0
  %1441 = vmatprep.subr.bf16.mxu0 0
  %1442 = vmatpush2.bf16.msra.mxu0 0
  %1443 = vmatprep.subr.bf16.mxu0 0
  %1444 = vmatpush2.bf16.msra.mxu0 0
  %1445 = vmatprep.subr.bf16.mxu0 0
  %1446 = vmatpush2.bf16.msra.mxu0 0
  %1447 = vmatprep.subr.bf16.mxu0 0
  %1448 = vmatpush2.bf16.msra.mxu0 0
  %1449 = vmatprep.subr.bf16.mxu0 0
  %1450 = vmatpush2.bf16.msra.mxu0 0
  %1451 = vmatprep.mubr.bf16.mxu0 0
  %1452 = vmatmul.mubr.bf16.gmra.mxu0 %v1288
  %v1453 = vpop.f32.mrf.mxu0
  %v1454 = vadd.f32 %v1411, %v1453
  %v1455 = vpop.f32.mrf.mxu0
  %v1456 = vadd.f32 %v1413, %v1455
  %v1457 = vpop.f32.mrf.mxu0
  %v1458 = vadd.f32 %v1415, %v1457
  %v1459 = vpop.f32.mrf.mxu0
  %v1460 = vadd.f32 %v1417, %v1459
  %1461 = vdwg.mxu0
  %1462 = vmatprep.subr.bf16.mxu0 %v917
  %1463 = vmatpush1.bf16.msra.mxu0 %v916
  %1464 = vmatprep.subr.bf16.mxu0 %v913
  %1465 = vmatpush1.bf16.msra.mxu0 %v912
  %1466 = vmatprep.subr.bf16.mxu0 %v909
  %1467 = vmatpush1.bf16.msra.mxu0 %v908
  %1468 = vmatprep.subr.bf16.mxu0 %v905
  %1469 = vmatpush1.bf16.msra.mxu0 %v904
  %1470 = vmatprep.subr.bf16.mxu0 %v901
  %1471 = vmatpush1.bf16.msra.mxu0 %v900
  %1472 = vmatprep.subr.bf16.mxu0 %v897
  %1473 = vmatpush1.bf16.msra.mxu0 %v896
  %1474 = vmatprep.subr.bf16.mxu0 %v893
  %1475 = vmatpush1.bf16.msra.mxu0 %v892
  %1476 = vmatprep.subr.bf16.mxu0 %v889
  %1477 = vmatpush1.bf16.msra.mxu0 %v888
  %1478 = vmatprep.subr.bf16.mxu0 %v949
  %1479 = vmatpush2.bf16.msra.mxu0 %v948
  %1480 = vmatprep.subr.bf16.mxu0 %v945
  %1481 = vmatpush2.bf16.msra.mxu0 %v944
  %1482 = vmatprep.subr.bf16.mxu0 %v941
  %1483 = vmatpush2.bf16.msra.mxu0 %v940
  %1484 = vmatprep.subr.bf16.mxu0 %v937
  %1485 = vmatpush2.bf16.msra.mxu0 %v936
  %1486 = vmatprep.subr.bf16.mxu0 %v933
  %1487 = vmatpush2.bf16.msra.mxu0 %v932
  %1488 = vmatprep.subr.bf16.mxu0 %v929
  %1489 = vmatpush2.bf16.msra.mxu0 %v928
  %1490 = vmatprep.subr.bf16.mxu0 %v925
  %1491 = vmatpush2.bf16.msra.mxu0 %v924
  %1492 = vmatprep.subr.bf16.mxu0 %v921
  %1493 = vmatpush2.bf16.msra.mxu0 %v920
  %1494 = vmatprep.mubr.bf16.mxu0 %v274
  %1495 = vmatmul.mubr.bf16.gmra.mxu0 %v273
  %v1496 = vpop.f32.mrf.mxu0
  %v1497 = vadd.f32 %v242, %v1496
  %v1498 = vpop.f32.mrf.mxu0
  %v1499 = vadd.f32 %v246, %v1498
  %v1500 = vpop.f32.mrf.mxu0
  %v1501 = vadd.f32 %v242, %v1500
  %v1502 = vpop.f32.mrf.mxu0
  %v1503 = vadd.f32 %v246, %v1502
  %1504 = vdwg.mxu0
  %1505 = vmatprep.subr.bf16.mxu0 %v981
  %1506 = vmatpush1.bf16.msra.mxu0 %v980
  %1507 = vmatprep.subr.bf16.mxu0 %v977
  %1508 = vmatpush1.bf16.msra.mxu0 %v976
  %1509 = vmatprep.subr.bf16.mxu0 %v973
  %1510 = vmatpush1.bf16.msra.mxu0 %v972
  %1511 = vmatprep.subr.bf16.mxu0 %v969
  %1512 = vmatpush1.bf16.msra.mxu0 %v968
  %1513 = vmatprep.subr.bf16.mxu0 %v965
  %1514 = vmatpush1.bf16.msra.mxu0 %v964
  %1515 = vmatprep.subr.bf16.mxu0 %v961
  %1516 = vmatpush1.bf16.msra.mxu0 %v960
  %1517 = vmatprep.subr.bf16.mxu0 %v957
  %1518 = vmatpush1.bf16.msra.mxu0 %v956
  %1519 = vmatprep.subr.bf16.mxu0 %v953
  %1520 = vmatpush1.bf16.msra.mxu0 %v952
  %1521 = vmatprep.subr.bf16.mxu0 %v1013
  %1522 = vmatpush2.bf16.msra.mxu0 %v1012
  %1523 = vmatprep.subr.bf16.mxu0 %v1009
  %1524 = vmatpush2.bf16.msra.mxu0 %v1008
  %1525 = vmatprep.subr.bf16.mxu0 %v1005
  %1526 = vmatpush2.bf16.msra.mxu0 %v1004
  %1527 = vmatprep.subr.bf16.mxu0 %v1001
  %1528 = vmatpush2.bf16.msra.mxu0 %v1000
  %1529 = vmatprep.subr.bf16.mxu0 %v997
  %1530 = vmatpush2.bf16.msra.mxu0 %v996
  %1531 = vmatprep.subr.bf16.mxu0 %v993
  %1532 = vmatpush2.bf16.msra.mxu0 %v992
  %1533 = vmatprep.subr.bf16.mxu0 %v989
  %1534 = vmatpush2.bf16.msra.mxu0 %v988
  %1535 = vmatprep.subr.bf16.mxu0 %v985
  %1536 = vmatpush2.bf16.msra.mxu0 %v984
  %1537 = vmatprep.mubr.bf16.mxu0 %v276
  %1538 = vmatmul.mubr.bf16.gmra.mxu0 %v275
  %v1539 = vpop.f32.mrf.mxu0
  %v1540 = vadd.f32 %v1497, %v1539
  %v1541 = vpop.f32.mrf.mxu0
  %v1542 = vadd.f32 %v1499, %v1541
  %v1543 = vpop.f32.mrf.mxu0
  %v1544 = vadd.f32 %v1501, %v1543
  %v1545 = vpop.f32.mrf.mxu0
  %v1546 = vadd.f32 %v1503, %v1545
  %1547 = vdwg.mxu0
  %1548 = vmatprep.subr.bf16.mxu0 %v1045
  %1549 = vmatpush1.bf16.msra.mxu0 %v1044
  %1550 = vmatprep.subr.bf16.mxu0 %v1041
  %1551 = vmatpush1.bf16.msra.mxu0 %v1040
  %1552 = vmatprep.subr.bf16.mxu0 %v1037
  %1553 = vmatpush1.bf16.msra.mxu0 %v1036
  %1554 = vmatprep.subr.bf16.mxu0 %v1033
  %1555 = vmatpush1.bf16.msra.mxu0 %v1032
  %1556 = vmatprep.subr.bf16.mxu0 %v1029
  %1557 = vmatpush1.bf16.msra.mxu0 %v1028
  %1558 = vmatprep.subr.bf16.mxu0 %v1025
  %1559 = vmatpush1.bf16.msra.mxu0 %v1024
  %1560 = vmatprep.subr.bf16.mxu0 %v1021
  %1561 = vmatpush1.bf16.msra.mxu0 %v1020
  %1562 = vmatprep.subr.bf16.mxu0 %v1017
  %1563 = vmatpush1.bf16.msra.mxu0 %v1016
  %1564 = vmatprep.subr.bf16.mxu0 %v1077
  %1565 = vmatpush2.bf16.msra.mxu0 %v1076
  %1566 = vmatprep.subr.bf16.mxu0 %v1073
  %1567 = vmatpush2.bf16.msra.mxu0 %v1072
  %1568 = vmatprep.subr.bf16.mxu0 %v1069
  %1569 = vmatpush2.bf16.msra.mxu0 %v1068
  %1570 = vmatprep.subr.bf16.mxu0 %v1065
  %1571 = vmatpush2.bf16.msra.mxu0 %v1064
  %1572 = vmatprep.subr.bf16.mxu0 %v1061
  %1573 = vmatpush2.bf16.msra.mxu0 %v1060
  %1574 = vmatprep.subr.bf16.mxu0 %v1057
  %1575 = vmatpush2.bf16.msra.mxu0 %v1056
  %1576 = vmatprep.subr.bf16.mxu0 %v1053
  %1577 = vmatpush2.bf16.msra.mxu0 %v1052
  %1578 = vmatprep.subr.bf16.mxu0 %v1049
  %1579 = vmatpush2.bf16.msra.mxu0 %v1048
  %1580 = vmatprep.mubr.bf16.mxu0 %v278
  %1581 = vmatmul.mubr.bf16.gmra.mxu0 %v277
  %v1582 = vpop.f32.mrf.mxu0
  %v1583 = vadd.f32 %v1540, %v1582
  %v1584 = vpop.f32.mrf.mxu0
  %v1585 = vadd.f32 %v1542, %v1584
  %v1586 = vpop.f32.mrf.mxu0
  %v1587 = vadd.f32 %v1544, %v1586
  %v1588 = vpop.f32.mrf.mxu0
  %v1589 = vadd.f32 %v1546, %v1588
  %1590 = vdwg.mxu0
  %1591 = vmatprep.subr.bf16.mxu0 0
  %1592 = vmatpush1.bf16.msra.mxu0 0
  %1593 = vmatprep.subr.bf16.mxu0 0
  %1594 = vmatpush1.bf16.msra.mxu0 0
  %1595 = vmatprep.subr.bf16.mxu0 0
  %1596 = vmatpush1.bf16.msra.mxu0 0
  %1597 = vmatprep.subr.bf16.mxu0 0
  %1598 = vmatpush1.bf16.msra.mxu0 0
  %1599 = vmatprep.subr.bf16.mxu0 0
  %1600 = vmatpush1.bf16.msra.mxu0 0
  %1601 = vmatprep.subr.bf16.mxu0 0
  %1602 = vmatpush1.bf16.msra.mxu0 0
  %1603 = vmatprep.subr.bf16.mxu0 %v1085
  %1604 = vmatpush1.bf16.msra.mxu0 %v1084
  %1605 = vmatprep.subr.bf16.mxu0 %v1081
  %1606 = vmatpush1.bf16.msra.mxu0 %v1080
  %1607 = vmatprep.subr.bf16.mxu0 0
  %1608 = vmatpush2.bf16.msra.mxu0 0
  %1609 = vmatprep.subr.bf16.mxu0 0
  %1610 = vmatpush2.bf16.msra.mxu0 0
  %1611 = vmatprep.subr.bf16.mxu0 0
  %1612 = vmatpush2.bf16.msra.mxu0 0
  %1613 = vmatprep.subr.bf16.mxu0 0
  %1614 = vmatpush2.bf16.msra.mxu0 0
  %1615 = vmatprep.subr.bf16.mxu0 0
  %1616 = vmatpush2.bf16.msra.mxu0 0
  %1617 = vmatprep.subr.bf16.mxu0 0
  %1618 = vmatpush2.bf16.msra.mxu0 0
  %1619 = vmatprep.subr.bf16.mxu0 0
  %1620 = vmatpush2.bf16.msra.mxu0 0
  %1621 = vmatprep.subr.bf16.mxu0 0
  %1622 = vmatpush2.bf16.msra.mxu0 0
  %1623 = vmatprep.mubr.bf16.mxu0 0
  %1624 = vmatmul.mubr.bf16.gmra.mxu0 %v1288
  %v1625 = vpop.f32.mrf.mxu0
  %v1626 = vadd.f32 %v1583, %v1625
  %v1627 = vpop.f32.mrf.mxu0
  %v1628 = vadd.f32 %v1585, %v1627
  %v1629 = vpop.f32.mrf.mxu0
  %v1630 = vadd.f32 %v1587, %v1629
  %v1631 = vpop.f32.mrf.mxu0
  %v1632 = vadd.f32 %v1589, %v1631
  %1633 = vdwg.mxu0
  %v1634 = vmax.f32 %v1454, 0.0
  %v1635 = vmax.f32 %v1456, 0.0
  %v1636 = vmax.f32 %v1626, 0.0
  %v1637 = vmax.f32 %v1628, 0.0
  %v1638 = vmax.f32 %v1458, 0.0
  %v1639 = vmax.f32 %v1460, 0.0
  %v1640 = vmax.f32 %v1630, 0.0
  %v1641 = vmax.f32 %v1632, 0.0
  %v1642 = vpack.c.bf16 %v1638, %v1634
  %v1643 = vpack.c.bf16 %v1639, %v1635
  %v1644 = vpack.c.bf16 %v1640, %v1636
  %v1645 = vpack.c.bf16 %v1641, %v1637
  %v1646 = vld [vmem:[%s3] sm:$0xf]
  %v1647 = vld [vmem:[%s3 + $0x4] sm:$0xf]
  %v1648 = vld [vmem:[%s3 + $0x8] sm:$0xf]
  %v1649 = vld [vmem:[%s3 + $0xc] sm:$0xf]
  %v1650 = vld [vmem:[%s3 + $0x10] sm:$0xf]
  %v1651 = vld [vmem:[%s3 + $0x14] sm:$0xf]
  %v1652 = vld [vmem:[%s3 + $0x18] sm:$0xf]
  %v1653 = vld [vmem:[%s3 + $0x1c] sm:$0xf]
  %v1654 = vld [vmem:[%s3 + $0x20] sm:$0xf]
  %v1655 = vld [vmem:[%s3 + $0x24] sm:$0xf]
  %v1656 = vld [vmem:[%s3 + $0x28] sm:$0xf]
  %v1657 = vld [vmem:[%s3 + $0x2c] sm:$0xf]
  %v1658 = vld [vmem:[%s3 + $0x30] sm:$0xf]
  %v1659 = vld [vmem:[%s3 + $0x34] sm:$0xf]
  %v1660 = vld [vmem:[%s3 + $0x38] sm:$0xf]
  %v1661 = vld [vmem:[%s3 + $0x3c] sm:$0xf]
  %v1662 = vld [vmem:[%s3 + $0x40] sm:$0xf]
  %v1663 = vld [vmem:[%s3 + $0x44] sm:$0xf]
  %v1664 = vld [vmem:[%s3 + $0x48] sm:$0xf]
  %v1665 = vld [vmem:[%s3 + $0x4c] sm:$0xf]
  %v1666 = vld [vmem:[%s3 + $0x50] sm:$0xf]
  %v1667 = vld [vmem:[%s3 + $0x54] sm:$0xf]
  %v1668 = vld [vmem:[%s3 + $0x58] sm:$0xf]
  %v1669 = vld [vmem:[%s3 + $0x5c] sm:$0xf]
  %v1670 = vld [vmem:[%s3 + $0x60] sm:$0xf]
  %v1671 = vld [vmem:[%s3 + $0x64] sm:$0xf]
  %v1672 = vld [vmem:[%s3 + $0x68] sm:$0xf]
  %v1673 = vld [vmem:[%s3 + $0x6c] sm:$0xf]
  %v1674 = vld [vmem:[%s3 + $0x70] sm:$0xf]
  %v1675 = vld [vmem:[%s3 + $0x74] sm:$0xf]
  %v1676 = vld [vmem:[%s3 + $0x78] sm:$0xf]
  %v1677 = vld [vmem:[%s3 + $0x7c] sm:$0xf]
  %v1678 = vld [vmem:[%s3 + $0x80] sm:$0xf]
  %v1679 = vld [vmem:[%s3 + $0x84] sm:$0xf]
  %v1680 = vld [vmem:[%s3 + $0x88] sm:$0xf]
  %v1681 = vld [vmem:[%s3 + $0x8c] sm:$0xf]
  %v1682 = vld [vmem:[%s3 + $0x90] sm:$0xf]
  %v1683 = vld [vmem:[%s3 + $0x94] sm:$0xf]
  %v1684 = vld [vmem:[%s3 + $0x98] sm:$0xf]
  %v1685 = vld [vmem:[%s3 + $0x9c] sm:$0xf]
  %v1686 = vld [vmem:[%s3 + $0xa0] sm:$0xf]
  %v1687 = vld [vmem:[%s3 + $0xa4] sm:$0xf]
  %v1688 = vld [vmem:[%s3 + $0xa8] sm:$0xf]
  %v1689 = vld [vmem:[%s3 + $0xac] sm:$0xf]
  %v1690 = vld [vmem:[%s3 + $0xb0] sm:$0xf]
  %v1691 = vld [vmem:[%s3 + $0xb4] sm:$0xf]
  %v1692 = vld [vmem:[%s3 + $0xb8] sm:$0xf]
  %v1693 = vld [vmem:[%s3 + $0xbc] sm:$0xf]
  %v1694 = vld [vmem:[%s3 + $0xc0] sm:$0xf]
  %v1695 = vld [vmem:[%s3 + $0xc4] sm:$0xf]
  %v1696 = vld [vmem:[%s3 + $0xc8] sm:$0xf]
  %v1697 = vld [vmem:[%s3 + $0xcc] sm:$0xf]
  %v1698 = vld [vmem:[%s3 + $0xd0] sm:$0xf]
  %v1699 = vld [vmem:[%s3 + $0xd4] sm:$0xf]
  %v1700 = vld [vmem:[%s3 + $0xd8] sm:$0xf]
  %v1701 = vld [vmem:[%s3 + $0xdc] sm:$0xf]
  %v1702 = vld [vmem:[%s3 + $0xe0] sm:$0xf]
  %v1703 = vld [vmem:[%s3 + $0xe4] sm:$0xf]
  %v1704 = vld [vmem:[%s3 + $0xe8] sm:$0xf]
  %v1705 = vld [vmem:[%s3 + $0xec] sm:$0xf]
  %v1706 = vld [vmem:[%s3 + $0xf0] sm:$0xf]
  %v1707 = vld [vmem:[%s3 + $0xf4] sm:$0xf]
  %v1708 = vld [vmem:[%s3 + $0xf8] sm:$0xf]
  %v1709 = vld [vmem:[%s3 + $0xfc] sm:$0xf]
  %v1710 = vld [vmem:[%s4] sm:$0x1]
  %v1712 = vlaneseq
  %v1713 = vshrl.u32 %v1712, 7
  %v1714 = vsub.s32 0, %v1713
  %v1715 = vrot.slane %v1710, %v1714
  %v1781 = vunpack.c.l.b16 %v1646
  %v1782 = vunpack.c.l.b16 %v1647
  %v1783 = vunpack.c.l.b16 %v1648
  %v1784 = vunpack.c.l.b16 %v1649
  %v1785 = vunpack.c.l.b16 %v1650
  %v1786 = vunpack.c.l.b16 %v1651
  %v1787 = vunpack.c.l.b16 %v1652
  %v1788 = vunpack.c.l.b16 %v1653
  %v1789 = vunpack.c.l.b16 %v1654
  %v1790 = vunpack.c.l.b16 %v1655
  %v1791 = vunpack.c.l.b16 %v1656
  %v1792 = vunpack.c.l.b16 %v1657
  %v1793 = vunpack.c.l.b16 %v1658
  %v1794 = vunpack.c.l.b16 %v1659
  %v1795 = vunpack.c.l.b16 %v1660
  %v1796 = vunpack.c.l.b16 %v1661
  %v1797 = vunpack.c.l.b16 %v1662
  %v1798 = vunpack.c.l.b16 %v1663
  %v1799 = vunpack.c.l.b16 %v1664
  %v1800 = vunpack.c.l.b16 %v1665
  %v1801 = vunpack.c.l.b16 %v1666
  %v1802 = vunpack.c.l.b16 %v1667
  %v1803 = vunpack.c.l.b16 %v1668
  %v1804 = vunpack.c.l.b16 %v1669
  %v1805 = vunpack.c.l.b16 %v1670
  %v1806 = vunpack.c.l.b16 %v1671
  %v1807 = vunpack.c.l.b16 %v1672
  %v1808 = vunpack.c.l.b16 %v1673
  %v1809 = vunpack.c.l.b16 %v1674
  %v1810 = vunpack.c.l.b16 %v1675
  %v1811 = vunpack.c.l.b16 %v1676
  %v1812 = vunpack.c.l.b16 %v1677
  %v1813 = vunpack.c.l.b16 %v1678
  %v1814 = vunpack.c.l.b16 %v1679
  %v1815 = vunpack.c.l.b16 %v1680
  %v1816 = vunpack.c.l.b16 %v1681
  %v1817 = vunpack.c.l.b16 %v1682
  %v1818 = vunpack.c.l.b16 %v1683
  %v1819 = vunpack.c.l.b16 %v1684
  %v1820 = vunpack.c.l.b16 %v1685
  %v1821 = vunpack.c.l.b16 %v1686
  %v1822 = vunpack.c.l.b16 %v1687
  %v1823 = vunpack.c.l.b16 %v1688
  %v1824 = vunpack.c.l.b16 %v1689
  %v1825 = vunpack.c.l.b16 %v1690
  %v1826 = vunpack.c.l.b16 %v1691
  %v1827 = vunpack.c.l.b16 %v1692
  %v1828 = vunpack.c.l.b16 %v1693
  %v1829 = vunpack.c.l.b16 %v1694
  %v1830 = vunpack.c.l.b16 %v1695
  %v1831 = vunpack.c.l.b16 %v1696
  %v1832 = vunpack.c.l.b16 %v1697
  %v1833 = vunpack.c.l.b16 %v1698
  %v1834 = vunpack.c.l.b16 %v1699
  %v1835 = vunpack.c.l.b16 %v1700
  %v1836 = vunpack.c.l.b16 %v1701
  %v1837 = vunpack.c.l.b16 %v1702
  %v1838 = vunpack.c.l.b16 %v1703
  %v1839 = vunpack.c.l.b16 %v1704
  %v1840 = vunpack.c.l.b16 %v1705
  %v1841 = vunpack.c.l.b16 %v1706
  %v1842 = vunpack.c.l.b16 %v1707
  %v1843 = vunpack.c.l.b16 %v1708
  %v1844 = vunpack.c.l.b16 %v1709
  %v1845 = vpack.c.b16 %v1782, %v1781
  %v1846 = vpack.c.b16 %v1784, %v1783
  %v1847 = vpack.c.b16 %v1786, %v1785
  %v1848 = vpack.c.b16 %v1788, %v1787
  %v1849 = vpack.c.b16 %v1790, %v1789
  %v1850 = vpack.c.b16 %v1792, %v1791
  %v1851 = vpack.c.b16 %v1794, %v1793
  %v1852 = vpack.c.b16 %v1796, %v1795
  %v1853 = vpack.c.b16 %v1798, %v1797
  %v1854 = vpack.c.b16 %v1800, %v1799
  %v1855 = vpack.c.b16 %v1802, %v1801
  %v1856 = vpack.c.b16 %v1804, %v1803
  %v1857 = vpack.c.b16 %v1806, %v1805
  %v1858 = vpack.c.b16 %v1808, %v1807
  %v1859 = vpack.c.b16 %v1810, %v1809
  %v1860 = vpack.c.b16 %v1812, %v1811
  %v1861 = vpack.c.b16 %v1814, %v1813
  %v1862 = vpack.c.b16 %v1816, %v1815
  %v1863 = vpack.c.b16 %v1818, %v1817
  %v1864 = vpack.c.b16 %v1820, %v1819
  %v1865 = vpack.c.b16 %v1822, %v1821
  %v1866 = vpack.c.b16 %v1824, %v1823
  %v1867 = vpack.c.b16 %v1826, %v1825
  %v1868 = vpack.c.b16 %v1828, %v1827
  %v1869 = vpack.c.b16 %v1830, %v1829
  %v1870 = vpack.c.b16 %v1832, %v1831
  %v1871 = vpack.c.b16 %v1834, %v1833
  %v1872 = vpack.c.b16 %v1836, %v1835
  %v1873 = vpack.c.b16 %v1838, %v1837
  %v1874 = vpack.c.b16 %v1840, %v1839
  %v1875 = vpack.c.b16 %v1842, %v1841
  %v1876 = vpack.c.b16 %v1844, %v1843
  %1909 = vmatprep.subr.bf16.mxu0 0
  %1910 = vmatpush1.bf16.msra.mxu0 %v1852
  %1911 = vmatprep.subr.bf16.mxu0 0
  %1912 = vmatpush1.bf16.msra.mxu0 %v1851
  %1913 = vmatprep.subr.bf16.mxu0 0
  %1914 = vmatpush1.bf16.msra.mxu0 %v1850
  %1915 = vmatprep.subr.bf16.mxu0 0
  %1916 = vmatpush1.bf16.msra.mxu0 %v1849
  %1917 = vmatprep.subr.bf16.mxu0 0
  %1918 = vmatpush1.bf16.msra.mxu0 %v1848
  %1919 = vmatprep.subr.bf16.mxu0 0
  %1920 = vmatpush1.bf16.msra.mxu0 %v1847
  %1921 = vmatprep.subr.bf16.mxu0 0
  %1922 = vmatpush1.bf16.msra.mxu0 %v1846
  %1923 = vmatprep.subr.bf16.mxu0 0
  %1924 = vmatpush1.bf16.msra.mxu0 %v1845
  %1925 = vmatprep.subr.bf16.mxu0 0
  %1926 = vmatpush2.bf16.msra.mxu0 %v1860
  %1927 = vmatprep.subr.bf16.mxu0 0
  %1928 = vmatpush2.bf16.msra.mxu0 %v1859
  %1929 = vmatprep.subr.bf16.mxu0 0
  %1930 = vmatpush2.bf16.msra.mxu0 %v1858
  %1931 = vmatprep.subr.bf16.mxu0 0
  %1932 = vmatpush2.bf16.msra.mxu0 %v1857
  %1933 = vmatprep.subr.bf16.mxu0 0
  %1934 = vmatpush2.bf16.msra.mxu0 %v1856
  %1935 = vmatprep.subr.bf16.mxu0 0
  %1936 = vmatpush2.bf16.msra.mxu0 %v1855
  %1937 = vmatprep.subr.bf16.mxu0 0
  %1938 = vmatpush2.bf16.msra.mxu0 %v1854
  %1939 = vmatprep.subr.bf16.mxu0 0
  %1940 = vmatpush2.bf16.msra.mxu0 %v1853
  %1941 = vmatprep.mubr.bf16.mxu0 %v1643
  %1942 = vmatmul.mubr.bf16.gmra.mxu0 %v1642
  %v1943 = vpop.f32.mrf.mxu0
  %v1944 = vadd.f32 %v1715, %v1943
  %v1945 = vpop.f32.mrf.mxu0
  %v1946 = vpop.f32.mrf.mxu0
  %v1947 = vadd.f32 %v1715, %v1946
  %v1948 = vpop.f32.mrf.mxu0
  %1949 = vdwg.mxu0
  %1950 = vmatprep.subr.bf16.mxu0 0
  %1951 = vmatpush1.bf16.msra.mxu0 %v1868
  %1952 = vmatprep.subr.bf16.mxu0 0
  %1953 = vmatpush1.bf16.msra.mxu0 %v1867
  %1954 = vmatprep.subr.bf16.mxu0 0
  %1955 = vmatpush1.bf16.msra.mxu0 %v1866
  %1956 = vmatprep.subr.bf16.mxu0 0
  %1957 = vmatpush1.bf16.msra.mxu0 %v1865
  %1958 = vmatprep.subr.bf16.mxu0 0
  %1959 = vmatpush1.bf16.msra.mxu0 %v1864
  %1960 = vmatprep.subr.bf16.mxu0 0
  %1961 = vmatpush1.bf16.msra.mxu0 %v1863
  %1962 = vmatprep.subr.bf16.mxu0 0
  %1963 = vmatpush1.bf16.msra.mxu0 %v1862
  %1964 = vmatprep.subr.bf16.mxu0 0
  %1965 = vmatpush1.bf16.msra.mxu0 %v1861
  %1966 = vmatprep.subr.bf16.mxu0 0
  %1967 = vmatpush2.bf16.msra.mxu0 %v1876
  %1968 = vmatprep.subr.bf16.mxu0 0
  %1969 = vmatpush2.bf16.msra.mxu0 %v1875
  %1970 = vmatprep.subr.bf16.mxu0 0
  %1971 = vmatpush2.bf16.msra.mxu0 %v1874
  %1972 = vmatprep.subr.bf16.mxu0 0
  %1973 = vmatpush2.bf16.msra.mxu0 %v1873
  %1974 = vmatprep.subr.bf16.mxu0 0
  %1975 = vmatpush2.bf16.msra.mxu0 %v1872
  %1976 = vmatprep.subr.bf16.mxu0 0
  %1977 = vmatpush2.bf16.msra.mxu0 %v1871
  %1978 = vmatprep.subr.bf16.mxu0 0
  %1979 = vmatpush2.bf16.msra.mxu0 %v1870
  %1980 = vmatprep.subr.bf16.mxu0 0
  %1981 = vmatpush2.bf16.msra.mxu0 %v1869
  %1982 = vmatprep.mubr.bf16.mxu0 %v1645
  %1983 = vmatmul.mubr.bf16.gmra.mxu0 %v1644
  %v1984 = vpop.f32.mrf.mxu0
  %v1985 = vadd.f32 %v1944, %v1984
  %v1986 = vpop.f32.mrf.mxu0
  %v1987 = vpop.f32.mrf.mxu0
  %v1988 = vadd.f32 %v1947, %v1987
  %v1989 = vpop.f32.mrf.mxu0
  %1990 = vdwg.mxu0
  %v1991 = vlaneseq
  %v1992 = vand.u32 %v1991, 127
  %vm1993 = vcmp.lt.s32.totalorder %v1992, 10
  %v1994 = vsel %vm1993, %v1985, -1e+30
  %v1995 = vsel %vm1993, %v1988, -1e+30
  %1996 = vmax.xlane.f32.xlu0 %v1994
  %v1997 = vpop.xlane.xlu0 %1996
  %1998 = vmax.xlane.f32.xlu0 %v1995
  %v1999 = vpop.xlane.xlu0 %1998
  %v2000 = vsub.f32 %v1994, %v1997
  %v2001 = vsub.f32 %v1995, %v1999
  %v2002 = vmul.f32 %v2000, 1.442695
  %v2003 = vpow.pop %v2002
  %v2004 = vmul.f32 %v2001, 1.442695
  %v2005 = vpow.pop %v2004
  %2006 = vadd.xlane.f32.xlu0 %v2003
  %v2007 = vpop.xlane.xlu0 %2006
  %2008 = vadd.xlane.f32.xlu0 %v2005
  %v2009 = vpop.xlane.xlu0 %2008
  %v2010 = vlog2.pop %v2007
  %v2011 = vmul.f32 %v2010, 0.6931472
  %v2012 = vlog2.pop %v2009
  %v2013 = vmul.f32 %v2012, 0.6931472
  %v2014 = vsub.f32 %v2000, %v2011
  %v2015 = vsub.f32 %v2001, %v2013
  %2016 = vst [vmem:[%s5] sm:$0xff] %v2014
  %2017 = vst [vmem:[%s5 + $0x8] sm:$0xff] %v2015
  // Predicated region
  $region22: #{net_forward.5} parent=0 // pred_check
    _
  $region23: #{net_forward.5} parent=0 // pred_check_branch
    %2019 = sbr.rel (0) target = $region25
  $region24: #{net_forward.5} parent=0 // pred_region
    _
  $region25: #{net_forward.5} parent=0 // pred_fallthru
    _
  // Predicated region
  $region26: #{net_forward.5} parent=0 // pred_check
    _
  $region27: #{net_forward.5} parent=0 // pred_check_branch
    %2021 = sbr.rel (0) target = $region29
  $region28: #{net_forward.5} parent=0 // pred_region
    _
  $region29: #{net_forward.5} parent=0 // pred_fallthru
    _

</llo_original>
